<compile_context>
chip_gen: v5e
topology: v5e:2x2
jax: 0.10.0
libtpu: 0.0.40
codegen_flags: <defaults>
</compile_context>

<pallas_src>
import numpy as np
import jax
import jax.numpy as jnp
from jax.experimental import pallas as pl
from jax.experimental.pallas import tpu as pltpu

# ----------------------- hparams (small) -----------------------
N_MELS = 16                   # hparams.n_mel_channels
REF_ENC_FILTERS = [8, 8, 16]  # hparams['ref_enc_filters']
E = 32                        # hparams.E  -> GRU hidden = E // 2
GRU_HIDDEN = E // 2
BATCH = 2
TY = 16                       # time frames after view(N, 1, -1, n_mels)
BN_EPS = 1e-5
K_SIZE, STRIDE, PAD = 3, 2, 1


def calculate_channels(L, kernel_size, stride, pad, n_convs):
    for _ in range(n_convs):
        L = (L - kernel_size + 2 * pad) // stride + 1
    return L


# ===================== fused Pallas kernel =====================

def ref_encoder_kernel(x0_ref,
                       g1_ref, w1_ref, bn1_ref,
                       g2_ref, w2_ref, bn2_ref,
                       g3_ref, w3_ref, bn3_ref,
                       s_ref, wm_ref, whh_ref, bg_ref,
                       out_ref):
    """Everything VMEM-resident; no grid. Shapes are tiny (P<=128 rows, <=48 lanes)."""

    def conv_bn_relu(x, g_ref, w_ref, bn_ref):
        # x: [R, Cin]  (rows = n*H*W + h*W + w, cols = channels)
        # g_ref: [9*P, R] constant gather (im2col + zero-pad) matrix
        # w_ref: [9, Cin, Cout] per-tap weights; bn_ref: [3, Cout] = (bias, gamma, beta)
        p = g_ref.shape[0] // 9
        cout = w_ref.shape[2]
        # in-kernel im2col: one gather matmul, then 9 accumulating tap matmuls
        pat = jnp.dot(g_ref[...], x, preferred_element_type=jnp.float32)   # [9P, Cin]
        acc = jnp.zeros((p, cout), jnp.float32)
        for k in range(9):
            acc = acc + jnp.dot(pat[k * p:(k + 1) * p, :], w_ref[k],
                                preferred_element_type=jnp.float32)
        acc = acc + bn_ref[0:1, :]                                        # conv bias
        # training-mode BatchNorm2d (biased stats over N*H*W), folded into one FMA
        inv_p = 1.0 / float(p)
        mean = jnp.sum(acc, axis=0, keepdims=True) * inv_p
        var = jnp.sum(acc * acc, axis=0, keepdims=True) * inv_p - mean * mean
        scale = bn_ref[1:2, :] * jax.lax.rsqrt(var + BN_EPS)
        shift = bn_ref[2:3, :] - mean * scale
        return jnp.maximum(acc * scale + shift, 0.0)

    # ---- conv stack (intermediates stay in VMEM/vregs) ----
    x = conv_bn_relu(x0_ref[...], g1_ref, w1_ref, bn1_ref)   # [N*8*8, 8]
    x = conv_bn_relu(x, g2_ref, w2_ref, bn2_ref)             # [N*4*4, 8]
    x = conv_bn_relu(x, g3_ref, w3_ref, bn3_ref)             # [N*Tp*Mp, C3]

    # ---- GRU (final hidden only), PyTorch gate order (r, z, n) ----
    n_b, hdim = out_ref.shape
    mp = wm_ref.shape[0]                 # number of "mel" positions folded into features
    tp = s_ref.shape[0] // mp            # number of time steps
    bih = bg_ref[0:1, :]
    bhh = bg_ref[1:2, :]
    whh_t = whh_ref[...]                 # [H, 3H]

    # hoisted input projection: gi_t = x_seq[:, t, :] @ Wih^T + bih  (independent of h)
    gi = []
    for t in range(tp):
        acc = jnp.zeros((n_b, 3 * hdim), jnp.float32)
        for m in range(mp):
            sel = jnp.dot(s_ref[t * mp + m], x,
                          preferred_element_type=jnp.float32)            # [N, C3]
            acc = acc + jnp.dot(sel, wm_ref[m],
                                preferred_element_type=jnp.float32)      # [N, 3H]
        gi.append(acc + bih)

    # serial recurrence, statically unrolled (tp == 2)
    h = jnp.zeros((n_b, hdim), jnp.float32)
    for t in range(tp):
        gh = jnp.dot(h, whh_t, preferred_element_type=jnp.float32) + bhh
        r = jax.nn.sigmoid(gi[t][:, 0:hdim] + gh[:, 0:hdim])
        z = jax.nn.sigmoid(gi[t][:, hdim:2 * hdim] + gh[:, hdim:2 * hdim])
        ng = jnp.tanh(gi[t][:, 2 * hdim:3 * hdim] + r * gh[:, 2 * hdim:3 * hdim])
        h = (1.0 - z) * ng + z * h
    out_ref[...] = h


# ===================== host-side constant builders =====================

def build_gather_stack(n, h, w):
    """Constant 0/1 matrix G: [9*N*Ho*Wo, N*H*W]; zero-padding encoded as all-zero rows."""
    ho = (h - K_SIZE + 2 * PAD) // STRIDE + 1
    wo = (w - K_SIZE + 2 * PAD) // STRIDE + 1
    p, r = n * ho * wo, n * h * w
    g = np.zeros((9, p, r), np.float32)
    for kh in range(K_SIZE):
        for kw in range(K_SIZE):
            k = kh * K_SIZE + kw
            for b in range(n):
                for oh in range(ho):
                    ih = STRIDE * oh + kh - PAD
                    if not (0 <= ih < h):
                        continue
                    for ow in range(wo):
                        iw = STRIDE * ow + kw - PAD
                        if 0 <= iw < w:
                            g[k, b * ho * wo + oh * wo + ow,
                              b * h * w + ih * w + iw] = 1.0
    return g.reshape(9 * p, r), ho, wo


def build_coords_flat(n, h, w):
    """CoordConv AddCoords channels (xx, yy, r) in flat pixel-major layout [N*H*W, 3]."""
    ys, xs = np.meshgrid(np.arange(h, dtype=np.float32),
                         np.arange(w, dtype=np.float32), indexing="ij")
    xx = xs / (w - 1) * 2.0 - 1.0
    yy = ys / (h - 1) * 2.0 - 1.0
    rr = np.sqrt(xx ** 2 + yy ** 2)
    c = np.stack([xx, yy, rr], axis=-1).reshape(h * w, 3)
    return np.tile(c, (n, 1))


def build_seq_select(n, tp, mp):
    """S[t*Mp+m]: [N, N*Tp*Mp] selecting conv3 row (n, t, m) -> batch row n."""
    s = np.zeros((tp * mp, n, n * tp * mp), np.float32)
    for t in range(tp):
        for m in range(mp):
            for b in range(n):
                s[t * mp + m, b, b * tp * mp + t * mp + m] = 1.0
    return s


def init_raw_params(key):
    """Raw parameters in PyTorch layout (conv [Cout,Cin,3,3], GRU [3H,D]/[3H,H])."""
    filters = [1] + REF_ENC_FILTERS
    K = len(REF_ENC_FILTERS)
    keys = jax.random.split(key, 4 * K + 4)
    convs = []
    for i in range(K):
        cin = filters[i] + (3 if i == 0 else 0)       # CoordConv(with_r=True) adds xx,yy,r
        cout = filters[i + 1]
        w = 0.1 * jax.random.normal(keys[4 * i + 0], (cout, cin, 3, 3), jnp.float32)
        b = 0.01 * jax.random.normal(keys[4 * i + 1], (cout,), jnp.float32)
        g = 1.0 + 0.1 * jax.random.normal(keys[4 * i + 2], (cout,), jnp.float32)
        bt = 0.1 * jax.random.normal(keys[4 * i + 3], (cout,), jnp.float32)
        convs.append((w, b, g, bt))
    out_channels = calculate_channels(N_MELS, 3, 2, 1, K)
    D = REF_ENC_FILTERS[-1] * out_channels
    H = GRU_HIDDEN
    wih = 0.1 * jax.random.normal(keys[4 * K + 0], (3 * H, D), jnp.float32)
    whh = 0.1 * jax.random.normal(keys[4 * K + 1], (3 * H, H), jnp.float32)
    bih = 0.01 * jax.random.normal(keys[4 * K + 2], (3 * H,), jnp.float32)
    bhh = 0.01 * jax.random.normal(keys[4 * K + 3], (3 * H,), jnp.float32)
    return {"convs": convs, "gru": (wih, whh, bih, bhh)}


def prepare_kernel_params(raw, n_batch):
    """Re-pack raw params + build constant gather/select matrices for the fused kernel."""
    h, w = TY, N_MELS
    gs, ws, bns = [], [], []
    for (cw, cb, cg, cbeta) in raw["convs"]:
        cout, cin, _, _ = cw.shape
        g, ho, wo = build_gather_stack(n_batch, h, w)
        gs.append(jnp.asarray(g))
        ws.append(jnp.transpose(cw, (2, 3, 1, 0)).reshape(9, cin, cout))   # [9, Cin, Cout]
        bns.append(jnp.stack([cb, cg, cbeta], axis=0))                     # [3, Cout]
        h, w = ho, wo
    tp, mp = h, w                                                          # (2, 2)

    wih, whh, bih, bhh = raw["gru"]
    wih_t = wih.T                                                          # [D, 3H]
    # fold the (c, m) -> feature (c*Mp+m) rearrange into per-m input-projection weights
    wm = jnp.stack([wih_t[m::mp, :] for m in range(mp)], axis=0)           # [Mp, C3, 3H]
    return {
        "g": gs, "w": ws, "bn": bns,
        "s": jnp.asarray(build_seq_select(n_batch, tp, mp)),               # [Tp*Mp, N, P3]
        "wm": wm,
        "whh_t": whh.T,                                                    # [H, 3H]
        "bg": jnp.stack([bih, bhh], axis=0),                               # [2, 3H]
        "coords": jnp.asarray(build_coords_flat(n_batch, TY, N_MELS)),     # [N*Ty*M, 3]
    }


# ===================== wrapper =====================

def reference_encoder_forward(inputs, kparams):
    """inputs: [N, Ty/r, n_mels*r] -> [N, E//2] (final GRU hidden)."""
    n = inputs.shape[0]
    # CoordConv input in flat pixel-major layout: [N*Ty*n_mels, 1+3]
    x0 = jnp.concatenate([inputs.reshape(-1, 1), kparams["coords"]], axis=1)
    hdim = kparams["whh_t"].shape[0]

    args = (x0,
            kparams["g"][0], kparams["w"][0], kparams["bn"][0],
            kparams["g"][1], kparams["w"][1], kparams["bn"][1],
            kparams["g"][2], kparams["w"][2], kparams["bn"][2],
            kparams["s"], kparams["wm"], kparams["whh_t"], kparams["bg"])

    return pl.pallas_call(
        ref_encoder_kernel,
        out_shape=jax.ShapeDtypeStruct((n, hdim), jnp.float32),
        in_specs=[pl.BlockSpec(memory_space=pltpu.MemorySpace.VMEM) for _ in args],
        out_specs=pl.BlockSpec(memory_space=pltpu.MemorySpace.VMEM),
        compiler_params=pltpu.CompilerParams(vmem_limit_bytes=32 * 1024 * 1024),
    )(*args)


# ===================== pure-XLA reference (for correctness check) =====================

def add_coords(x):
    N, C, H, W = x.shape
    xx = jnp.broadcast_to(jnp.arange(W, dtype=jnp.float32)[None, :], (H, W)) / (W - 1) * 2.0 - 1.0
    yy = jnp.broadcast_to(jnp.arange(H, dtype=jnp.float32)[:, None], (H, W)) / (H - 1) * 2.0 - 1.0
    rr = jnp.sqrt(xx ** 2 + yy ** 2)
    coords = jnp.broadcast_to(jnp.stack([xx, yy, rr], axis=0)[None], (N, 3, H, W))
    return jnp.concatenate([x, coords], axis=1)


def reference_forward_xla(inputs, raw):
    n = inputs.shape[0]
    out = inputs.reshape(n, 1, -1, N_MELS)
    for i, (w, b, g, bt) in enumerate(raw["convs"]):
        if i == 0:
            out = add_coords(out)
        out = jax.lax.conv_general_dilated(
            out, w, window_strides=(STRIDE, STRIDE), padding=((PAD, PAD), (PAD, PAD)),
            dimension_numbers=("NCHW", "OIHW", "NCHW"),
            precision=jax.lax.Precision.HIGHEST)
        out = out + b[None, :, None, None]
        mean = jnp.mean(out, axis=(0, 2, 3), keepdims=True)
        var = jnp.mean((out - mean) ** 2, axis=(0, 2, 3), keepdims=True)
        out = (out - mean) * jax.lax.rsqrt(var + BN_EPS) * g[None, :, None, None] + bt[None, :, None, None]
        out = jnp.maximum(out, 0.0)
    nn_, c, tp, mp = out.shape
    seq = out.transpose(0, 2, 1, 3).reshape(nn_, tp, c * mp)
    wih, whh, bih, bhh = raw["gru"]
    hdim = whh.shape[1]
    h = jnp.zeros((nn_, hdim), jnp.float32)
    for t in range(tp):
        x_t = seq[:, t, :]
        gi = jnp.dot(x_t, wih.T, precision=jax.lax.Precision.HIGHEST) + bih
        gh = jnp.dot(h, whh.T, precision=jax.lax.Precision.HIGHEST) + bhh
        r = jax.nn.sigmoid(gi[:, :hdim] + gh[:, :hdim])
        z = jax.nn.sigmoid(gi[:, hdim:2 * hdim] + gh[:, hdim:2 * hdim])
        ng = jnp.tanh(gi[:, 2 * hdim:] + r * gh[:, 2 * hdim:])
        h = (1.0 - z) * ng + z * h
    return h


if __name__ == "__main__":
    key = jax.random.PRNGKey(0)
    k_in, k_par = jax.random.split(key)
    inputs = jax.random.normal(k_in, (BATCH, TY, N_MELS), jnp.float32)
    raw = init_raw_params(k_par)
    kparams = prepare_kernel_params(raw, BATCH)

    fwd = jax.jit(reference_encoder_forward)
    out = jax.block_until_ready(fwd(inputs, kparams))
    assert out.shape == (BATCH, GRU_HIDDEN), out.shape
    assert bool(jnp.all(jnp.isfinite(out)))

    # numerical check vs pure-XLA implementation of the PyTorch forward
    ref = jax.block_until_ready(reference_forward_xla(inputs, raw))
    err = float(jnp.max(jnp.abs(out - ref)))
    assert err < 5e-3, f"max abs err vs reference: {err}"

    print("KERNEL_OK")
</pallas_src>

<mosaic_0001>
module attributes {stable_mosaic.version = 11 : i64} {
  func.func @ref_encoder_kernel(%arg0: memref<512x4xf32, #tpu.memory_space<vmem>>, %arg1: memref<1152x512xf32, #tpu.memory_space<vmem>>, %arg2: memref<9x4x8xf32, #tpu.memory_space<vmem>>, %arg3: memref<3x8xf32, #tpu.memory_space<vmem>>, %arg4: memref<288x128xf32, #tpu.memory_space<vmem>>, %arg5: memref<9x8x8xf32, #tpu.memory_space<vmem>>, %arg6: memref<3x8xf32, #tpu.memory_space<vmem>>, %arg7: memref<72x32xf32, #tpu.memory_space<vmem>>, %arg8: memref<9x8x16xf32, #tpu.memory_space<vmem>>, %arg9: memref<3x16xf32, #tpu.memory_space<vmem>>, %arg10: memref<4x2x8xf32, #tpu.memory_space<vmem>>, %arg11: memref<2x16x48xf32, #tpu.memory_space<vmem>>, %arg12: memref<16x48xf32, #tpu.memory_space<vmem>>, %arg13: memref<2x48xf32, #tpu.memory_space<vmem>>, %arg14: memref<2x16xf32, #tpu.memory_space<vmem>>) attributes {dimension_semantics = [], scalar_prefetch = 0 : i64, scratch_operands = 0 : i64, tpu.core_type = #tpu.core_type<tc>} {
    %c0 = arith.constant 0 : index
    %c0_0 = arith.constant 0 : index
    %0 = vector.load %arg0[%c0, %c0_0] : memref<512x4xf32, #tpu.memory_space<vmem>>, vector<512x4xf32>
    %c0_1 = arith.constant 0 : index
    %c0_2 = arith.constant 0 : index
    %1 = vector.load %arg1[%c0_1, %c0_2] : memref<1152x512xf32, #tpu.memory_space<vmem>>, vector<1152x512xf32>
    %cst = arith.constant dense<0.000000e+00> : vector<1152x4xf32>
    %2 = tpu.matmul %1, %0, %cst {dimension_numbers = #tpu.dot_dimension_numbers<[1], [0], [0], [1], [0, 0, 1, 1], [], []>} : vector<1152x512xf32>, vector<512x4xf32>, vector<1152x4xf32> -> vector<1152x4xf32>
    %cst_3 = arith.constant 0.000000e+00 : f32
    %3 = vector.broadcast %cst_3 : f32 to vector<128x8xf32>
    %4 = vector.extract_strided_slice %2 {offsets = [0, 0], sizes = [128, 4], strides = [1, 1]} : vector<1152x4xf32> to vector<128x4xf32>
    %c0_4 = arith.constant 0 : index
    %c0_5 = arith.constant 0 : index
    %c0_6 = arith.constant 0 : index
    %5 = vector.load %arg2[%c0_4, %c0_5, %c0_6] : memref<9x4x8xf32, #tpu.memory_space<vmem>>, vector<1x4x8xf32>
    %6 = vector.shape_cast %5 : vector<1x4x8xf32> to vector<4x8xf32>
    %cst_7 = arith.constant dense<0.000000e+00> : vector<128x8xf32>
    %7 = tpu.matmul %4, %6, %cst_7 {dimension_numbers = #tpu.dot_dimension_numbers<[1], [0], [0], [1], [0, 0, 1, 1], [], []>} : vector<128x4xf32>, vector<4x8xf32>, vector<128x8xf32> -> vector<128x8xf32>
    %8 = arith.addf %3, %7 : vector<128x8xf32>
    %9 = vector.extract_strided_slice %2 {offsets = [128, 0], sizes = [128, 4], strides = [1, 1]} : vector<1152x4xf32> to vector<128x4xf32>
    %c1 = arith.constant 1 : index
    %c0_8 = arith.constant 0 : index
    %c0_9 = arith.constant 0 : index
    %10 = vector.load %arg2[%c1, %c0_8, %c0_9] : memref<9x4x8xf32, #tpu.memory_space<vmem>>, vector<1x4x8xf32>
    %11 = vector.shape_cast %10 : vector<1x4x8xf32> to vector<4x8xf32>
    %cst_10 = arith.constant dense<0.000000e+00> : vector<128x8xf32>
    %12 = tpu.matmul %9, %11, %cst_10 {dimension_numbers = #tpu.dot_dimension_numbers<[1], [0], [0], [1], [0, 0, 1, 1], [], []>} : vector<128x4xf32>, vector<4x8xf32>, vector<128x8xf32> -> vector<128x8xf32>
    %13 = arith.addf %8, %12 : vector<128x8xf32>
    %14 = vector.extract_strided_slice %2 {offsets = [256, 0], sizes = [128, 4], strides = [1, 1]} : vector<1152x4xf32> to vector<128x4xf32>
    %c2 = arith.constant 2 : index
    %c0_11 = arith.constant 0 : index
    %c0_12 = arith.constant 0 : index
    %15 = vector.load %arg2[%c2, %c0_11, %c0_12] : memref<9x4x8xf32, #tpu.memory_space<vmem>>, vector<1x4x8xf32>
    %16 = vector.shape_cast %15 : vector<1x4x8xf32> to vector<4x8xf32>
    %cst_13 = arith.constant dense<0.000000e+00> : vector<128x8xf32>
    %17 = tpu.matmul %14, %16, %cst_13 {dimension_numbers = #tpu.dot_dimension_numbers<[1], [0], [0], [1], [0, 0, 1, 1], [], []>} : vector<128x4xf32>, vector<4x8xf32>, vector<128x8xf32> -> vector<128x8xf32>
    %18 = arith.addf %13, %17 : vector<128x8xf32>
    %19 = vector.extract_strided_slice %2 {offsets = [384, 0], sizes = [128, 4], strides = [1, 1]} : vector<1152x4xf32> to vector<128x4xf32>
    %c3 = arith.constant 3 : index
    %c0_14 = arith.constant 0 : index
    %c0_15 = arith.constant 0 : index
    %20 = vector.load %arg2[%c3, %c0_14, %c0_15] : memref<9x4x8xf32, #tpu.memory_space<vmem>>, vector<1x4x8xf32>
    %21 = vector.shape_cast %20 : vector<1x4x8xf32> to vector<4x8xf32>
    %cst_16 = arith.constant dense<0.000000e+00> : vector<128x8xf32>
    %22 = tpu.matmul %19, %21, %cst_16 {dimension_numbers = #tpu.dot_dimension_numbers<[1], [0], [0], [1], [0, 0, 1, 1], [], []>} : vector<128x4xf32>, vector<4x8xf32>, vector<128x8xf32> -> vector<128x8xf32>
    %23 = arith.addf %18, %22 : vector<128x8xf32>
    %24 = vector.extract_strided_slice %2 {offsets = [512, 0], sizes = [128, 4], strides = [1, 1]} : vector<1152x4xf32> to vector<128x4xf32>
    %c4 = arith.constant 4 : index
    %c0_17 = arith.constant 0 : index
    %c0_18 = arith.constant 0 : index
    %25 = vector.load %arg2[%c4, %c0_17, %c0_18] : memref<9x4x8xf32, #tpu.memory_space<vmem>>, vector<1x4x8xf32>
    %26 = vector.shape_cast %25 : vector<1x4x8xf32> to vector<4x8xf32>
    %cst_19 = arith.constant dense<0.000000e+00> : vector<128x8xf32>
    %27 = tpu.matmul %24, %26, %cst_19 {dimension_numbers = #tpu.dot_dimension_numbers<[1], [0], [0], [1], [0, 0, 1, 1], [], []>} : vector<128x4xf32>, vector<4x8xf32>, vector<128x8xf32> -> vector<128x8xf32>
    %28 = arith.addf %23, %27 : vector<128x8xf32>
    %29 = vector.extract_strided_slice %2 {offsets = [640, 0], sizes = [128, 4], strides = [1, 1]} : vector<1152x4xf32> to vector<128x4xf32>
    %c5 = arith.constant 5 : index
    %c0_20 = arith.constant 0 : index
    %c0_21 = arith.constant 0 : index
    %30 = vector.load %arg2[%c5, %c0_20, %c0_21] : memref<9x4x8xf32, #tpu.memory_space<vmem>>, vector<1x4x8xf32>
    %31 = vector.shape_cast %30 : vector<1x4x8xf32> to vector<4x8xf32>
    %cst_22 = arith.constant dense<0.000000e+00> : vector<128x8xf32>
    %32 = tpu.matmul %29, %31, %cst_22 {dimension_numbers = #tpu.dot_dimension_numbers<[1], [0], [0], [1], [0, 0, 1, 1], [], []>} : vector<128x4xf32>, vector<4x8xf32>, vector<128x8xf32> -> vector<128x8xf32>
    %33 = arith.addf %28, %32 : vector<128x8xf32>
    %34 = vector.extract_strided_slice %2 {offsets = [768, 0], sizes = [128, 4], strides = [1, 1]} : vector<1152x4xf32> to vector<128x4xf32>
    %c6 = arith.constant 6 : index
    %c0_23 = arith.constant 0 : index
    %c0_24 = arith.constant 0 : index
    %35 = vector.load %arg2[%c6, %c0_23, %c0_24] : memref<9x4x8xf32, #tpu.memory_space<vmem>>, vector<1x4x8xf32>
    %36 = vector.shape_cast %35 : vector<1x4x8xf32> to vector<4x8xf32>
    %cst_25 = arith.constant dense<0.000000e+00> : vector<128x8xf32>
    %37 = tpu.matmul %34, %36, %cst_25 {dimension_numbers = #tpu.dot_dimension_numbers<[1], [0], [0], [1], [0, 0, 1, 1], [], []>} : vector<128x4xf32>, vector<4x8xf32>, vector<128x8xf32> -> vector<128x8xf32>
    %38 = arith.addf %33, %37 : vector<128x8xf32>
    %39 = vector.extract_strided_slice %2 {offsets = [896, 0], sizes = [128, 4], strides = [1, 1]} : vector<1152x4xf32> to vector<128x4xf32>
    %c7 = arith.constant 7 : index
    %c0_26 = arith.constant 0 : index
    %c0_27 = arith.constant 0 : index
    %40 = vector.load %arg2[%c7, %c0_26, %c0_27] : memref<9x4x8xf32, #tpu.memory_space<vmem>>, vector<1x4x8xf32>
    %41 = vector.shape_cast %40 : vector<1x4x8xf32> to vector<4x8xf32>
    %cst_28 = arith.constant dense<0.000000e+00> : vector<128x8xf32>
    %42 = tpu.matmul %39, %41, %cst_28 {dimension_numbers = #tpu.dot_dimension_numbers<[1], [0], [0], [1], [0, 0, 1, 1], [], []>} : vector<128x4xf32>, vector<4x8xf32>, vector<128x8xf32> -> vector<128x8xf32>
    %43 = arith.addf %38, %42 : vector<128x8xf32>
    %44 = vector.extract_strided_slice %2 {offsets = [1024, 0], sizes = [128, 4], strides = [1, 1]} : vector<1152x4xf32> to vector<128x4xf32>
    %c8 = arith.constant 8 : index
    %c0_29 = arith.constant 0 : index
    %c0_30 = arith.constant 0 : index
    %45 = vector.load %arg2[%c8, %c0_29, %c0_30] : memref<9x4x8xf32, #tpu.memory_space<vmem>>, vector<1x4x8xf32>
    %46 = vector.shape_cast %45 : vector<1x4x8xf32> to vector<4x8xf32>
    %cst_31 = arith.constant dense<0.000000e+00> : vector<128x8xf32>
    %47 = tpu.matmul %44, %46, %cst_31 {dimension_numbers = #tpu.dot_dimension_numbers<[1], [0], [0], [1], [0, 0, 1, 1], [], []>} : vector<128x4xf32>, vector<4x8xf32>, vector<128x8xf32> -> vector<128x8xf32>
    %48 = arith.addf %43, %47 : vector<128x8xf32>
    %c0_32 = arith.constant 0 : index
    %c0_33 = arith.constant 0 : index
    %49 = vector.load %arg3[%c0_32, %c0_33] : memref<3x8xf32, #tpu.memory_space<vmem>>, vector<1x8xf32>
    %50 = vector.broadcast %49 : vector<1x8xf32> to vector<128x8xf32>
    %51 = arith.addf %48, %50 : vector<128x8xf32>
    %cst_34 = arith.constant dense<0.000000e+00> : vector<8xf32>
    %52 = vector.multi_reduction <add>, %51, %cst_34 [0] : vector<128x8xf32> to vector<8xf32>
    %53 = vector.shape_cast %52 : vector<8xf32> to vector<1x8xf32>
    %cst_35 = arith.constant 7.812500e-03 : f32
    %54 = vector.broadcast %cst_35 : f32 to vector<1x8xf32>
    %55 = arith.mulf %53, %54 : vector<1x8xf32>
    %56 = arith.mulf %51, %51 : vector<128x8xf32>
    %cst_36 = arith.constant dense<0.000000e+00> : vector<8xf32>
    %57 = vector.multi_reduction <add>, %56, %cst_36 [0] : vector<128x8xf32> to vector<8xf32>
    %58 = vector.shape_cast %57 : vector<8xf32> to vector<1x8xf32>
    %cst_37 = arith.constant 7.812500e-03 : f32
    %59 = vector.broadcast %cst_37 : f32 to vector<1x8xf32>
    %60 = arith.mulf %58, %59 : vector<1x8xf32>
    %61 = arith.mulf %55, %55 : vector<1x8xf32>
    %62 = arith.subf %60, %61 : vector<1x8xf32>
    %c1_38 = arith.constant 1 : index
    %c0_39 = arith.constant 0 : index
    %63 = vector.load %arg3[%c1_38, %c0_39] : memref<3x8xf32, #tpu.memory_space<vmem>>, vector<1x8xf32>
    %cst_40 = arith.constant 9.99999974E-6 : f32
    %64 = vector.broadcast %cst_40 : f32 to vector<1x8xf32>
    %65 = arith.addf %62, %64 : vector<1x8xf32>
    %66 = math.rsqrt %65 : vector<1x8xf32>
    %67 = arith.mulf %63, %66 : vector<1x8xf32>
    %c2_41 = arith.constant 2 : index
    %c0_42 = arith.constant 0 : index
    %68 = vector.load %arg3[%c2_41, %c0_42] : memref<3x8xf32, #tpu.memory_space<vmem>>, vector<1x8xf32>
    %69 = arith.mulf %55, %67 : vector<1x8xf32>
    %70 = arith.subf %68, %69 : vector<1x8xf32>
    %71 = vector.broadcast %67 : vector<1x8xf32> to vector<128x8xf32>
    %72 = arith.mulf %51, %71 : vector<128x8xf32>
    %73 = vector.broadcast %70 : vector<1x8xf32> to vector<128x8xf32>
    %74 = arith.addf %72, %73 : vector<128x8xf32>
    %cst_43 = arith.constant 0.000000e+00 : f32
    %75 = vector.broadcast %cst_43 : f32 to vector<128x8xf32>
    %76 = arith.maximumf %74, %75 : vector<128x8xf32>
    %c0_44 = arith.constant 0 : index
    %c0_45 = arith.constant 0 : index
    %77 = vector.load %arg4[%c0_44, %c0_45] : memref<288x128xf32, #tpu.memory_space<vmem>>, vector<288x128xf32>
    %cst_46 = arith.constant dense<0.000000e+00> : vector<288x8xf32>
    %78 = tpu.matmul %77, %76, %cst_46 {dimension_numbers = #tpu.dot_dimension_numbers<[1], [0], [0], [1], [0, 0, 1, 1], [], []>} : vector<288x128xf32>, vector<128x8xf32>, vector<288x8xf32> -> vector<288x8xf32>
    %cst_47 = arith.constant 0.000000e+00 : f32
    %79 = vector.broadcast %cst_47 : f32 to vector<32x8xf32>
    %80 = vector.extract_strided_slice %78 {offsets = [0, 0], sizes = [32, 8], strides = [1, 1]} : vector<288x8xf32> to vector<32x8xf32>
    %c0_48 = arith.constant 0 : index
    %c0_49 = arith.constant 0 : index
    %c0_50 = arith.constant 0 : index
    %81 = vector.load %arg5[%c0_48, %c0_49, %c0_50] : memref<9x8x8xf32, #tpu.memory_space<vmem>>, vector<1x8x8xf32>
    %82 = vector.shape_cast %81 : vector<1x8x8xf32> to vector<8x8xf32>
    %cst_51 = arith.constant dense<0.000000e+00> : vector<32x8xf32>
    %83 = tpu.matmul %80, %82, %cst_51 {dimension_numbers = #tpu.dot_dimension_numbers<[1], [0], [0], [1], [0, 0, 1, 1], [], []>} : vector<32x8xf32>, vector<8x8xf32>, vector<32x8xf32> -> vector<32x8xf32>
    %84 = arith.addf %79, %83 : vector<32x8xf32>
    %85 = vector.extract_strided_slice %78 {offsets = [32, 0], sizes = [32, 8], strides = [1, 1]} : vector<288x8xf32> to vector<32x8xf32>
    %c1_52 = arith.constant 1 : index
    %c0_53 = arith.constant 0 : index
    %c0_54 = arith.constant 0 : index
    %86 = vector.load %arg5[%c1_52, %c0_53, %c0_54] : memref<9x8x8xf32, #tpu.memory_space<vmem>>, vector<1x8x8xf32>
    %87 = vector.shape_cast %86 : vector<1x8x8xf32> to vector<8x8xf32>
    %cst_55 = arith.constant dense<0.000000e+00> : vector<32x8xf32>
    %88 = tpu.matmul %85, %87, %cst_55 {dimension_numbers = #tpu.dot_dimension_numbers<[1], [0], [0], [1], [0, 0, 1, 1], [], []>} : vector<32x8xf32>, vector<8x8xf32>, vector<32x8xf32> -> vector<32x8xf32>
    %89 = arith.addf %84, %88 : vector<32x8xf32>
    %90 = vector.extract_strided_slice %78 {offsets = [64, 0], sizes = [32, 8], strides = [1, 1]} : vector<288x8xf32> to vector<32x8xf32>
    %c2_56 = arith.constant 2 : index
    %c0_57 = arith.constant 0 : index
    %c0_58 = arith.constant 0 : index
    %91 = vector.load %arg5[%c2_56, %c0_57, %c0_58] : memref<9x8x8xf32, #tpu.memory_space<vmem>>, vector<1x8x8xf32>
    %92 = vector.shape_cast %91 : vector<1x8x8xf32> to vector<8x8xf32>
    %cst_59 = arith.constant dense<0.000000e+00> : vector<32x8xf32>
    %93 = tpu.matmul %90, %92, %cst_59 {dimension_numbers = #tpu.dot_dimension_numbers<[1], [0], [0], [1], [0, 0, 1, 1], [], []>} : vector<32x8xf32>, vector<8x8xf32>, vector<32x8xf32> -> vector<32x8xf32>
    %94 = arith.addf %89, %93 : vector<32x8xf32>
    %95 = vector.extract_strided_slice %78 {offsets = [96, 0], sizes = [32, 8], strides = [1, 1]} : vector<288x8xf32> to vector<32x8xf32>
    %c3_60 = arith.constant 3 : index
    %c0_61 = arith.constant 0 : index
    %c0_62 = arith.constant 0 : index
    %96 = vector.load %arg5[%c3_60, %c0_61, %c0_62] : memref<9x8x8xf32, #tpu.memory_space<vmem>>, vector<1x8x8xf32>
    %97 = vector.shape_cast %96 : vector<1x8x8xf32> to vector<8x8xf32>
    %cst_63 = arith.constant dense<0.000000e+00> : vector<32x8xf32>
    %98 = tpu.matmul %95, %97, %cst_63 {dimension_numbers = #tpu.dot_dimension_numbers<[1], [0], [0], [1], [0, 0, 1, 1], [], []>} : vector<32x8xf32>, vector<8x8xf32>, vector<32x8xf32> -> vector<32x8xf32>
    %99 = arith.addf %94, %98 : vector<32x8xf32>
    %100 = vector.extract_strided_slice %78 {offsets = [128, 0], sizes = [32, 8], strides = [1, 1]} : vector<288x8xf32> to vector<32x8xf32>
    %c4_64 = arith.constant 4 : index
    %c0_65 = arith.constant 0 : index
    %c0_66 = arith.constant 0 : index
    %101 = vector.load %arg5[%c4_64, %c0_65, %c0_66] : memref<9x8x8xf32, #tpu.memory_space<vmem>>, vector<1x8x8xf32>
    %102 = vector.shape_cast %101 : vector<1x8x8xf32> to vector<8x8xf32>
    %cst_67 = arith.constant dense<0.000000e+00> : vector<32x8xf32>
    %103 = tpu.matmul %100, %102, %cst_67 {dimension_numbers = #tpu.dot_dimension_numbers<[1], [0], [0], [1], [0, 0, 1, 1], [], []>} : vector<32x8xf32>, vector<8x8xf32>, vector<32x8xf32> -> vector<32x8xf32>
    %104 = arith.addf %99, %103 : vector<32x8xf32>
    %105 = vector.extract_strided_slice %78 {offsets = [160, 0], sizes = [32, 8], strides = [1, 1]} : vector<288x8xf32> to vector<32x8xf32>
    %c5_68 = arith.constant 5 : index
    %c0_69 = arith.constant 0 : index
    %c0_70 = arith.constant 0 : index
    %106 = vector.load %arg5[%c5_68, %c0_69, %c0_70] : memref<9x8x8xf32, #tpu.memory_space<vmem>>, vector<1x8x8xf32>
    %107 = vector.shape_cast %106 : vector<1x8x8xf32> to vector<8x8xf32>
    %cst_71 = arith.constant dense<0.000000e+00> : vector<32x8xf32>
    %108 = tpu.matmul %105, %107, %cst_71 {dimension_numbers = #tpu.dot_dimension_numbers<[1], [0], [0], [1], [0, 0, 1, 1], [], []>} : vector<32x8xf32>, vector<8x8xf32>, vector<32x8xf32> -> vector<32x8xf32>
    %109 = arith.addf %104, %108 : vector<32x8xf32>
    %110 = vector.extract_strided_slice %78 {offsets = [192, 0], sizes = [32, 8], strides = [1, 1]} : vector<288x8xf32> to vector<32x8xf32>
    %c6_72 = arith.constant 6 : index
    %c0_73 = arith.constant 0 : index
    %c0_74 = arith.constant 0 : index
    %111 = vector.load %arg5[%c6_72, %c0_73, %c0_74] : memref<9x8x8xf32, #tpu.memory_space<vmem>>, vector<1x8x8xf32>
    %112 = vector.shape_cast %111 : vector<1x8x8xf32> to vector<8x8xf32>
    %cst_75 = arith.constant dense<0.000000e+00> : vector<32x8xf32>
    %113 = tpu.matmul %110, %112, %cst_75 {dimension_numbers = #tpu.dot_dimension_numbers<[1], [0], [0], [1], [0, 0, 1, 1], [], []>} : vector<32x8xf32>, vector<8x8xf32>, vector<32x8xf32> -> vector<32x8xf32>
    %114 = arith.addf %109, %113 : vector<32x8xf32>
    %115 = vector.extract_strided_slice %78 {offsets = [224, 0], sizes = [32, 8], strides = [1, 1]} : vector<288x8xf32> to vector<32x8xf32>
    %c7_76 = arith.constant 7 : index
    %c0_77 = arith.constant 0 : index
    %c0_78 = arith.constant 0 : index
    %116 = vector.load %arg5[%c7_76, %c0_77, %c0_78] : memref<9x8x8xf32, #tpu.memory_space<vmem>>, vector<1x8x8xf32>
    %117 = vector.shape_cast %116 : vector<1x8x8xf32> to vector<8x8xf32>
    %cst_79 = arith.constant dense<0.000000e+00> : vector<32x8xf32>
    %118 = tpu.matmul %115, %117, %cst_79 {dimension_numbers = #tpu.dot_dimension_numbers<[1], [0], [0], [1], [0, 0, 1, 1], [], []>} : vector<32x8xf32>, vector<8x8xf32>, vector<32x8xf32> -> vector<32x8xf32>
    %119 = arith.addf %114, %118 : vector<32x8xf32>
    %120 = vector.extract_strided_slice %78 {offsets = [256, 0], sizes = [32, 8], strides = [1, 1]} : vector<288x8xf32> to vector<32x8xf32>
    %c8_80 = arith.constant 8 : index
    %c0_81 = arith.constant 0 : index
    %c0_82 = arith.constant 0 : index
    %121 = vector.load %arg5[%c8_80, %c0_81, %c0_82] : memref<9x8x8xf32, #tpu.memory_space<vmem>>, vector<1x8x8xf32>
    %122 = vector.shape_cast %121 : vector<1x8x8xf32> to vector<8x8xf32>
    %cst_83 = arith.constant dense<0.000000e+00> : vector<32x8xf32>
    %123 = tpu.matmul %120, %122, %cst_83 {dimension_numbers = #tpu.dot_dimension_numbers<[1], [0], [0], [1], [0, 0, 1, 1], [], []>} : vector<32x8xf32>, vector<8x8xf32>, vector<32x8xf32> -> vector<32x8xf32>
    %124 = arith.addf %119, %123 : vector<32x8xf32>
    %c0_84 = arith.constant 0 : index
    %c0_85 = arith.constant 0 : index
    %125 = vector.load %arg6[%c0_84, %c0_85] : memref<3x8xf32, #tpu.memory_space<vmem>>, vector<1x8xf32>
    %126 = vector.broadcast %125 : vector<1x8xf32> to vector<32x8xf32>
    %127 = arith.addf %124, %126 : vector<32x8xf32>
    %cst_86 = arith.constant dense<0.000000e+00> : vector<8xf32>
    %128 = vector.multi_reduction <add>, %127, %cst_86 [0] : vector<32x8xf32> to vector<8xf32>
    %129 = vector.shape_cast %128 : vector<8xf32> to vector<1x8xf32>
    %cst_87 = arith.constant 3.125000e-02 : f32
    %130 = vector.broadcast %cst_87 : f32 to vector<1x8xf32>
    %131 = arith.mulf %129, %130 : vector<1x8xf32>
    %132 = arith.mulf %127, %127 : vector<32x8xf32>
    %cst_88 = arith.constant dense<0.000000e+00> : vector<8xf32>
    %133 = vector.multi_reduction <add>, %132, %cst_88 [0] : vector<32x8xf32> to vector<8xf32>
    %134 = vector.shape_cast %133 : vector<8xf32> to vector<1x8xf32>
    %cst_89 = arith.constant 3.125000e-02 : f32
    %135 = vector.broadcast %cst_89 : f32 to vector<1x8xf32>
    %136 = arith.mulf %134, %135 : vector<1x8xf32>
    %137 = arith.mulf %131, %131 : vector<1x8xf32>
    %138 = arith.subf %136, %137 : vector<1x8xf32>
    %c1_90 = arith.constant 1 : index
    %c0_91 = arith.constant 0 : index
    %139 = vector.load %arg6[%c1_90, %c0_91] : memref<3x8xf32, #tpu.memory_space<vmem>>, vector<1x8xf32>
    %cst_92 = arith.constant 9.99999974E-6 : f32
    %140 = vector.broadcast %cst_92 : f32 to vector<1x8xf32>
    %141 = arith.addf %138, %140 : vector<1x8xf32>
    %142 = math.rsqrt %141 : vector<1x8xf32>
    %143 = arith.mulf %139, %142 : vector<1x8xf32>
    %c2_93 = arith.constant 2 : index
    %c0_94 = arith.constant 0 : index
    %144 = vector.load %arg6[%c2_93, %c0_94] : memref<3x8xf32, #tpu.memory_space<vmem>>, vector<1x8xf32>
    %145 = arith.mulf %131, %143 : vector<1x8xf32>
    %146 = arith.subf %144, %145 : vector<1x8xf32>
    %147 = vector.broadcast %143 : vector<1x8xf32> to vector<32x8xf32>
    %148 = arith.mulf %127, %147 : vector<32x8xf32>
    %149 = vector.broadcast %146 : vector<1x8xf32> to vector<32x8xf32>
    %150 = arith.addf %148, %149 : vector<32x8xf32>
    %cst_95 = arith.constant 0.000000e+00 : f32
    %151 = vector.broadcast %cst_95 : f32 to vector<32x8xf32>
    %152 = arith.maximumf %150, %151 : vector<32x8xf32>
    %c0_96 = arith.constant 0 : index
    %c0_97 = arith.constant 0 : index
    %153 = vector.load %arg7[%c0_96, %c0_97] : memref<72x32xf32, #tpu.memory_space<vmem>>, vector<72x32xf32>
    %cst_98 = arith.constant dense<0.000000e+00> : vector<72x8xf32>
    %154 = tpu.matmul %153, %152, %cst_98 {dimension_numbers = #tpu.dot_dimension_numbers<[1], [0], [0], [1], [0, 0, 1, 1], [], []>} : vector<72x32xf32>, vector<32x8xf32>, vector<72x8xf32> -> vector<72x8xf32>
    %cst_99 = arith.constant 0.000000e+00 : f32
    %155 = vector.broadcast %cst_99 : f32 to vector<8x16xf32>
    %156 = vector.extract_strided_slice %154 {offsets = [0, 0], sizes = [8, 8], strides = [1, 1]} : vector<72x8xf32> to vector<8x8xf32>
    %c0_100 = arith.constant 0 : index
    %c0_101 = arith.constant 0 : index
    %c0_102 = arith.constant 0 : index
    %157 = vector.load %arg8[%c0_100, %c0_101, %c0_102] : memref<9x8x16xf32, #tpu.memory_space<vmem>>, vector<1x8x16xf32>
    %158 = vector.shape_cast %157 : vector<1x8x16xf32> to vector<8x16xf32>
    %cst_103 = arith.constant dense<0.000000e+00> : vector<8x16xf32>
    %159 = tpu.matmul %156, %158, %cst_103 {dimension_numbers = #tpu.dot_dimension_numbers<[1], [0], [0], [1], [0, 0, 1, 1], [], []>} : vector<8x8xf32>, vector<8x16xf32>, vector<8x16xf32> -> vector<8x16xf32>
    %160 = arith.addf %155, %159 : vector<8x16xf32>
    %161 = vector.extract_strided_slice %154 {offsets = [8, 0], sizes = [8, 8], strides = [1, 1]} : vector<72x8xf32> to vector<8x8xf32>
    %c1_104 = arith.constant 1 : index
    %c0_105 = arith.constant 0 : index
    %c0_106 = arith.constant 0 : index
    %162 = vector.load %arg8[%c1_104, %c0_105, %c0_106] : memref<9x8x16xf32, #tpu.memory_space<vmem>>, vector<1x8x16xf32>
    %163 = vector.shape_cast %162 : vector<1x8x16xf32> to vector<8x16xf32>
    %cst_107 = arith.constant dense<0.000000e+00> : vector<8x16xf32>
    %164 = tpu.matmul %161, %163, %cst_107 {dimension_numbers = #tpu.dot_dimension_numbers<[1], [0], [0], [1], [0, 0, 1, 1], [], []>} : vector<8x8xf32>, vector<8x16xf32>, vector<8x16xf32> -> vector<8x16xf32>
    %165 = arith.addf %160, %164 : vector<8x16xf32>
    %166 = vector.extract_strided_slice %154 {offsets = [16, 0], sizes = [8, 8], strides = [1, 1]} : vector<72x8xf32> to vector<8x8xf32>
    %c2_108 = arith.constant 2 : index
    %c0_109 = arith.constant 0 : index
    %c0_110 = arith.constant 0 : index
    %167 = vector.load %arg8[%c2_108, %c0_109, %c0_110] : memref<9x8x16xf32, #tpu.memory_space<vmem>>, vector<1x8x16xf32>
    %168 = vector.shape_cast %167 : vector<1x8x16xf32> to vector<8x16xf32>
    %cst_111 = arith.constant dense<0.000000e+00> : vector<8x16xf32>
    %169 = tpu.matmul %166, %168, %cst_111 {dimension_numbers = #tpu.dot_dimension_numbers<[1], [0], [0], [1], [0, 0, 1, 1], [], []>} : vector<8x8xf32>, vector<8x16xf32>, vector<8x16xf32> -> vector<8x16xf32>
    %170 = arith.addf %165, %169 : vector<8x16xf32>
    %171 = vector.extract_strided_slice %154 {offsets = [24, 0], sizes = [8, 8], strides = [1, 1]} : vector<72x8xf32> to vector<8x8xf32>
    %c3_112 = arith.constant 3 : index
    %c0_113 = arith.constant 0 : index
    %c0_114 = arith.constant 0 : index
    %172 = vector.load %arg8[%c3_112, %c0_113, %c0_114] : memref<9x8x16xf32, #tpu.memory_space<vmem>>, vector<1x8x16xf32>
    %173 = vector.shape_cast %172 : vector<1x8x16xf32> to vector<8x16xf32>
    %cst_115 = arith.constant dense<0.000000e+00> : vector<8x16xf32>
    %174 = tpu.matmul %171, %173, %cst_115 {dimension_numbers = #tpu.dot_dimension_numbers<[1], [0], [0], [1], [0, 0, 1, 1], [], []>} : vector<8x8xf32>, vector<8x16xf32>, vector<8x16xf32> -> vector<8x16xf32>
    %175 = arith.addf %170, %174 : vector<8x16xf32>
    %176 = vector.extract_strided_slice %154 {offsets = [32, 0], sizes = [8, 8], strides = [1, 1]} : vector<72x8xf32> to vector<8x8xf32>
    %c4_116 = arith.constant 4 : index
    %c0_117 = arith.constant 0 : index
    %c0_118 = arith.constant 0 : index
    %177 = vector.load %arg8[%c4_116, %c0_117, %c0_118] : memref<9x8x16xf32, #tpu.memory_space<vmem>>, vector<1x8x16xf32>
    %178 = vector.shape_cast %177 : vector<1x8x16xf32> to vector<8x16xf32>
    %cst_119 = arith.constant dense<0.000000e+00> : vector<8x16xf32>
    %179 = tpu.matmul %176, %178, %cst_119 {dimension_numbers = #tpu.dot_dimension_numbers<[1], [0], [0], [1], [0, 0, 1, 1], [], []>} : vector<8x8xf32>, vector<8x16xf32>, vector<8x16xf32> -> vector<8x16xf32>
    %180 = arith.addf %175, %179 : vector<8x16xf32>
    %181 = vector.extract_strided_slice %154 {offsets = [40, 0], sizes = [8, 8], strides = [1, 1]} : vector<72x8xf32> to vector<8x8xf32>
    %c5_120 = arith.constant 5 : index
    %c0_121 = arith.constant 0 : index
    %c0_122 = arith.constant 0 : index
    %182 = vector.load %arg8[%c5_120, %c0_121, %c0_122] : memref<9x8x16xf32, #tpu.memory_space<vmem>>, vector<1x8x16xf32>
    %183 = vector.shape_cast %182 : vector<1x8x16xf32> to vector<8x16xf32>
    %cst_123 = arith.constant dense<0.000000e+00> : vector<8x16xf32>
    %184 = tpu.matmul %181, %183, %cst_123 {dimension_numbers = #tpu.dot_dimension_numbers<[1], [0], [0], [1], [0, 0, 1, 1], [], []>} : vector<8x8xf32>, vector<8x16xf32>, vector<8x16xf32> -> vector<8x16xf32>
    %185 = arith.addf %180, %184 : vector<8x16xf32>
    %186 = vector.extract_strided_slice %154 {offsets = [48, 0], sizes = [8, 8], strides = [1, 1]} : vector<72x8xf32> to vector<8x8xf32>
    %c6_124 = arith.constant 6 : index
    %c0_125 = arith.constant 0 : index
    %c0_126 = arith.constant 0 : index
    %187 = vector.load %arg8[%c6_124, %c0_125, %c0_126] : memref<9x8x16xf32, #tpu.memory_space<vmem>>, vector<1x8x16xf32>
    %188 = vector.shape_cast %187 : vector<1x8x16xf32> to vector<8x16xf32>
    %cst_127 = arith.constant dense<0.000000e+00> : vector<8x16xf32>
    %189 = tpu.matmul %186, %188, %cst_127 {dimension_numbers = #tpu.dot_dimension_numbers<[1], [0], [0], [1], [0, 0, 1, 1], [], []>} : vector<8x8xf32>, vector<8x16xf32>, vector<8x16xf32> -> vector<8x16xf32>
    %190 = arith.addf %185, %189 : vector<8x16xf32>
    %191 = vector.extract_strided_slice %154 {offsets = [56, 0], sizes = [8, 8], strides = [1, 1]} : vector<72x8xf32> to vector<8x8xf32>
    %c7_128 = arith.constant 7 : index
    %c0_129 = arith.constant 0 : index
    %c0_130 = arith.constant 0 : index
    %192 = vector.load %arg8[%c7_128, %c0_129, %c0_130] : memref<9x8x16xf32, #tpu.memory_space<vmem>>, vector<1x8x16xf32>
    %193 = vector.shape_cast %192 : vector<1x8x16xf32> to vector<8x16xf32>
    %cst_131 = arith.constant dense<0.000000e+00> : vector<8x16xf32>
    %194 = tpu.matmul %191, %193, %cst_131 {dimension_numbers = #tpu.dot_dimension_numbers<[1], [0], [0], [1], [0, 0, 1, 1], [], []>} : vector<8x8xf32>, vector<8x16xf32>, vector<8x16xf32> -> vector<8x16xf32>
    %195 = arith.addf %190, %194 : vector<8x16xf32>
    %196 = vector.extract_strided_slice %154 {offsets = [64, 0], sizes = [8, 8], strides = [1, 1]} : vector<72x8xf32> to vector<8x8xf32>
    %c8_132 = arith.constant 8 : index
    %c0_133 = arith.constant 0 : index
    %c0_134 = arith.constant 0 : index
    %197 = vector.load %arg8[%c8_132, %c0_133, %c0_134] : memref<9x8x16xf32, #tpu.memory_space<vmem>>, vector<1x8x16xf32>
    %198 = vector.shape_cast %197 : vector<1x8x16xf32> to vector<8x16xf32>
    %cst_135 = arith.constant dense<0.000000e+00> : vector<8x16xf32>
    %199 = tpu.matmul %196, %198, %cst_135 {dimension_numbers = #tpu.dot_dimension_numbers<[1], [0], [0], [1], [0, 0, 1, 1], [], []>} : vector<8x8xf32>, vector<8x16xf32>, vector<8x16xf32> -> vector<8x16xf32>
    %200 = arith.addf %195, %199 : vector<8x16xf32>
    %c0_136 = arith.constant 0 : index
    %c0_137 = arith.constant 0 : index
    %201 = vector.load %arg9[%c0_136, %c0_137] : memref<3x16xf32, #tpu.memory_space<vmem>>, vector<1x16xf32>
    %202 = vector.broadcast %201 : vector<1x16xf32> to vector<8x16xf32>
    %203 = arith.addf %200, %202 : vector<8x16xf32>
    %cst_138 = arith.constant dense<0.000000e+00> : vector<16xf32>
    %204 = vector.multi_reduction <add>, %203, %cst_138 [0] : vector<8x16xf32> to vector<16xf32>
    %205 = vector.shape_cast %204 : vector<16xf32> to vector<1x16xf32>
    %cst_139 = arith.constant 1.250000e-01 : f32
    %206 = vector.broadcast %cst_139 : f32 to vector<1x16xf32>
    %207 = arith.mulf %205, %206 : vector<1x16xf32>
    %208 = arith.mulf %203, %203 : vector<8x16xf32>
    %cst_140 = arith.constant dense<0.000000e+00> : vector<16xf32>
    %209 = vector.multi_reduction <add>, %208, %cst_140 [0] : vector<8x16xf32> to vector<16xf32>
    %210 = vector.shape_cast %209 : vector<16xf32> to vector<1x16xf32>
    %cst_141 = arith.constant 1.250000e-01 : f32
    %211 = vector.broadcast %cst_141 : f32 to vector<1x16xf32>
    %212 = arith.mulf %210, %211 : vector<1x16xf32>
    %213 = arith.mulf %207, %207 : vector<1x16xf32>
    %214 = arith.subf %212, %213 : vector<1x16xf32>
    %c1_142 = arith.constant 1 : index
    %c0_143 = arith.constant 0 : index
    %215 = vector.load %arg9[%c1_142, %c0_143] : memref<3x16xf32, #tpu.memory_space<vmem>>, vector<1x16xf32>
    %cst_144 = arith.constant 9.99999974E-6 : f32
    %216 = vector.broadcast %cst_144 : f32 to vector<1x16xf32>
    %217 = arith.addf %214, %216 : vector<1x16xf32>
    %218 = math.rsqrt %217 : vector<1x16xf32>
    %219 = arith.mulf %215, %218 : vector<1x16xf32>
    %c2_145 = arith.constant 2 : index
    %c0_146 = arith.constant 0 : index
    %220 = vector.load %arg9[%c2_145, %c0_146] : memref<3x16xf32, #tpu.memory_space<vmem>>, vector<1x16xf32>
    %221 = arith.mulf %207, %219 : vector<1x16xf32>
    %222 = arith.subf %220, %221 : vector<1x16xf32>
    %223 = vector.broadcast %219 : vector<1x16xf32> to vector<8x16xf32>
    %224 = arith.mulf %203, %223 : vector<8x16xf32>
    %225 = vector.broadcast %222 : vector<1x16xf32> to vector<8x16xf32>
    %226 = arith.addf %224, %225 : vector<8x16xf32>
    %cst_147 = arith.constant 0.000000e+00 : f32
    %227 = vector.broadcast %cst_147 : f32 to vector<8x16xf32>
    %228 = arith.maximumf %226, %227 : vector<8x16xf32>
    %c0_148 = arith.constant 0 : index
    %c0_149 = arith.constant 0 : index
    %229 = vector.load %arg13[%c0_148, %c0_149] : memref<2x48xf32, #tpu.memory_space<vmem>>, vector<1x48xf32>
    %c1_150 = arith.constant 1 : index
    %c0_151 = arith.constant 0 : index
    %230 = vector.load %arg13[%c1_150, %c0_151] : memref<2x48xf32, #tpu.memory_space<vmem>>, vector<1x48xf32>
    %c0_152 = arith.constant 0 : index
    %c0_153 = arith.constant 0 : index
    %231 = vector.load %arg12[%c0_152, %c0_153] : memref<16x48xf32, #tpu.memory_space<vmem>>, vector<16x48xf32>
    %cst_154 = arith.constant 0.000000e+00 : f32
    %232 = vector.broadcast %cst_154 : f32 to vector<2x48xf32>
    %c0_155 = arith.constant 0 : index
    %c0_156 = arith.constant 0 : index
    %c0_157 = arith.constant 0 : index
    %233 = vector.load %arg10[%c0_155, %c0_156, %c0_157] : memref<4x2x8xf32, #tpu.memory_space<vmem>>, vector<1x2x8xf32>
    %234 = vector.shape_cast %233 : vector<1x2x8xf32> to vector<2x8xf32>
    %cst_158 = arith.constant dense<0.000000e+00> : vector<2x16xf32>
    %235 = tpu.matmul %234, %228, %cst_158 {dimension_numbers = #tpu.dot_dimension_numbers<[1], [0], [0], [1], [0, 0, 1, 1], [], []>} : vector<2x8xf32>, vector<8x16xf32>, vector<2x16xf32> -> vector<2x16xf32>
    %c0_159 = arith.constant 0 : index
    %c0_160 = arith.constant 0 : index
    %c0_161 = arith.constant 0 : index
    %236 = vector.load %arg11[%c0_159, %c0_160, %c0_161] : memref<2x16x48xf32, #tpu.memory_space<vmem>>, vector<1x16x48xf32>
    %237 = vector.shape_cast %236 : vector<1x16x48xf32> to vector<16x48xf32>
    %cst_162 = arith.constant dense<0.000000e+00> : vector<2x48xf32>
    %238 = tpu.matmul %235, %237, %cst_162 {dimension_numbers = #tpu.dot_dimension_numbers<[1], [0], [0], [1], [0, 0, 1, 1], [], []>} : vector<2x16xf32>, vector<16x48xf32>, vector<2x48xf32> -> vector<2x48xf32>
    %239 = arith.addf %232, %238 : vector<2x48xf32>
    %c1_163 = arith.constant 1 : index
    %c0_164 = arith.constant 0 : index
    %c0_165 = arith.constant 0 : index
    %240 = vector.load %arg10[%c1_163, %c0_164, %c0_165] : memref<4x2x8xf32, #tpu.memory_space<vmem>>, vector<1x2x8xf32>
    %241 = vector.shape_cast %240 : vector<1x2x8xf32> to vector<2x8xf32>
    %cst_166 = arith.constant dense<0.000000e+00> : vector<2x16xf32>
    %242 = tpu.matmul %241, %228, %cst_166 {dimension_numbers = #tpu.dot_dimension_numbers<[1], [0], [0], [1], [0, 0, 1, 1], [], []>} : vector<2x8xf32>, vector<8x16xf32>, vector<2x16xf32> -> vector<2x16xf32>
    %c1_167 = arith.constant 1 : index
    %c0_168 = arith.constant 0 : index
    %c0_169 = arith.constant 0 : index
    %243 = vector.load %arg11[%c1_167, %c0_168, %c0_169] : memref<2x16x48xf32, #tpu.memory_space<vmem>>, vector<1x16x48xf32>
    %244 = vector.shape_cast %243 : vector<1x16x48xf32> to vector<16x48xf32>
    %cst_170 = arith.constant dense<0.000000e+00> : vector<2x48xf32>
    %245 = tpu.matmul %242, %244, %cst_170 {dimension_numbers = #tpu.dot_dimension_numbers<[1], [0], [0], [1], [0, 0, 1, 1], [], []>} : vector<2x16xf32>, vector<16x48xf32>, vector<2x48xf32> -> vector<2x48xf32>
    %246 = arith.addf %239, %245 : vector<2x48xf32>
    %247 = vector.broadcast %229 : vector<1x48xf32> to vector<2x48xf32>
    %248 = arith.addf %246, %247 : vector<2x48xf32>
    %cst_171 = arith.constant 0.000000e+00 : f32
    %249 = vector.broadcast %cst_171 : f32 to vector<2x48xf32>
    %c2_172 = arith.constant 2 : index
    %c0_173 = arith.constant 0 : index
    %c0_174 = arith.constant 0 : index
    %250 = vector.load %arg10[%c2_172, %c0_173, %c0_174] : memref<4x2x8xf32, #tpu.memory_space<vmem>>, vector<1x2x8xf32>
    %251 = vector.shape_cast %250 : vector<1x2x8xf32> to vector<2x8xf32>
    %cst_175 = arith.constant dense<0.000000e+00> : vector<2x16xf32>
    %252 = tpu.matmul %251, %228, %cst_175 {dimension_numbers = #tpu.dot_dimension_numbers<[1], [0], [0], [1], [0, 0, 1, 1], [], []>} : vector<2x8xf32>, vector<8x16xf32>, vector<2x16xf32> -> vector<2x16xf32>
    %c0_176 = arith.constant 0 : index
    %c0_177 = arith.constant 0 : index
    %c0_178 = arith.constant 0 : index
    %253 = vector.load %arg11[%c0_176, %c0_177, %c0_178] : memref<2x16x48xf32, #tpu.memory_space<vmem>>, vector<1x16x48xf32>
    %254 = vector.shape_cast %253 : vector<1x16x48xf32> to vector<16x48xf32>
    %cst_179 = arith.constant dense<0.000000e+00> : vector<2x48xf32>
    %255 = tpu.matmul %252, %254, %cst_179 {dimension_numbers = #tpu.dot_dimension_numbers<[1], [0], [0], [1], [0, 0, 1, 1], [], []>} : vector<2x16xf32>, vector<16x48xf32>, vector<2x48xf32> -> vector<2x48xf32>
    %256 = arith.addf %249, %255 : vector<2x48xf32>
    %c3_180 = arith.constant 3 : index
    %c0_181 = arith.constant 0 : index
    %c0_182 = arith.constant 0 : index
    %257 = vector.load %arg10[%c3_180, %c0_181, %c0_182] : memref<4x2x8xf32, #tpu.memory_space<vmem>>, vector<1x2x8xf32>
    %258 = vector.shape_cast %257 : vector<1x2x8xf32> to vector<2x8xf32>
    %cst_183 = arith.constant dense<0.000000e+00> : vector<2x16xf32>
    %259 = tpu.matmul %258, %228, %cst_183 {dimension_numbers = #tpu.dot_dimension_numbers<[1], [0], [0], [1], [0, 0, 1, 1], [], []>} : vector<2x8xf32>, vector<8x16xf32>, vector<2x16xf32> -> vector<2x16xf32>
    %c1_184 = arith.constant 1 : index
    %c0_185 = arith.constant 0 : index
    %c0_186 = arith.constant 0 : index
    %260 = vector.load %arg11[%c1_184, %c0_185, %c0_186] : memref<2x16x48xf32, #tpu.memory_space<vmem>>, vector<1x16x48xf32>
    %261 = vector.shape_cast %260 : vector<1x16x48xf32> to vector<16x48xf32>
    %cst_187 = arith.constant dense<0.000000e+00> : vector<2x48xf32>
    %262 = tpu.matmul %259, %261, %cst_187 {dimension_numbers = #tpu.dot_dimension_numbers<[1], [0], [0], [1], [0, 0, 1, 1], [], []>} : vector<2x16xf32>, vector<16x48xf32>, vector<2x48xf32> -> vector<2x48xf32>
    %263 = arith.addf %256, %262 : vector<2x48xf32>
    %264 = vector.broadcast %229 : vector<1x48xf32> to vector<2x48xf32>
    %265 = arith.addf %263, %264 : vector<2x48xf32>
    %cst_188 = arith.constant 0.000000e+00 : f32
    %266 = vector.broadcast %cst_188 : f32 to vector<2x16xf32>
    %cst_189 = arith.constant dense<0.000000e+00> : vector<2x48xf32>
    %267 = tpu.matmul %266, %231, %cst_189 {dimension_numbers = #tpu.dot_dimension_numbers<[1], [0], [0], [1], [0, 0, 1, 1], [], []>} : vector<2x16xf32>, vector<16x48xf32>, vector<2x48xf32> -> vector<2x48xf32>
    %268 = vector.broadcast %230 : vector<1x48xf32> to vector<2x48xf32>
    %269 = arith.addf %267, %268 : vector<2x48xf32>
    %270 = vector.extract_strided_slice %248 {offsets = [0, 0], sizes = [2, 16], strides = [1, 1]} : vector<2x48xf32> to vector<2x16xf32>
    %271 = vector.extract_strided_slice %269 {offsets = [0, 0], sizes = [2, 16], strides = [1, 1]} : vector<2x48xf32> to vector<2x16xf32>
    %272 = arith.addf %270, %271 : vector<2x16xf32>
    %273 = arith.negf %272 : vector<2x16xf32>
    %274 = math.exp %273 : vector<2x16xf32>
    %cst_190 = arith.constant 1.000000e+00 : f32
    %275 = vector.broadcast %cst_190 : f32 to vector<2x16xf32>
    %276 = arith.addf %275, %274 : vector<2x16xf32>
    %277 = arith.divf %275, %276 : vector<2x16xf32>
    %278 = vector.extract_strided_slice %248 {offsets = [0, 16], sizes = [2, 16], strides = [1, 1]} : vector<2x48xf32> to vector<2x16xf32>
    %279 = vector.extract_strided_slice %269 {offsets = [0, 16], sizes = [2, 16], strides = [1, 1]} : vector<2x48xf32> to vector<2x16xf32>
    %280 = arith.addf %278, %279 : vector<2x16xf32>
    %281 = arith.negf %280 : vector<2x16xf32>
    %282 = math.exp %281 : vector<2x16xf32>
    %cst_191 = arith.constant 1.000000e+00 : f32
    %283 = vector.broadcast %cst_191 : f32 to vector<2x16xf32>
    %284 = arith.addf %283, %282 : vector<2x16xf32>
    %285 = arith.divf %283, %284 : vector<2x16xf32>
    %286 = vector.extract_strided_slice %248 {offsets = [0, 32], sizes = [2, 16], strides = [1, 1]} : vector<2x48xf32> to vector<2x16xf32>
    %287 = vector.extract_strided_slice %269 {offsets = [0, 32], sizes = [2, 16], strides = [1, 1]} : vector<2x48xf32> to vector<2x16xf32>
    %288 = arith.mulf %277, %287 : vector<2x16xf32>
    %289 = arith.addf %286, %288 : vector<2x16xf32>
    %290 = math.tanh %289 : vector<2x16xf32>
    %cst_192 = arith.constant 1.000000e+00 : f32
    %291 = vector.broadcast %cst_192 : f32 to vector<2x16xf32>
    %292 = arith.subf %291, %285 : vector<2x16xf32>
    %293 = arith.mulf %292, %290 : vector<2x16xf32>
    %294 = arith.mulf %285, %266 : vector<2x16xf32>
    %295 = arith.addf %293, %294 : vector<2x16xf32>
    %cst_193 = arith.constant dense<0.000000e+00> : vector<2x48xf32>
    %296 = tpu.matmul %295, %231, %cst_193 {dimension_numbers = #tpu.dot_dimension_numbers<[1], [0], [0], [1], [0, 0, 1, 1], [], []>} : vector<2x16xf32>, vector<16x48xf32>, vector<2x48xf32> -> vector<2x48xf32>
    %297 = vector.broadcast %230 : vector<1x48xf32> to vector<2x48xf32>
    %298 = arith.addf %296, %297 : vector<2x48xf32>
    %299 = vector.extract_strided_slice %265 {offsets = [0, 0], sizes = [2, 16], strides = [1, 1]} : vector<2x48xf32> to vector<2x16xf32>
    %300 = vector.extract_strided_slice %298 {offsets = [0, 0], sizes = [2, 16], strides = [1, 1]} : vector<2x48xf32> to vector<2x16xf32>
    %301 = arith.addf %299, %300 : vector<2x16xf32>
    %302 = arith.negf %301 : vector<2x16xf32>
    %303 = math.exp %302 : vector<2x16xf32>
    %cst_194 = arith.constant 1.000000e+00 : f32
    %304 = vector.broadcast %cst_194 : f32 to vector<2x16xf32>
    %305 = arith.addf %304, %303 : vector<2x16xf32>
    %306 = arith.divf %304, %305 : vector<2x16xf32>
    %307 = vector.extract_strided_slice %265 {offsets = [0, 16], sizes = [2, 16], strides = [1, 1]} : vector<2x48xf32> to vector<2x16xf32>
    %308 = vector.extract_strided_slice %298 {offsets = [0, 16], sizes = [2, 16], strides = [1, 1]} : vector<2x48xf32> to vector<2x16xf32>
    %309 = arith.addf %307, %308 : vector<2x16xf32>
    %310 = arith.negf %309 : vector<2x16xf32>
    %311 = math.exp %310 : vector<2x16xf32>
    %cst_195 = arith.constant 1.000000e+00 : f32
    %312 = vector.broadcast %cst_195 : f32 to vector<2x16xf32>
    %313 = arith.addf %312, %311 : vector<2x16xf32>
    %314 = arith.divf %312, %313 : vector<2x16xf32>
    %315 = vector.extract_strided_slice %265 {offsets = [0, 32], sizes = [2, 16], strides = [1, 1]} : vector<2x48xf32> to vector<2x16xf32>
    %316 = vector.extract_strided_slice %298 {offsets = [0, 32], sizes = [2, 16], strides = [1, 1]} : vector<2x48xf32> to vector<2x16xf32>
    %317 = arith.mulf %306, %316 : vector<2x16xf32>
    %318 = arith.addf %315, %317 : vector<2x16xf32>
    %319 = math.tanh %318 : vector<2x16xf32>
    %cst_196 = arith.constant 1.000000e+00 : f32
    %320 = vector.broadcast %cst_196 : f32 to vector<2x16xf32>
    %321 = arith.subf %320, %314 : vector<2x16xf32>
    %322 = arith.mulf %321, %319 : vector<2x16xf32>
    %323 = arith.mulf %314, %295 : vector<2x16xf32>
    %324 = arith.addf %322, %323 : vector<2x16xf32>
    %c0_197 = arith.constant 0 : index
    %c0_198 = arith.constant 0 : index
    %325 = vector.load %arg14[%c0_197, %c0_198] : memref<2x16xf32, #tpu.memory_space<vmem>>, vector<2x16xf32>
    tpu.vector_store %arg14[%c0_197, %c0_198], %324 {strides = array<i32>} : memref<2x16xf32, #tpu.memory_space<vmem>>, vector<2x16xf32>,
    return
  }
}

</mosaic_0001>

<llo_original>
// kernel: reference_encoder_forward.1
$region0: #{reference_encoder_forward.1}
  #allocation0 [shape = 'u32[]', space=smem, size = 0x4, offset = 0x4, fixed_abs, tag = 'smem constant byte address 0x4 - core index']
  #allocation1 [shape = 'u32[72,128]{1,0:T(1,128)}', space=vmem, size = 0x9000, scoped, tag = 'internal scratch']
  %s0 = inlined_call_operand.vmem [shape: f32[512,4], index: 0, kind: input, shape index: {}]
  %s1 = inlined_call_operand.hbm [shape: f32[1152,512], index: 1, kind: input, shape index: {}]
  %s2 = inlined_call_operand.vmem [shape: f32[9,4,8], index: 2, kind: input, shape index: {}]
  %s3 = inlined_call_operand.hbm [shape: f32[3,8], index: 3, kind: input, shape index: {}]
  %s4 = inlined_call_operand.hbm [shape: f32[288,128], index: 4, kind: input, shape index: {}]
  %s5 = inlined_call_operand.vmem [shape: f32[9,8,8], index: 5, kind: input, shape index: {}]
  %s6 = inlined_call_operand.hbm [shape: f32[3,8], index: 6, kind: input, shape index: {}]
  %s7 = inlined_call_operand.vmem [shape: f32[72,32], index: 7, kind: input, shape index: {}]
  %s8 = inlined_call_operand.hbm [shape: f32[9,8,16], index: 8, kind: input, shape index: {}]
  %s9 = inlined_call_operand.hbm [shape: f32[3,16], index: 9, kind: input, shape index: {}]
  %s10 = inlined_call_operand.hbm [shape: f32[4,2,8], index: 10, kind: input, shape index: {}]
  %s11 = inlined_call_operand.hbm [shape: f32[2,16,48], index: 11, kind: input, shape index: {}]
  %s12 = inlined_call_operand.hbm [shape: f32[16,48], index: 12, kind: input, shape index: {}]
  %s13 = inlined_call_operand.hbm [shape: f32[2,48], index: 13, kind: input, shape index: {}]
  %s14 = inlined_call_operand.hbm [shape: f32[2,16], index: 14, kind: output, shape index: {}]
  %s15 = sld [smem:[#allocation0]]
  $region106: #{reference_encoder_forward.1} parent=0
    _
  %s17 = ssub.s32 1, %s15
  %s18 = scalar_select 0, %s17, %s15
  $region1: #{reference_encoder_forward.1} parent=0
    #allocation2 [shape = 'u8[2359296]{0}', space=vmem, size = 0x240000, scoped, tag = 'input window, operand 1, single buffered']
    #allocation3 [shape = 's32[1]{0}', space=sflag, size = 0x4, scoped, tag = 'scoped memory for reference_encoder_forward.1']
    #allocation4 [shape = 's32[1]{0}', space=sflag, size = 0x4, scoped, tag = 'scoped memory for reference_encoder_forward.1']
    #allocation5 [shape = 'u8[2048]{0}', space=vmem, size = 0x800, scoped, tag = 'input window, operand 3, single buffered']
    #allocation6 [shape = 's32[1]{0}', space=sflag, size = 0x4, scoped, tag = 'scoped memory for reference_encoder_forward.1']
    #allocation7 [shape = 'u8[147456]{0}', space=vmem, size = 0x24000, scoped, tag = 'input window, operand 4, single buffered']
    #allocation8 [shape = 'u8[2048]{0}', space=vmem, size = 0x800, scoped, tag = 'input window, operand 6, single buffered']
    #allocation9 [shape = 's32[1]{0}', space=sflag, size = 0x4, scoped, tag = 'scoped memory for reference_encoder_forward.1']
    #allocation10 [shape = 'u8[36864]{0}', space=vmem, size = 0x9000, scoped, tag = 'input window, operand 8, single buffered']
    #allocation11 [shape = 'u8[2048]{0}', space=vmem, size = 0x800, scoped, tag = 'input window, operand 9, single buffered']
    #allocation12 [shape = 's32[1]{0}', space=sflag, size = 0x4, scoped, tag = 'scoped memory for reference_encoder_forward.1']
    #allocation13 [shape = 'u8[4096]{0}', space=vmem, size = 0x1000, scoped, tag = 'input window, operand 10, single buffered']
    #allocation14 [shape = 'u8[16384]{0}', space=vmem, size = 0x4000, scoped, tag = 'input window, operand 11, single buffered']
    #allocation15 [shape = 's32[1]{0}', space=sflag, size = 0x4, scoped, tag = 'scoped memory for reference_encoder_forward.1']
    #allocation16 [shape = 'u8[8192]{0}', space=vmem, size = 0x2000, scoped, tag = 'input window, operand 12, single buffered']
    #allocation17 [shape = 'u8[1024]{0}', space=vmem, size = 0x400, scoped, tag = 'input window, operand 13, single buffered']
    #allocation18 [shape = 's32[1]{0}', space=sflag, size = 0x4, scoped, tag = 'scoped memory for reference_encoder_forward.1']
    #allocation19 [shape = 'u8[1024]{0}', space=vmem, size = 0x400, scoped, tag = 'output window, operand 0, single buffered']
    %19 = vsyncpa [#allocation3], 0
    %20 = vsyncpa [#allocation6], 0
    %21 = vsyncpa [#allocation9], 0
    %22 = vsyncpa [#allocation12], 0
    %23 = vsyncpa [#allocation15], 0
    %24 = vsyncpa [#allocation18], 0
    %25 = vsyncpa [#allocation4], 0
    // Predicated region
    $region2: #{reference_encoder_forward.1} parent=1 // pred_check
      _
    $region3: #{reference_encoder_forward.1} parent=1 // pred_check_branch
      %27 = sbr.rel (0) target = $region5
    $region4: #{reference_encoder_forward.1} parent=1 // pred_region
      _
    $region5: #{reference_encoder_forward.1} parent=1 // pred_fallthru
      _
    // Predicated region
    $region6: #{reference_encoder_forward.1} parent=1 // pred_check
      _
    $region7: #{reference_encoder_forward.1} parent=1 // pred_check_branch
      %29 = sbr.rel (0) target = $region9
    $region8: #{reference_encoder_forward.1} parent=1 // pred_region
      %31 = vsyncadd [#allocation3], 0
      %s32 = sshll.u32 %s1, 4
      %s33 = int_to_ptr.hbm [resolvable:$true] %s32
      %s34 = sshll.u32 [#allocation2], 4
      %s35 = int_to_ptr.vmem [resolvable:$true] %s34
      %40 = dma.hbm_to_vmem [thread:$0]  %s33, 73728, %s35, [#allocation3], 512, 512, 32
    $region9: #{reference_encoder_forward.1} parent=1 // pred_fallthru
      _
    // Predicated region
    $region10: #{reference_encoder_forward.1} parent=1 // pred_check
      _
    $region11: #{reference_encoder_forward.1} parent=1 // pred_check_branch
      %42 = sbr.rel (0) target = $region13
    $region12: #{reference_encoder_forward.1} parent=1 // pred_region
      _
    $region13: #{reference_encoder_forward.1} parent=1 // pred_fallthru
      _
    // Predicated region
    $region14: #{reference_encoder_forward.1} parent=1 // pred_check
      _
    $region15: #{reference_encoder_forward.1} parent=1 // pred_check_branch
      %44 = sbr.rel (0) target = $region17
    $region16: #{reference_encoder_forward.1} parent=1 // pred_region
      %46 = vsyncadd [#allocation6], 0
      %s48 = sshll.u32 %s3, 4
      %s49 = int_to_ptr.hbm [resolvable:$true] %s48
      %s50 = sshll.u32 [#allocation5], 4
      %s51 = int_to_ptr.vmem [resolvable:$true] %s50
      %53 = dma.hbm_to_vmem [thread:$0]  %s49, 64, %s51, [#allocation6]
    $region17: #{reference_encoder_forward.1} parent=1 // pred_fallthru
      _
    // Predicated region
    $region18: #{reference_encoder_forward.1} parent=1 // pred_check
      _
    $region19: #{reference_encoder_forward.1} parent=1 // pred_check_branch
      %55 = sbr.rel (0) target = $region21
    $region20: #{reference_encoder_forward.1} parent=1 // pred_region
      %57 = vsyncadd [#allocation6], 0
      %s58 = sshll.u32 %s4, 4
      %s59 = int_to_ptr.hbm [resolvable:$true] %s58
      %s60 = sshll.u32 [#allocation7], 4
      %s61 = int_to_ptr.vmem [resolvable:$true] %s60
      %66 = dma.hbm_to_vmem [thread:$0]  %s59, 4608, %s61, [#allocation6], 128, 128, 8
    $region21: #{reference_encoder_forward.1} parent=1 // pred_fallthru
      _
    // Predicated region
    $region22: #{reference_encoder_forward.1} parent=1 // pred_check
      _
    $region23: #{reference_encoder_forward.1} parent=1 // pred_check_branch
      %68 = sbr.rel (0) target = $region25
    $region24: #{reference_encoder_forward.1} parent=1 // pred_region
      _
    $region25: #{reference_encoder_forward.1} parent=1 // pred_fallthru
      _
    // Predicated region
    $region26: #{reference_encoder_forward.1} parent=1 // pred_check
      _
    $region27: #{reference_encoder_forward.1} parent=1 // pred_check_branch
      %70 = sbr.rel (0) target = $region29
    $region28: #{reference_encoder_forward.1} parent=1 // pred_region
      %72 = vsyncadd [#allocation9], 0
      %s74 = sshll.u32 %s6, 4
      %s75 = int_to_ptr.hbm [resolvable:$true] %s74
      %s76 = sshll.u32 [#allocation8], 4
      %s77 = int_to_ptr.vmem [resolvable:$true] %s76
      %79 = dma.hbm_to_vmem [thread:$0]  %s75, 64, %s77, [#allocation9]
    $region29: #{reference_encoder_forward.1} parent=1 // pred_fallthru
      _
    // Predicated region
    $region30: #{reference_encoder_forward.1} parent=1 // pred_check
      _
    $region31: #{reference_encoder_forward.1} parent=1 // pred_check_branch
      %81 = sbr.rel (0) target = $region33
    $region32: #{reference_encoder_forward.1} parent=1 // pred_region
      _
    $region33: #{reference_encoder_forward.1} parent=1 // pred_fallthru
      _
    // Predicated region
    $region34: #{reference_encoder_forward.1} parent=1 // pred_check
      _
    $region35: #{reference_encoder_forward.1} parent=1 // pred_check_branch
      %83 = sbr.rel (0) target = $region37
    $region36: #{reference_encoder_forward.1} parent=1 // pred_region
      %85 = vsyncadd [#allocation9], 0
      %s86 = sshll.u32 %s8, 4
      %s87 = int_to_ptr.hbm [resolvable:$true] %s86
      %s88 = sshll.u32 [#allocation10], 4
      %s89 = int_to_ptr.vmem [resolvable:$true] %s88
      %94 = dma.hbm_to_vmem [thread:$0]  %s87, 1152, %s89, [#allocation9], 128, 128, 8
    $region37: #{reference_encoder_forward.1} parent=1 // pred_fallthru
      _
    // Predicated region
    $region38: #{reference_encoder_forward.1} parent=1 // pred_check
      _
    $region39: #{reference_encoder_forward.1} parent=1 // pred_check_branch
      %96 = sbr.rel (0) target = $region41
    $region40: #{reference_encoder_forward.1} parent=1 // pred_region
      %98 = vsyncadd [#allocation12], 0
      %s100 = sshll.u32 %s9, 4
      %s101 = int_to_ptr.hbm [resolvable:$true] %s100
      %s102 = sshll.u32 [#allocation11], 4
      %s103 = int_to_ptr.vmem [resolvable:$true] %s102
      %105 = dma.hbm_to_vmem [thread:$0]  %s101, 64, %s103, [#allocation12]
    $region41: #{reference_encoder_forward.1} parent=1 // pred_fallthru
      _
    // Predicated region
    $region42: #{reference_encoder_forward.1} parent=1 // pred_check
      _
    $region43: #{reference_encoder_forward.1} parent=1 // pred_check_branch
      %107 = sbr.rel (0) target = $region45
    $region44: #{reference_encoder_forward.1} parent=1 // pred_region
      %109 = vsyncadd [#allocation12], 0
      %s110 = sshll.u32 %s10, 4
      %s111 = int_to_ptr.hbm [resolvable:$true] %s110
      %s112 = sshll.u32 [#allocation13], 4
      %s113 = int_to_ptr.vmem [resolvable:$true] %s112
      %118 = dma.hbm_to_vmem [thread:$0]  %s111, 128, %s113, [#allocation12], 32, 32, 2
    $region45: #{reference_encoder_forward.1} parent=1 // pred_fallthru
      _
    // Predicated region
    $region46: #{reference_encoder_forward.1} parent=1 // pred_check
      _
    $region47: #{reference_encoder_forward.1} parent=1 // pred_check_branch
      %120 = sbr.rel (0) target = $region49
    $region48: #{reference_encoder_forward.1} parent=1 // pred_region
      %122 = vsyncadd [#allocation15], 0
      %s123 = sshll.u32 %s11, 4
      %s124 = int_to_ptr.hbm [resolvable:$true] %s123
      %s125 = sshll.u32 [#allocation14], 4
      %s126 = int_to_ptr.vmem [resolvable:$true] %s125
      %131 = dma.hbm_to_vmem [thread:$0]  %s124, 512, %s126, [#allocation15], 128, 128, 8
    $region49: #{reference_encoder_forward.1} parent=1 // pred_fallthru
      _
    // Predicated region
    $region50: #{reference_encoder_forward.1} parent=1 // pred_check
      _
    $region51: #{reference_encoder_forward.1} parent=1 // pred_check_branch
      %133 = sbr.rel (0) target = $region53
    $region52: #{reference_encoder_forward.1} parent=1 // pred_region
      %135 = vsyncadd [#allocation15], 0
      %s136 = sshll.u32 %s12, 4
      %s137 = int_to_ptr.hbm [resolvable:$true] %s136
      %s138 = sshll.u32 [#allocation16], 4
      %s139 = int_to_ptr.vmem [resolvable:$true] %s138
      %144 = dma.hbm_to_vmem [thread:$0]  %s137, 256, %s139, [#allocation15], 128, 128, 8
    $region53: #{reference_encoder_forward.1} parent=1 // pred_fallthru
      _
    // Predicated region
    $region54: #{reference_encoder_forward.1} parent=1 // pred_check
      _
    $region55: #{reference_encoder_forward.1} parent=1 // pred_check_branch
      %146 = sbr.rel (0) target = $region57
    $region56: #{reference_encoder_forward.1} parent=1 // pred_region
      %148 = vsyncadd [#allocation18], 0
      %s150 = sshll.u32 %s13, 4
      %s151 = int_to_ptr.hbm [resolvable:$true] %s150
      %s152 = sshll.u32 [#allocation17], 4
      %s153 = int_to_ptr.vmem [resolvable:$true] %s152
      %155 = dma.hbm_to_vmem [thread:$0]  %s151, 32, %s153, [#allocation18]
    $region57: #{reference_encoder_forward.1} parent=1 // pred_fallthru
      _
    // Predicated region
    $region58: #{reference_encoder_forward.1} parent=1 // pred_check
      _
    $region59: #{reference_encoder_forward.1} parent=1 // pred_check_branch
      %157 = sbr.rel (0) target = $region61
    $region60: #{reference_encoder_forward.1} parent=1 // pred_region
      %159 = dma.done [#allocation3], 73728
    $region61: #{reference_encoder_forward.1} parent=1 // pred_fallthru
      _
    // Predicated region
    $region62: #{reference_encoder_forward.1} parent=1 // pred_check
      _
    $region63: #{reference_encoder_forward.1} parent=1 // pred_check_branch
      %161 = sbr.rel (0) target = $region65
    $region64: #{reference_encoder_forward.1} parent=1 // pred_region
      %163 = dma.done [#allocation6], 64
    $region65: #{reference_encoder_forward.1} parent=1 // pred_fallthru
      _
    // Predicated region
    $region66: #{reference_encoder_forward.1} parent=1 // pred_check
      _
    $region67: #{reference_encoder_forward.1} parent=1 // pred_check_branch
      %165 = sbr.rel (0) target = $region69
    $region68: #{reference_encoder_forward.1} parent=1 // pred_region
      %167 = dma.done [#allocation6], 4608
    $region69: #{reference_encoder_forward.1} parent=1 // pred_fallthru
      _
    // Predicated region
    $region70: #{reference_encoder_forward.1} parent=1 // pred_check
      _
    $region71: #{reference_encoder_forward.1} parent=1 // pred_check_branch
      %169 = sbr.rel (0) target = $region73
    $region72: #{reference_encoder_forward.1} parent=1 // pred_region
      %171 = dma.done [#allocation9], 64
    $region73: #{reference_encoder_forward.1} parent=1 // pred_fallthru
      _
    // Predicated region
    $region74: #{reference_encoder_forward.1} parent=1 // pred_check
      _
    $region75: #{reference_encoder_forward.1} parent=1 // pred_check_branch
      %173 = sbr.rel (0) target = $region77
    $region76: #{reference_encoder_forward.1} parent=1 // pred_region
      %175 = dma.done [#allocation9], 1152
    $region77: #{reference_encoder_forward.1} parent=1 // pred_fallthru
      _
    // Predicated region
    $region78: #{reference_encoder_forward.1} parent=1 // pred_check
      _
    $region79: #{reference_encoder_forward.1} parent=1 // pred_check_branch
      %177 = sbr.rel (0) target = $region81
    $region80: #{reference_encoder_forward.1} parent=1 // pred_region
      %179 = dma.done [#allocation12], 64
    $region81: #{reference_encoder_forward.1} parent=1 // pred_fallthru
      _
    // Predicated region
    $region82: #{reference_encoder_forward.1} parent=1 // pred_check
      _
    $region83: #{reference_encoder_forward.1} parent=1 // pred_check_branch
      %181 = sbr.rel (0) target = $region85
    $region84: #{reference_encoder_forward.1} parent=1 // pred_region
      %183 = dma.done [#allocation12], 128
    $region85: #{reference_encoder_forward.1} parent=1 // pred_fallthru
      _
    // Predicated region
    $region86: #{reference_encoder_forward.1} parent=1 // pred_check
      _
    $region87: #{reference_encoder_forward.1} parent=1 // pred_check_branch
      %185 = sbr.rel (0) target = $region89
    $region88: #{reference_encoder_forward.1} parent=1 // pred_region
      %187 = dma.done [#allocation15], 512
    $region89: #{reference_encoder_forward.1} parent=1 // pred_fallthru
      _
    // Predicated region
    $region90: #{reference_encoder_forward.1} parent=1 // pred_check
      _
    $region91: #{reference_encoder_forward.1} parent=1 // pred_check_branch
      %189 = sbr.rel (0) target = $region93
    $region92: #{reference_encoder_forward.1} parent=1 // pred_region
      %191 = dma.done [#allocation15], 256
    $region93: #{reference_encoder_forward.1} parent=1 // pred_fallthru
      _
    // Predicated region
    $region94: #{reference_encoder_forward.1} parent=1 // pred_check
      _
    $region95: #{reference_encoder_forward.1} parent=1 // pred_check_branch
      %193 = sbr.rel (0) target = $region97
    $region96: #{reference_encoder_forward.1} parent=1 // pred_region
      %195 = dma.done [#allocation18], 32
    $region97: #{reference_encoder_forward.1} parent=1 // pred_fallthru
      _
    %v196 = vld [vmem:[%s0] sm:$0xff]
    %v197 = vld [vmem:[%s0 + $0x8] sm:$0xff]
    %v198 = vld [vmem:[%s0 + $0x10] sm:$0xff]
    %v199 = vld [vmem:[%s0 + $0x18] sm:$0xff]
    %v200 = vld [vmem:[%s0 + $0x20] sm:$0xff]
    %v201 = vld [vmem:[%s0 + $0x28] sm:$0xff]
    %v202 = vld [vmem:[%s0 + $0x30] sm:$0xff]
    %v203 = vld [vmem:[%s0 + $0x38] sm:$0xff]
    %v204 = vld [vmem:[%s0 + $0x40] sm:$0xff]
    %v205 = vld [vmem:[%s0 + $0x48] sm:$0xff]
    %v206 = vld [vmem:[%s0 + $0x50] sm:$0xff]
    %v207 = vld [vmem:[%s0 + $0x58] sm:$0xff]
    %v208 = vld [vmem:[%s0 + $0x60] sm:$0xff]
    %v209 = vld [vmem:[%s0 + $0x68] sm:$0xff]
    %v210 = vld [vmem:[%s0 + $0x70] sm:$0xff]
    %v211 = vld [vmem:[%s0 + $0x78] sm:$0xff]
    %v212 = vld [vmem:[%s0 + $0x80] sm:$0xff]
    %v213 = vld [vmem:[%s0 + $0x88] sm:$0xff]
    %v214 = vld [vmem:[%s0 + $0x90] sm:$0xff]
    %v215 = vld [vmem:[%s0 + $0x98] sm:$0xff]
    %v216 = vld [vmem:[%s0 + $0xa0] sm:$0xff]
    %v217 = vld [vmem:[%s0 + $0xa8] sm:$0xff]
    %v218 = vld [vmem:[%s0 + $0xb0] sm:$0xff]
    %v219 = vld [vmem:[%s0 + $0xb8] sm:$0xff]
    %v220 = vld [vmem:[%s0 + $0xc0] sm:$0xff]
    %v221 = vld [vmem:[%s0 + $0xc8] sm:$0xff]
    %v222 = vld [vmem:[%s0 + $0xd0] sm:$0xff]
    %v223 = vld [vmem:[%s0 + $0xd8] sm:$0xff]
    %v224 = vld [vmem:[%s0 + $0xe0] sm:$0xff]
    %v225 = vld [vmem:[%s0 + $0xe8] sm:$0xff]
    %v226 = vld [vmem:[%s0 + $0xf0] sm:$0xff]
    %v227 = vld [vmem:[%s0 + $0xf8] sm:$0xff]
    %v228 = vld [vmem:[%s0 + $0x100] sm:$0xff]
    %v229 = vld [vmem:[%s0 + $0x108] sm:$0xff]
    %v230 = vld [vmem:[%s0 + $0x110] sm:$0xff]
    %v231 = vld [vmem:[%s0 + $0x118] sm:$0xff]
    %v232 = vld [vmem:[%s0 + $0x120] sm:$0xff]
    %v233 = vld [vmem:[%s0 + $0x128] sm:$0xff]
    %v234 = vld [vmem:[%s0 + $0x130] sm:$0xff]
    %v235 = vld [vmem:[%s0 + $0x138] sm:$0xff]
    %v236 = vld [vmem:[%s0 + $0x140] sm:$0xff]
    %v237 = vld [vmem:[%s0 + $0x148] sm:$0xff]
    %v238 = vld [vmem:[%s0 + $0x150] sm:$0xff]
    %v239 = vld [vmem:[%s0 + $0x158] sm:$0xff]
    %v240 = vld [vmem:[%s0 + $0x160] sm:$0xff]
    %v241 = vld [vmem:[%s0 + $0x168] sm:$0xff]
    %v242 = vld [vmem:[%s0 + $0x170] sm:$0xff]
    %v243 = vld [vmem:[%s0 + $0x178] sm:$0xff]
    %v244 = vld [vmem:[%s0 + $0x180] sm:$0xff]
    %v245 = vld [vmem:[%s0 + $0x188] sm:$0xff]
    %v246 = vld [vmem:[%s0 + $0x190] sm:$0xff]
    %v247 = vld [vmem:[%s0 + $0x198] sm:$0xff]
    %v248 = vld [vmem:[%s0 + $0x1a0] sm:$0xff]
    %v249 = vld [vmem:[%s0 + $0x1a8] sm:$0xff]
    %v250 = vld [vmem:[%s0 + $0x1b0] sm:$0xff]
    %v251 = vld [vmem:[%s0 + $0x1b8] sm:$0xff]
    %v252 = vld [vmem:[%s0 + $0x1c0] sm:$0xff]
    %v253 = vld [vmem:[%s0 + $0x1c8] sm:$0xff]
    %v254 = vld [vmem:[%s0 + $0x1d0] sm:$0xff]
    %v255 = vld [vmem:[%s0 + $0x1d8] sm:$0xff]
    %v256 = vld [vmem:[%s0 + $0x1e0] sm:$0xff]
    %v257 = vld [vmem:[%s0 + $0x1e8] sm:$0xff]
    %v258 = vld [vmem:[%s0 + $0x1f0] sm:$0xff]
    %v259 = vld [vmem:[%s0 + $0x1f8] sm:$0xff]
    %v260 = vld [vmem:[#allocation2] sm:$0xff]
    %v261 = vld [vmem:[#allocation2 + $0x8] sm:$0xff]
    %v262 = vld [vmem:[#allocation2 + $0x10] sm:$0xff]
    %v263 = vld [vmem:[#allocation2 + $0x18] sm:$0xff]
    %v264 = vld [vmem:[#allocation2 + $0x20] sm:$0xff]
    %v265 = vld [vmem:[#allocation2 + $0x28] sm:$0xff]
    %v266 = vld [vmem:[#allocation2 + $0x30] sm:$0xff]
    %v267 = vld [vmem:[#allocation2 + $0x38] sm:$0xff]
    %v268 = vld [vmem:[#allocation2 + $0x40] sm:$0xff]
    %v269 = vld [vmem:[#allocation2 + $0x48] sm:$0xff]
    %v270 = vld [vmem:[#allocation2 + $0x50] sm:$0xff]
    %v271 = vld [vmem:[#allocation2 + $0x58] sm:$0xff]
    %v272 = vld [vmem:[#allocation2 + $0x60] sm:$0xff]
    %v273 = vld [vmem:[#allocation2 + $0x68] sm:$0xff]
    %v274 = vld [vmem:[#allocation2 + $0x70] sm:$0xff]
    %v275 = vld [vmem:[#allocation2 + $0x78] sm:$0xff]
    %v276 = vld [vmem:[#allocation2 + $0x80] sm:$0xff]
    %v277 = vld [vmem:[#allocation2 + $0x88] sm:$0xff]
    %v278 = vld [vmem:[#allocation2 + $0x90] sm:$0xff]
    %v279 = vld [vmem:[#allocation2 + $0x98] sm:$0xff]
    %v280 = vld [vmem:[#allocation2 + $0xa0] sm:$0xff]
    %v281 = vld [vmem:[#allocation2 + $0xa8] sm:$0xff]
    %v282 = vld [vmem:[#allocation2 + $0xb0] sm:$0xff]
    %v283 = vld [vmem:[#allocation2 + $0xb8] sm:$0xff]
    %v284 = vld [vmem:[#allocation2 + $0xc0] sm:$0xff]
    %v285 = vld [vmem:[#allocation2 + $0xc8] sm:$0xff]
    %v286 = vld [vmem:[#allocation2 + $0xd0] sm:$0xff]
    %v287 = vld [vmem:[#allocation2 + $0xd8] sm:$0xff]
    %v288 = vld [vmem:[#allocation2 + $0xe0] sm:$0xff]
    %v289 = vld [vmem:[#allocation2 + $0xe8] sm:$0xff]
    %v290 = vld [vmem:[#allocation2 + $0xf0] sm:$0xff]
    %v291 = vld [vmem:[#allocation2 + $0xf8] sm:$0xff]
    %v292 = vld [vmem:[#allocation2 + $0x100] sm:$0xff]
    %v293 = vld [vmem:[#allocation2 + $0x108] sm:$0xff]
    %v294 = vld [vmem:[#allocation2 + $0x110] sm:$0xff]
    %v295 = vld [vmem:[#allocation2 + $0x118] sm:$0xff]
    %v296 = vld [vmem:[#allocation2 + $0x120] sm:$0xff]
    %v297 = vld [vmem:[#allocation2 + $0x128] sm:$0xff]
    %v298 = vld [vmem:[#allocation2 + $0x130] sm:$0xff]
    %v299 = vld [vmem:[#allocation2 + $0x138] sm:$0xff]
    %v300 = vld [vmem:[#allocation2 + $0x140] sm:$0xff]
    %v301 = vld [vmem:[#allocation2 + $0x148] sm:$0xff]
    %v302 = vld [vmem:[#allocation2 + $0x150] sm:$0xff]
    %v303 = vld [vmem:[#allocation2 + $0x158] sm:$0xff]
    %v304 = vld [vmem:[#allocation2 + $0x160] sm:$0xff]
    %v305 = vld [vmem:[#allocation2 + $0x168] sm:$0xff]
    %v306 = vld [vmem:[#allocation2 + $0x170] sm:$0xff]
    %v307 = vld [vmem:[#allocation2 + $0x178] sm:$0xff]
    %v308 = vld [vmem:[#allocation2 + $0x180] sm:$0xff]
    %v309 = vld [vmem:[#allocation2 + $0x188] sm:$0xff]
    %v310 = vld [vmem:[#allocation2 + $0x190] sm:$0xff]
    %v311 = vld [vmem:[#allocation2 + $0x198] sm:$0xff]
    %v312 = vld [vmem:[#allocation2 + $0x1a0] sm:$0xff]
    %v313 = vld [vmem:[#allocation2 + $0x1a8] sm:$0xff]
    %v314 = vld [vmem:[#allocation2 + $0x1b0] sm:$0xff]
    %v315 = vld [vmem:[#allocation2 + $0x1b8] sm:$0xff]
    %v316 = vld [vmem:[#allocation2 + $0x1c0] sm:$0xff]
    %v317 = vld [vmem:[#allocation2 + $0x1c8] sm:$0xff]
    %v318 = vld [vmem:[#allocation2 + $0x1d0] sm:$0xff]
    %v319 = vld [vmem:[#allocation2 + $0x1d8] sm:$0xff]
    %v320 = vld [vmem:[#allocation2 + $0x1e0] sm:$0xff]
    %v321 = vld [vmem:[#allocation2 + $0x1e8] sm:$0xff]
    %v322 = vld [vmem:[#allocation2 + $0x1f0] sm:$0xff]
    %v323 = vld [vmem:[#allocation2 + $0x1f8] sm:$0xff]
    %v324 = vld [vmem:[#allocation2 + $0x200] sm:$0xff]
    %v325 = vld [vmem:[#allocation2 + $0x208] sm:$0xff]
    %v326 = vld [vmem:[#allocation2 + $0x210] sm:$0xff]
    %v327 = vld [vmem:[#allocation2 + $0x218] sm:$0xff]
    %v328 = vld [vmem:[#allocation2 + $0x220] sm:$0xff]
    %v329 = vld [vmem:[#allocation2 + $0x228] sm:$0xff]
    %v330 = vld [vmem:[#allocation2 + $0x230] sm:$0xff]
    %v331 = vld [vmem:[#allocation2 + $0x238] sm:$0xff]
    %v332 = vld [vmem:[#allocation2 + $0x240] sm:$0xff]
    %v333 = vld [vmem:[#allocation2 + $0x248] sm:$0xff]
    %v334 = vld [vmem:[#allocation2 + $0x250] sm:$0xff]
    %v335 = vld [vmem:[#allocation2 + $0x258] sm:$0xff]
    %v336 = vld [vmem:[#allocation2 + $0x260] sm:$0xff]
    %v337 = vld [vmem:[#allocation2 + $0x268] sm:$0xff]
    %v338 = vld [vmem:[#allocation2 + $0x270] sm:$0xff]
    %v339 = vld [vmem:[#allocation2 + $0x278] sm:$0xff]
    %v340 = vld [vmem:[#allocation2 + $0x280] sm:$0xff]
    %v341 = vld [vmem:[#allocation2 + $0x288] sm:$0xff]
    %v342 = vld [vmem:[#allocation2 + $0x290] sm:$0xff]
    %v343 = vld [vmem:[#allocation2 + $0x298] sm:$0xff]
    %v344 = vld [vmem:[#allocation2 + $0x2a0] sm:$0xff]
    %v345 = vld [vmem:[#allocation2 + $0x2a8] sm:$0xff]
    %v346 = vld [vmem:[#allocation2 + $0x2b0] sm:$0xff]
    %v347 = vld [vmem:[#allocation2 + $0x2b8] sm:$0xff]
    %v348 = vld [vmem:[#allocation2 + $0x2c0] sm:$0xff]
    %v349 = vld [vmem:[#allocation2 + $0x2c8] sm:$0xff]
    %v350 = vld [vmem:[#allocation2 + $0x2d0] sm:$0xff]
    %v351 = vld [vmem:[#allocation2 + $0x2d8] sm:$0xff]
    %v352 = vld [vmem:[#allocation2 + $0x2e0] sm:$0xff]
    %v353 = vld [vmem:[#allocation2 + $0x2e8] sm:$0xff]
    %v354 = vld [vmem:[#allocation2 + $0x2f0] sm:$0xff]
    %v355 = vld [vmem:[#allocation2 + $0x2f8] sm:$0xff]
    %v356 = vld [vmem:[#allocation2 + $0x300] sm:$0xff]
    %v357 = vld [vmem:[#allocation2 + $0x308] sm:$0xff]
    %v358 = vld [vmem:[#allocation2 + $0x310] sm:$0xff]
    %v359 = vld [vmem:[#allocation2 + $0x318] sm:$0xff]
    %v360 = vld [vmem:[#allocation2 + $0x320] sm:$0xff]
    %v361 = vld [vmem:[#allocation2 + $0x328] sm:$0xff]
    %v362 = vld [vmem:[#allocation2 + $0x330] sm:$0xff]
    %v363 = vld [vmem:[#allocation2 + $0x338] sm:$0xff]
    %v364 = vld [vmem:[#allocation2 + $0x340] sm:$0xff]
    %v365 = vld [vmem:[#allocation2 + $0x348] sm:$0xff]
    %v366 = vld [vmem:[#allocation2 + $0x350] sm:$0xff]
    %v367 = vld [vmem:[#allocation2 + $0x358] sm:$0xff]
    %v368 = vld [vmem:[#allocation2 + $0x360] sm:$0xff]
    %v369 = vld [vmem:[#allocation2 + $0x368] sm:$0xff]
    %v370 = vld [vmem:[#allocation2 + $0x370] sm:$0xff]
    %v371 = vld [vmem:[#allocation2 + $0x378] sm:$0xff]
    %v372 = vld [vmem:[#allocation2 + $0x380] sm:$0xff]
    %v373 = vld [vmem:[#allocation2 + $0x388] sm:$0xff]
    %v374 = vld [vmem:[#allocation2 + $0x390] sm:$0xff]
    %v375 = vld [vmem:[#allocation2 + $0x398] sm:$0xff]
    %v376 = vld [vmem:[#allocation2 + $0x3a0] sm:$0xff]
    %v377 = vld [vmem:[#allocation2 + $0x3a8] sm:$0xff]
    %v378 = vld [vmem:[#allocation2 + $0x3b0] sm:$0xff]
    %v379 = vld [vmem:[#allocation2 + $0x3b8] sm:$0xff]
    %v380 = vld [vmem:[#allocation2 + $0x3c0] sm:$0xff]
    %v381 = vld [vmem:[#allocation2 + $0x3c8] sm:$0xff]
    %v382 = vld [vmem:[#allocation2 + $0x3d0] sm:$0xff]
    %v383 = vld [vmem:[#allocation2 + $0x3d8] sm:$0xff]
    %v384 = vld [vmem:[#allocation2 + $0x3e0] sm:$0xff]
    %v385 = vld [vmem:[#allocation2 + $0x3e8] sm:$0xff]
    %v386 = vld [vmem:[#allocation2 + $0x3f0] sm:$0xff]
    %v387 = vld [vmem:[#allocation2 + $0x3f8] sm:$0xff]
    %v388 = vld [vmem:[#allocation2 + $0x400] sm:$0xff]
    %v389 = vld [vmem:[#allocation2 + $0x408] sm:$0xff]
    %v390 = vld [vmem:[#allocation2 + $0x410] sm:$0xff]
    %v391 = vld [vmem:[#allocation2 + $0x418] sm:$0xff]
    %v392 = vld [vmem:[#allocation2 + $0x420] sm:$0xff]
    %v393 = vld [vmem:[#allocation2 + $0x428] sm:$0xff]
    %v394 = vld [vmem:[#allocation2 + $0x430] sm:$0xff]
    %v395 = vld [vmem:[#allocation2 + $0x438] sm:$0xff]
    %v396 = vld [vmem:[#allocation2 + $0x440] sm:$0xff]
    %v397 = vld [vmem:[#allocation2 + $0x448] sm:$0xff]
    %v398 = vld [vmem:[#allocation2 + $0x450] sm:$0xff]
    %v399 = vld [vmem:[#allocation2 + $0x458] sm:$0xff]
    %v400 = vld [vmem:[#allocation2 + $0x460] sm:$0xff]
    %v401 = vld [vmem:[#allocation2 + $0x468] sm:$0xff]
    %v402 = vld [vmem:[#allocation2 + $0x470] sm:$0xff]
    %v403 = vld [vmem:[#allocation2 + $0x478] sm:$0xff]
    %v404 = vld [vmem:[#allocation2 + $0x480] sm:$0xff]
    %v405 = vld [vmem:[#allocation2 + $0x488] sm:$0xff]
    %v406 = vld [vmem:[#allocation2 + $0x490] sm:$0xff]
    %v407 = vld [vmem:[#allocation2 + $0x498] sm:$0xff]
    %v408 = vld [vmem:[#allocation2 + $0x4a0] sm:$0xff]
    %v409 = vld [vmem:[#allocation2 + $0x4a8] sm:$0xff]
    %v410 = vld [vmem:[#allocation2 + $0x4b0] sm:$0xff]
    %v411 = vld [vmem:[#allocation2 + $0x4b8] sm:$0xff]
    %v412 = vld [vmem:[#allocation2 + $0x4c0] sm:$0xff]
    %v413 = vld [vmem:[#allocation2 + $0x4c8] sm:$0xff]
    %v414 = vld [vmem:[#allocation2 + $0x4d0] sm:$0xff]
    %v415 = vld [vmem:[#allocation2 + $0x4d8] sm:$0xff]
    %v416 = vld [vmem:[#allocation2 + $0x4e0] sm:$0xff]
    %v417 = vld [vmem:[#allocation2 + $0x4e8] sm:$0xff]
    %v418 = vld [vmem:[#allocation2 + $0x4f0] sm:$0xff]
    %v419 = vld [vmem:[#allocation2 + $0x4f8] sm:$0xff]
    %v420 = vld [vmem:[#allocation2 + $0x500] sm:$0xff]
    %v421 = vld [vmem:[#allocation2 + $0x508] sm:$0xff]
    %v422 = vld [vmem:[#allocation2 + $0x510] sm:$0xff]
    %v423 = vld [vmem:[#allocation2 + $0x518] sm:$0xff]
    %v424 = vld [vmem:[#allocation2 + $0x520] sm:$0xff]
    %v425 = vld [vmem:[#allocation2 + $0x528] sm:$0xff]
    %v426 = vld [vmem:[#allocation2 + $0x530] sm:$0xff]
    %v427 = vld [vmem:[#allocation2 + $0x538] sm:$0xff]
    %v428 = vld [vmem:[#allocation2 + $0x540] sm:$0xff]
    %v429 = vld [vmem:[#allocation2 + $0x548] sm:$0xff]
    %v430 = vld [vmem:[#allocation2 + $0x550] sm:$0xff]
    %v431 = vld [vmem:[#allocation2 + $0x558] sm:$0xff]
    %v432 = vld [vmem:[#allocation2 + $0x560] sm:$0xff]
    %v433 = vld [vmem:[#allocation2 + $0x568] sm:$0xff]
    %v434 = vld [vmem:[#allocation2 + $0x570] sm:$0xff]
    %v435 = vld [vmem:[#allocation2 + $0x578] sm:$0xff]
    %v436 = vld [vmem:[#allocation2 + $0x580] sm:$0xff]
    %v437 = vld [vmem:[#allocation2 + $0x588] sm:$0xff]
    %v438 = vld [vmem:[#allocation2 + $0x590] sm:$0xff]
    %v439 = vld [vmem:[#allocation2 + $0x598] sm:$0xff]
    %v440 = vld [vmem:[#allocation2 + $0x5a0] sm:$0xff]
    %v441 = vld [vmem:[#allocation2 + $0x5a8] sm:$0xff]
    %v442 = vld [vmem:[#allocation2 + $0x5b0] sm:$0xff]
    %v443 = vld [vmem:[#allocation2 + $0x5b8] sm:$0xff]
    %v444 = vld [vmem:[#allocation2 + $0x5c0] sm:$0xff]
    %v445 = vld [vmem:[#allocation2 + $0x5c8] sm:$0xff]
    %v446 = vld [vmem:[#allocation2 + $0x5d0] sm:$0xff]
    %v447 = vld [vmem:[#allocation2 + $0x5d8] sm:$0xff]
    %v448 = vld [vmem:[#allocation2 + $0x5e0] sm:$0xff]
    %v449 = vld [vmem:[#allocation2 + $0x5e8] sm:$0xff]
    %v450 = vld [vmem:[#allocation2 + $0x5f0] sm:$0xff]
    %v451 = vld [vmem:[#allocation2 + $0x5f8] sm:$0xff]
    %v452 = vld [vmem:[#allocation2 + $0x600] sm:$0xff]
    %v453 = vld [vmem:[#allocation2 + $0x608] sm:$0xff]
    %v454 = vld [vmem:[#allocation2 + $0x610] sm:$0xff]
    %v455 = vld [vmem:[#allocation2 + $0x618] sm:$0xff]
    %v456 = vld [vmem:[#allocation2 + $0x620] sm:$0xff]
    %v457 = vld [vmem:[#allocation2 + $0x628] sm:$0xff]
    %v458 = vld [vmem:[#allocation2 + $0x630] sm:$0xff]
    %v459 = vld [vmem:[#allocation2 + $0x638] sm:$0xff]
    %v460 = vld [vmem:[#allocation2 + $0x640] sm:$0xff]
    %v461 = vld [vmem:[#allocation2 + $0x648] sm:$0xff]
    %v462 = vld [vmem:[#allocation2 + $0x650] sm:$0xff]
    %v463 = vld [vmem:[#allocation2 + $0x658] sm:$0xff]
    %v464 = vld [vmem:[#allocation2 + $0x660] sm:$0xff]
    %v465 = vld [vmem:[#allocation2 + $0x668] sm:$0xff]
    %v466 = vld [vmem:[#allocation2 + $0x670] sm:$0xff]
    %v467 = vld [vmem:[#allocation2 + $0x678] sm:$0xff]
    %v468 = vld [vmem:[#allocation2 + $0x680] sm:$0xff]
    %v469 = vld [vmem:[#allocation2 + $0x688] sm:$0xff]
    %v470 = vld [vmem:[#allocation2 + $0x690] sm:$0xff]
    %v471 = vld [vmem:[#allocation2 + $0x698] sm:$0xff]
    %v472 = vld [vmem:[#allocation2 + $0x6a0] sm:$0xff]
    %v473 = vld [vmem:[#allocation2 + $0x6a8] sm:$0xff]
    %v474 = vld [vmem:[#allocation2 + $0x6b0] sm:$0xff]
    %v475 = vld [vmem:[#allocation2 + $0x6b8] sm:$0xff]
    %v476 = vld [vmem:[#allocation2 + $0x6c0] sm:$0xff]
    %v477 = vld [vmem:[#allocation2 + $0x6c8] sm:$0xff]
    %v478 = vld [vmem:[#allocation2 + $0x6d0] sm:$0xff]
    %v479 = vld [vmem:[#allocation2 + $0x6d8] sm:$0xff]
    %v480 = vld [vmem:[#allocation2 + $0x6e0] sm:$0xff]
    %v481 = vld [vmem:[#allocation2 + $0x6e8] sm:$0xff]
    %v482 = vld [vmem:[#allocation2 + $0x6f0] sm:$0xff]
    %v483 = vld [vmem:[#allocation2 + $0x6f8] sm:$0xff]
    %v484 = vld [vmem:[#allocation2 + $0x700] sm:$0xff]
    %v485 = vld [vmem:[#allocation2 + $0x708] sm:$0xff]
    %v486 = vld [vmem:[#allocation2 + $0x710] sm:$0xff]
    %v487 = vld [vmem:[#allocation2 + $0x718] sm:$0xff]
    %v488 = vld [vmem:[#allocation2 + $0x720] sm:$0xff]
    %v489 = vld [vmem:[#allocation2 + $0x728] sm:$0xff]
    %v490 = vld [vmem:[#allocation2 + $0x730] sm:$0xff]
    %v491 = vld [vmem:[#allocation2 + $0x738] sm:$0xff]
    %v492 = vld [vmem:[#allocation2 + $0x740] sm:$0xff]
    %v493 = vld [vmem:[#allocation2 + $0x748] sm:$0xff]
    %v494 = vld [vmem:[#allocation2 + $0x750] sm:$0xff]
    %v495 = vld [vmem:[#allocation2 + $0x758] sm:$0xff]
    %v496 = vld [vmem:[#allocation2 + $0x760] sm:$0xff]
    %v497 = vld [vmem:[#allocation2 + $0x768] sm:$0xff]
    %v498 = vld [vmem:[#allocation2 + $0x770] sm:$0xff]
    %v499 = vld [vmem:[#allocation2 + $0x778] sm:$0xff]
    %v500 = vld [vmem:[#allocation2 + $0x780] sm:$0xff]
    %v501 = vld [vmem:[#allocation2 + $0x788] sm:$0xff]
    %v502 = vld [vmem:[#allocation2 + $0x790] sm:$0xff]
    %v503 = vld [vmem:[#allocation2 + $0x798] sm:$0xff]
    %v504 = vld [vmem:[#allocation2 + $0x7a0] sm:$0xff]
    %v505 = vld [vmem:[#allocation2 + $0x7a8] sm:$0xff]
    %v506 = vld [vmem:[#allocation2 + $0x7b0] sm:$0xff]
    %v507 = vld [vmem:[#allocation2 + $0x7b8] sm:$0xff]
    %v508 = vld [vmem:[#allocation2 + $0x7c0] sm:$0xff]
    %v509 = vld [vmem:[#allocation2 + $0x7c8] sm:$0xff]
    %v510 = vld [vmem:[#allocation2 + $0x7d0] sm:$0xff]
    %v511 = vld [vmem:[#allocation2 + $0x7d8] sm:$0xff]
    %v512 = vld [vmem:[#allocation2 + $0x7e0] sm:$0xff]
    %v513 = vld [vmem:[#allocation2 + $0x7e8] sm:$0xff]
    %v514 = vld [vmem:[#allocation2 + $0x7f0] sm:$0xff]
    %v515 = vld [vmem:[#allocation2 + $0x7f8] sm:$0xff]
    %v516 = vld [vmem:[#allocation2 + $0x800] sm:$0xff]
    %v517 = vld [vmem:[#allocation2 + $0x808] sm:$0xff]
    %v518 = vld [vmem:[#allocation2 + $0x810] sm:$0xff]
    %v519 = vld [vmem:[#allocation2 + $0x818] sm:$0xff]
    %v520 = vld [vmem:[#allocation2 + $0x820] sm:$0xff]
    %v521 = vld [vmem:[#allocation2 + $0x828] sm:$0xff]
    %v522 = vld [vmem:[#allocation2 + $0x830] sm:$0xff]
    %v523 = vld [vmem:[#allocation2 + $0x838] sm:$0xff]
    %v524 = vld [vmem:[#allocation2 + $0x840] sm:$0xff]
    %v525 = vld [vmem:[#allocation2 + $0x848] sm:$0xff]
    %v526 = vld [vmem:[#allocation2 + $0x850] sm:$0xff]
    %v527 = vld [vmem:[#allocation2 + $0x858] sm:$0xff]
    %v528 = vld [vmem:[#allocation2 + $0x860] sm:$0xff]
    %v529 = vld [vmem:[#allocation2 + $0x868] sm:$0xff]
    %v530 = vld [vmem:[#allocation2 + $0x870] sm:$0xff]
    %v531 = vld [vmem:[#allocation2 + $0x878] sm:$0xff]
    %v532 = vld [vmem:[#allocation2 + $0x880] sm:$0xff]
    %v533 = vld [vmem:[#allocation2 + $0x888] sm:$0xff]
    %v534 = vld [vmem:[#allocation2 + $0x890] sm:$0xff]
    %v535 = vld [vmem:[#allocation2 + $0x898] sm:$0xff]
    %v536 = vld [vmem:[#allocation2 + $0x8a0] sm:$0xff]
    %v537 = vld [vmem:[#allocation2 + $0x8a8] sm:$0xff]
    %v538 = vld [vmem:[#allocation2 + $0x8b0] sm:$0xff]
    %v539 = vld [vmem:[#allocation2 + $0x8b8] sm:$0xff]
    %v540 = vld [vmem:[#allocation2 + $0x8c0] sm:$0xff]
    %v541 = vld [vmem:[#allocation2 + $0x8c8] sm:$0xff]
    %v542 = vld [vmem:[#allocation2 + $0x8d0] sm:$0xff]
    %v543 = vld [vmem:[#allocation2 + $0x8d8] sm:$0xff]
    %v544 = vld [vmem:[#allocation2 + $0x8e0] sm:$0xff]
    %v545 = vld [vmem:[#allocation2 + $0x8e8] sm:$0xff]
    %v546 = vld [vmem:[#allocation2 + $0x8f0] sm:$0xff]
    %v547 = vld [vmem:[#allocation2 + $0x8f8] sm:$0xff]
    %v548 = vld [vmem:[#allocation2 + $0x900] sm:$0xff]
    %v549 = vld [vmem:[#allocation2 + $0x908] sm:$0xff]
    %v550 = vld [vmem:[#allocation2 + $0x910] sm:$0xff]
    %v551 = vld [vmem:[#allocation2 + $0x918] sm:$0xff]
    %v552 = vld [vmem:[#allocation2 + $0x920] sm:$0xff]
    %v553 = vld [vmem:[#allocation2 + $0x928] sm:$0xff]
    %v554 = vld [vmem:[#allocation2 + $0x930] sm:$0xff]
    %v555 = vld [vmem:[#allocation2 + $0x938] sm:$0xff]
    %v556 = vld [vmem:[#allocation2 + $0x940] sm:$0xff]
    %v557 = vld [vmem:[#allocation2 + $0x948] sm:$0xff]
    %v558 = vld [vmem:[#allocation2 + $0x950] sm:$0xff]
    %v559 = vld [vmem:[#allocation2 + $0x958] sm:$0xff]
    %v560 = vld [vmem:[#allocation2 + $0x960] sm:$0xff]
    %v561 = vld [vmem:[#allocation2 + $0x968] sm:$0xff]
    %v562 = vld [vmem:[#allocation2 + $0x970] sm:$0xff]
    %v563 = vld [vmem:[#allocation2 + $0x978] sm:$0xff]
    %v564 = vld [vmem:[#allocation2 + $0x980] sm:$0xff]
    %v565 = vld [vmem:[#allocation2 + $0x988] sm:$0xff]
    %v566 = vld [vmem:[#allocation2 + $0x990] sm:$0xff]
    %v567 = vld [vmem:[#allocation2 + $0x998] sm:$0xff]
    %v568 = vld [vmem:[#allocation2 + $0x9a0] sm:$0xff]
    %v569 = vld [vmem:[#allocation2 + $0x9a8] sm:$0xff]
    %v570 = vld [vmem:[#allocation2 + $0x9b0] sm:$0xff]
    %v571 = vld [vmem:[#allocation2 + $0x9b8] sm:$0xff]
    %v572 = vld [vmem:[#allocation2 + $0x9c0] sm:$0xff]
    %v573 = vld [vmem:[#allocation2 + $0x9c8] sm:$0xff]
    %v574 = vld [vmem:[#allocation2 + $0x9d0] sm:$0xff]
    %v575 = vld [vmem:[#allocation2 + $0x9d8] sm:$0xff]
    %v576 = vld [vmem:[#allocation2 + $0x9e0] sm:$0xff]
    %v577 = vld [vmem:[#allocation2 + $0x9e8] sm:$0xff]
    %v578 = vld [vmem:[#allocation2 + $0x9f0] sm:$0xff]
    %v579 = vld [vmem:[#allocation2 + $0x9f8] sm:$0xff]
    %v580 = vld [vmem:[#allocation2 + $0xa00] sm:$0xff]
    %v581 = vld [vmem:[#allocation2 + $0xa08] sm:$0xff]
    %v582 = vld [vmem:[#allocation2 + $0xa10] sm:$0xff]
    %v583 = vld [vmem:[#allocation2 + $0xa18] sm:$0xff]
    %v584 = vld [vmem:[#allocation2 + $0xa20] sm:$0xff]
    %v585 = vld [vmem:[#allocation2 + $0xa28] sm:$0xff]
    %v586 = vld [vmem:[#allocation2 + $0xa30] sm:$0xff]
    %v587 = vld [vmem:[#allocation2 + $0xa38] sm:$0xff]
    %v588 = vld [vmem:[#allocation2 + $0xa40] sm:$0xff]
    %v589 = vld [vmem:[#allocation2 + $0xa48] sm:$0xff]
    %v590 = vld [vmem:[#allocation2 + $0xa50] sm:$0xff]
    %v591 = vld [vmem:[#allocation2 + $0xa58] sm:$0xff]
    %v592 = vld [vmem:[#allocation2 + $0xa60] sm:$0xff]
    %v593 = vld [vmem:[#allocation2 + $0xa68] sm:$0xff]
    %v594 = vld [vmem:[#allocation2 + $0xa70] sm:$0xff]
    %v595 = vld [vmem:[#allocation2 + $0xa78] sm:$0xff]
    %v596 = vld [vmem:[#allocation2 + $0xa80] sm:$0xff]
    %v597 = vld [vmem:[#allocation2 + $0xa88] sm:$0xff]
    %v598 = vld [vmem:[#allocation2 + $0xa90] sm:$0xff]
    %v599 = vld [vmem:[#allocation2 + $0xa98] sm:$0xff]
    %v600 = vld [vmem:[#allocation2 + $0xaa0] sm:$0xff]
    %v601 = vld [vmem:[#allocation2 + $0xaa8] sm:$0xff]
    %v602 = vld [vmem:[#allocation2 + $0xab0] sm:$0xff]
    %v603 = vld [vmem:[#allocation2 + $0xab8] sm:$0xff]
    %v604 = vld [vmem:[#allocation2 + $0xac0] sm:$0xff]
    %v605 = vld [vmem:[#allocation2 + $0xac8] sm:$0xff]
    %v606 = vld [vmem:[#allocation2 + $0xad0] sm:$0xff]
    %v607 = vld [vmem:[#allocation2 + $0xad8] sm:$0xff]
    %v608 = vld [vmem:[#allocation2 + $0xae0] sm:$0xff]
    %v609 = vld [vmem:[#allocation2 + $0xae8] sm:$0xff]
    %v610 = vld [vmem:[#allocation2 + $0xaf0] sm:$0xff]
    %v611 = vld [vmem:[#allocation2 + $0xaf8] sm:$0xff]
    %v612 = vld [vmem:[#allocation2 + $0xb00] sm:$0xff]
    %v613 = vld [vmem:[#allocation2 + $0xb08] sm:$0xff]
    %v614 = vld [vmem:[#allocation2 + $0xb10] sm:$0xff]
    %v615 = vld [vmem:[#allocation2 + $0xb18] sm:$0xff]
    %v616 = vld [vmem:[#allocation2 + $0xb20] sm:$0xff]
    %v617 = vld [vmem:[#allocation2 + $0xb28] sm:$0xff]
    %v618 = vld [vmem:[#allocation2 + $0xb30] sm:$0xff]
    %v619 = vld [vmem:[#allocation2 + $0xb38] sm:$0xff]
    %v620 = vld [vmem:[#allocation2 + $0xb40] sm:$0xff]
    %v621 = vld [vmem:[#allocation2 + $0xb48] sm:$0xff]
    %v622 = vld [vmem:[#allocation2 + $0xb50] sm:$0xff]
    %v623 = vld [vmem:[#allocation2 + $0xb58] sm:$0xff]
    %v624 = vld [vmem:[#allocation2 + $0xb60] sm:$0xff]
    %v625 = vld [vmem:[#allocation2 + $0xb68] sm:$0xff]
    %v626 = vld [vmem:[#allocation2 + $0xb70] sm:$0xff]
    %v627 = vld [vmem:[#allocation2 + $0xb78] sm:$0xff]
    %v628 = vld [vmem:[#allocation2 + $0xb80] sm:$0xff]
    %v629 = vld [vmem:[#allocation2 + $0xb88] sm:$0xff]
    %v630 = vld [vmem:[#allocation2 + $0xb90] sm:$0xff]
    %v631 = vld [vmem:[#allocation2 + $0xb98] sm:$0xff]
    %v632 = vld [vmem:[#allocation2 + $0xba0] sm:$0xff]
    %v633 = vld [vmem:[#allocation2 + $0xba8] sm:$0xff]
    %v634 = vld [vmem:[#allocation2 + $0xbb0] sm:$0xff]
    %v635 = vld [vmem:[#allocation2 + $0xbb8] sm:$0xff]
    %v636 = vld [vmem:[#allocation2 + $0xbc0] sm:$0xff]
    %v637 = vld [vmem:[#allocation2 + $0xbc8] sm:$0xff]
    %v638 = vld [vmem:[#allocation2 + $0xbd0] sm:$0xff]
    %v639 = vld [vmem:[#allocation2 + $0xbd8] sm:$0xff]
    %v640 = vld [vmem:[#allocation2 + $0xbe0] sm:$0xff]
    %v641 = vld [vmem:[#allocation2 + $0xbe8] sm:$0xff]
    %v642 = vld [vmem:[#allocation2 + $0xbf0] sm:$0xff]
    %v643 = vld [vmem:[#allocation2 + $0xbf8] sm:$0xff]
    %v644 = vld [vmem:[#allocation2 + $0xc00] sm:$0xff]
    %v645 = vld [vmem:[#allocation2 + $0xc08] sm:$0xff]
    %v646 = vld [vmem:[#allocation2 + $0xc10] sm:$0xff]
    %v647 = vld [vmem:[#allocation2 + $0xc18] sm:$0xff]
    %v648 = vld [vmem:[#allocation2 + $0xc20] sm:$0xff]
    %v649 = vld [vmem:[#allocation2 + $0xc28] sm:$0xff]
    %v650 = vld [vmem:[#allocation2 + $0xc30] sm:$0xff]
    %v651 = vld [vmem:[#allocation2 + $0xc38] sm:$0xff]
    %v652 = vld [vmem:[#allocation2 + $0xc40] sm:$0xff]
    %v653 = vld [vmem:[#allocation2 + $0xc48] sm:$0xff]
    %v654 = vld [vmem:[#allocation2 + $0xc50] sm:$0xff]
    %v655 = vld [vmem:[#allocation2 + $0xc58] sm:$0xff]
    %v656 = vld [vmem:[#allocation2 + $0xc60] sm:$0xff]
    %v657 = vld [vmem:[#allocation2 + $0xc68] sm:$0xff]
    %v658 = vld [vmem:[#allocation2 + $0xc70] sm:$0xff]
    %v659 = vld [vmem:[#allocation2 + $0xc78] sm:$0xff]
    %v660 = vld [vmem:[#allocation2 + $0xc80] sm:$0xff]
    %v661 = vld [vmem:[#allocation2 + $0xc88] sm:$0xff]
    %v662 = vld [vmem:[#allocation2 + $0xc90] sm:$0xff]
    %v663 = vld [vmem:[#allocation2 + $0xc98] sm:$0xff]
    %v664 = vld [vmem:[#allocation2 + $0xca0] sm:$0xff]
    %v665 = vld [vmem:[#allocation2 + $0xca8] sm:$0xff]
    %v666 = vld [vmem:[#allocation2 + $0xcb0] sm:$0xff]
    %v667 = vld [vmem:[#allocation2 + $0xcb8] sm:$0xff]
    %v668 = vld [vmem:[#allocation2 + $0xcc0] sm:$0xff]
    %v669 = vld [vmem:[#allocation2 + $0xcc8] sm:$0xff]
    %v670 = vld [vmem:[#allocation2 + $0xcd0] sm:$0xff]
    %v671 = vld [vmem:[#allocation2 + $0xcd8] sm:$0xff]
    %v672 = vld [vmem:[#allocation2 + $0xce0] sm:$0xff]
    %v673 = vld [vmem:[#allocation2 + $0xce8] sm:$0xff]
    %v674 = vld [vmem:[#allocation2 + $0xcf0] sm:$0xff]
    %v675 = vld [vmem:[#allocation2 + $0xcf8] sm:$0xff]
    %v676 = vld [vmem:[#allocation2 + $0xd00] sm:$0xff]
    %v677 = vld [vmem:[#allocation2 + $0xd08] sm:$0xff]
    %v678 = vld [vmem:[#allocation2 + $0xd10] sm:$0xff]
    %v679 = vld [vmem:[#allocation2 + $0xd18] sm:$0xff]
    %v680 = vld [vmem:[#allocation2 + $0xd20] sm:$0xff]
    %v681 = vld [vmem:[#allocation2 + $0xd28] sm:$0xff]
    %v682 = vld [vmem:[#allocation2 + $0xd30] sm:$0xff]
    %v683 = vld [vmem:[#allocation2 + $0xd38] sm:$0xff]
    %v684 = vld [vmem:[#allocation2 + $0xd40] sm:$0xff]
    %v685 = vld [vmem:[#allocation2 + $0xd48] sm:$0xff]
    %v686 = vld [vmem:[#allocation2 + $0xd50] sm:$0xff]
    %v687 = vld [vmem:[#allocation2 + $0xd58] sm:$0xff]
    %v688 = vld [vmem:[#allocation2 + $0xd60] sm:$0xff]
    %v689 = vld [vmem:[#allocation2 + $0xd68] sm:$0xff]
    %v690 = vld [vmem:[#allocation2 + $0xd70] sm:$0xff]
    %v691 = vld [vmem:[#allocation2 + $0xd78] sm:$0xff]
    %v692 = vld [vmem:[#allocation2 + $0xd80] sm:$0xff]
    %v693 = vld [vmem:[#allocation2 + $0xd88] sm:$0xff]
    %v694 = vld [vmem:[#allocation2 + $0xd90] sm:$0xff]
    %v695 = vld [vmem:[#allocation2 + $0xd98] sm:$0xff]
    %v696 = vld [vmem:[#allocation2 + $0xda0] sm:$0xff]
    %v697 = vld [vmem:[#allocation2 + $0xda8] sm:$0xff]
    %v698 = vld [vmem:[#allocation2 + $0xdb0] sm:$0xff]
    %v699 = vld [vmem:[#allocation2 + $0xdb8] sm:$0xff]
    %v700 = vld [vmem:[#allocation2 + $0xdc0] sm:$0xff]
    %v701 = vld [vmem:[#allocation2 + $0xdc8] sm:$0xff]
    %v702 = vld [vmem:[#allocation2 + $0xdd0] sm:$0xff]
    %v703 = vld [vmem:[#allocation2 + $0xdd8] sm:$0xff]
    %v704 = vld [vmem:[#allocation2 + $0xde0] sm:$0xff]
    %v705 = vld [vmem:[#allocation2 + $0xde8] sm:$0xff]
    %v706 = vld [vmem:[#allocation2 + $0xdf0] sm:$0xff]
    %v707 = vld [vmem:[#allocation2 + $0xdf8] sm:$0xff]
    %v708 = vld [vmem:[#allocation2 + $0xe00] sm:$0xff]
    %v709 = vld [vmem:[#allocation2 + $0xe08] sm:$0xff]
    %v710 = vld [vmem:[#allocation2 + $0xe10] sm:$0xff]
    %v711 = vld [vmem:[#allocation2 + $0xe18] sm:$0xff]
    %v712 = vld [vmem:[#allocation2 + $0xe20] sm:$0xff]
    %v713 = vld [vmem:[#allocation2 + $0xe28] sm:$0xff]
    %v714 = vld [vmem:[#allocation2 + $0xe30] sm:$0xff]
    %v715 = vld [vmem:[#allocation2 + $0xe38] sm:$0xff]
    %v716 = vld [vmem:[#allocation2 + $0xe40] sm:$0xff]
    %v717 = vld [vmem:[#allocation2 + $0xe48] sm:$0xff]
    %v718 = vld [vmem:[#allocation2 + $0xe50] sm:$0xff]
    %v719 = vld [vmem:[#allocation2 + $0xe58] sm:$0xff]
    %v720 = vld [vmem:[#allocation2 + $0xe60] sm:$0xff]
    %v721 = vld [vmem:[#allocation2 + $0xe68] sm:$0xff]
    %v722 = vld [vmem:[#allocation2 + $0xe70] sm:$0xff]
    %v723 = vld [vmem:[#allocation2 + $0xe78] sm:$0xff]
    %v724 = vld [vmem:[#allocation2 + $0xe80] sm:$0xff]
    %v725 = vld [vmem:[#allocation2 + $0xe88] sm:$0xff]
    %v726 = vld [vmem:[#allocation2 + $0xe90] sm:$0xff]
    %v727 = vld [vmem:[#allocation2 + $0xe98] sm:$0xff]
    %v728 = vld [vmem:[#allocation2 + $0xea0] sm:$0xff]
    %v729 = vld [vmem:[#allocation2 + $0xea8] sm:$0xff]
    %v730 = vld [vmem:[#allocation2 + $0xeb0] sm:$0xff]
    %v731 = vld [vmem:[#allocation2 + $0xeb8] sm:$0xff]
    %v732 = vld [vmem:[#allocation2 + $0xec0] sm:$0xff]
    %v733 = vld [vmem:[#allocation2 + $0xec8] sm:$0xff]
    %v734 = vld [vmem:[#allocation2 + $0xed0] sm:$0xff]
    %v735 = vld [vmem:[#allocation2 + $0xed8] sm:$0xff]
    %v736 = vld [vmem:[#allocation2 + $0xee0] sm:$0xff]
    %v737 = vld [vmem:[#allocation2 + $0xee8] sm:$0xff]
    %v738 = vld [vmem:[#allocation2 + $0xef0] sm:$0xff]
    %v739 = vld [vmem:[#allocation2 + $0xef8] sm:$0xff]
    %v740 = vld [vmem:[#allocation2 + $0xf00] sm:$0xff]
    %v741 = vld [vmem:[#allocation2 + $0xf08] sm:$0xff]
    %v742 = vld [vmem:[#allocation2 + $0xf10] sm:$0xff]
    %v743 = vld [vmem:[#allocation2 + $0xf18] sm:$0xff]
    %v744 = vld [vmem:[#allocation2 + $0xf20] sm:$0xff]
    %v745 = vld [vmem:[#allocation2 + $0xf28] sm:$0xff]
    %v746 = vld [vmem:[#allocation2 + $0xf30] sm:$0xff]
    %v747 = vld [vmem:[#allocation2 + $0xf38] sm:$0xff]
    %v748 = vld [vmem:[#allocation2 + $0xf40] sm:$0xff]
    %v749 = vld [vmem:[#allocation2 + $0xf48] sm:$0xff]
    %v750 = vld [vmem:[#allocation2 + $0xf50] sm:$0xff]
    %v751 = vld [vmem:[#allocation2 + $0xf58] sm:$0xff]
    %v752 = vld [vmem:[#allocation2 + $0xf60] sm:$0xff]
    %v753 = vld [vmem:[#allocation2 + $0xf68] sm:$0xff]
    %v754 = vld [vmem:[#allocation2 + $0xf70] sm:$0xff]
    %v755 = vld [vmem:[#allocation2 + $0xf78] sm:$0xff]
    %v756 = vld [vmem:[#allocation2 + $0xf80] sm:$0xff]
    %v757 = vld [vmem:[#allocation2 + $0xf88] sm:$0xff]
    %v758 = vld [vmem:[#allocation2 + $0xf90] sm:$0xff]
    %v759 = vld [vmem:[#allocation2 + $0xf98] sm:$0xff]
    %v760 = vld [vmem:[#allocation2 + $0xfa0] sm:$0xff]
    %v761 = vld [vmem:[#allocation2 + $0xfa8] sm:$0xff]
    %v762 = vld [vmem:[#allocation2 + $0xfb0] sm:$0xff]
    %v763 = vld [vmem:[#allocation2 + $0xfb8] sm:$0xff]
    %v764 = vld [vmem:[#allocation2 + $0xfc0] sm:$0xff]
    %v765 = vld [vmem:[#allocation2 + $0xfc8] sm:$0xff]
    %v766 = vld [vmem:[#allocation2 + $0xfd0] sm:$0xff]
    %v767 = vld [vmem:[#allocation2 + $0xfd8] sm:$0xff]
    %v768 = vld [vmem:[#allocation2 + $0xfe0] sm:$0xff]
    %v769 = vld [vmem:[#allocation2 + $0xfe8] sm:$0xff]
    %v770 = vld [vmem:[#allocation2 + $0xff0] sm:$0xff]
    %v771 = vld [vmem:[#allocation2 + $0xff8] sm:$0xff]
    %v772 = vld [vmem:[#allocation2 + $0x1000] sm:$0xff]
    %v773 = vld [vmem:[#allocation2 + $0x1008] sm:$0xff]
    %v774 = vld [vmem:[#allocation2 + $0x1010] sm:$0xff]
    %v775 = vld [vmem:[#allocation2 + $0x1018] sm:$0xff]
    %v776 = vld [vmem:[#allocation2 + $0x1020] sm:$0xff]
    %v777 = vld [vmem:[#allocation2 + $0x1028] sm:$0xff]
    %v778 = vld [vmem:[#allocation2 + $0x1030] sm:$0xff]
    %v779 = vld [vmem:[#allocation2 + $0x1038] sm:$0xff]
    %v780 = vld [vmem:[#allocation2 + $0x1040] sm:$0xff]
    %v781 = vld [vmem:[#allocation2 + $0x1048] sm:$0xff]
    %v782 = vld [vmem:[#allocation2 + $0x1050] sm:$0xff]
    %v783 = vld [vmem:[#allocation2 + $0x1058] sm:$0xff]
    %v784 = vld [vmem:[#allocation2 + $0x1060] sm:$0xff]
    %v785 = vld [vmem:[#allocation2 + $0x1068] sm:$0xff]
    %v786 = vld [vmem:[#allocation2 + $0x1070] sm:$0xff]
    %v787 = vld [vmem:[#allocation2 + $0x1078] sm:$0xff]
    %v788 = vld [vmem:[#allocation2 + $0x1080] sm:$0xff]
    %v789 = vld [vmem:[#allocation2 + $0x1088] sm:$0xff]
    %v790 = vld [vmem:[#allocation2 + $0x1090] sm:$0xff]
    %v791 = vld [vmem:[#allocation2 + $0x1098] sm:$0xff]
    %v792 = vld [vmem:[#allocation2 + $0x10a0] sm:$0xff]
    %v793 = vld [vmem:[#allocation2 + $0x10a8] sm:$0xff]
    %v794 = vld [vmem:[#allocation2 + $0x10b0] sm:$0xff]
    %v795 = vld [vmem:[#allocation2 + $0x10b8] sm:$0xff]
    %v796 = vld [vmem:[#allocation2 + $0x10c0] sm:$0xff]
    %v797 = vld [vmem:[#allocation2 + $0x10c8] sm:$0xff]
    %v798 = vld [vmem:[#allocation2 + $0x10d0] sm:$0xff]
    %v799 = vld [vmem:[#allocation2 + $0x10d8] sm:$0xff]
    %v800 = vld [vmem:[#allocation2 + $0x10e0] sm:$0xff]
    %v801 = vld [vmem:[#allocation2 + $0x10e8] sm:$0xff]
    %v802 = vld [vmem:[#allocation2 + $0x10f0] sm:$0xff]
    %v803 = vld [vmem:[#allocation2 + $0x10f8] sm:$0xff]
    %v804 = vld [vmem:[#allocation2 + $0x1100] sm:$0xff]
    %v805 = vld [vmem:[#allocation2 + $0x1108] sm:$0xff]
    %v806 = vld [vmem:[#allocation2 + $0x1110] sm:$0xff]
    %v807 = vld [vmem:[#allocation2 + $0x1118] sm:$0xff]
    %v808 = vld [vmem:[#allocation2 + $0x1120] sm:$0xff]
    %v809 = vld [vmem:[#allocation2 + $0x1128] sm:$0xff]
    %v810 = vld [vmem:[#allocation2 + $0x1130] sm:$0xff]
    %v811 = vld [vmem:[#allocation2 + $0x1138] sm:$0xff]
    %v812 = vld [vmem:[#allocation2 + $0x1140] sm:$0xff]
    %v813 = vld [vmem:[#allocation2 + $0x1148] sm:$0xff]
    %v814 = vld [vmem:[#allocation2 + $0x1150] sm:$0xff]
    %v815 = vld [vmem:[#allocation2 + $0x1158] sm:$0xff]
    %v816 = vld [vmem:[#allocation2 + $0x1160] sm:$0xff]
    %v817 = vld [vmem:[#allocation2 + $0x1168] sm:$0xff]
    %v818 = vld [vmem:[#allocation2 + $0x1170] sm:$0xff]
    %v819 = vld [vmem:[#allocation2 + $0x1178] sm:$0xff]
    %v820 = vld [vmem:[#allocation2 + $0x1180] sm:$0xff]
    %v821 = vld [vmem:[#allocation2 + $0x1188] sm:$0xff]
    %v822 = vld [vmem:[#allocation2 + $0x1190] sm:$0xff]
    %v823 = vld [vmem:[#allocation2 + $0x1198] sm:$0xff]
    %v824 = vld [vmem:[#allocation2 + $0x11a0] sm:$0xff]
    %v825 = vld [vmem:[#allocation2 + $0x11a8] sm:$0xff]
    %v826 = vld [vmem:[#allocation2 + $0x11b0] sm:$0xff]
    %v827 = vld [vmem:[#allocation2 + $0x11b8] sm:$0xff]
    %v828 = vld [vmem:[#allocation2 + $0x11c0] sm:$0xff]
    %v829 = vld [vmem:[#allocation2 + $0x11c8] sm:$0xff]
    %v830 = vld [vmem:[#allocation2 + $0x11d0] sm:$0xff]
    %v831 = vld [vmem:[#allocation2 + $0x11d8] sm:$0xff]
    %v832 = vld [vmem:[#allocation2 + $0x11e0] sm:$0xff]
    %v833 = vld [vmem:[#allocation2 + $0x11e8] sm:$0xff]
    %v834 = vld [vmem:[#allocation2 + $0x11f0] sm:$0xff]
    %v835 = vld [vmem:[#allocation2 + $0x11f8] sm:$0xff]
    %836 = vmatpush.msra.mxu0 %v211
    %837 = vmatpush.msra.mxu0 %v210
    %838 = vmatpush.msra.mxu0 %v209
    %839 = vmatpush.msra.mxu0 %v208
    %840 = vmatpush.msra.mxu0 %v207
    %841 = vmatpush.msra.mxu0 %v206
    %842 = vmatpush.msra.mxu0 %v205
    %843 = vmatpush.msra.mxu0 %v204
    %844 = vmatpush.msra.mxu0 %v203
    %845 = vmatpush.msra.mxu0 %v202
    %846 = vmatpush.msra.mxu0 %v201
    %847 = vmatpush.msra.mxu0 %v200
    %848 = vmatpush.msra.mxu0 %v199
    %849 = vmatpush.msra.mxu0 %v198
    %850 = vmatpush.msra.mxu0 %v197
    %851 = vmatpush.msra.mxu0 %v196
    %852 = vmatmul.f32.gmra.mxu0 %v260
    %v853 = vpop.f32.mrf.mxu0
    %v854 = vadd.f32 0.0, %v853
    %855 = vmatmul.f32.gmra.mxu0 %v264
    %v856 = vpop.f32.mrf.mxu0
    %v857 = vadd.f32 0.0, %v856
    %858 = vmatmul.f32.gmra.mxu0 %v268
    %v859 = vpop.f32.mrf.mxu0
    %v860 = vadd.f32 0.0, %v859
    %861 = vmatmul.f32.gmra.mxu0 %v272
    %v862 = vpop.f32.mrf.mxu0
    %v863 = vadd.f32 0.0, %v862
    %864 = vmatmul.f32.gmra.mxu0 %v276
    %v865 = vpop.f32.mrf.mxu0
    %v866 = vadd.f32 0.0, %v865
    %867 = vmatmul.f32.gmra.mxu0 %v280
    %v868 = vpop.f32.mrf.mxu0
    %v869 = vadd.f32 0.0, %v868
    %870 = vmatmul.f32.gmra.mxu0 %v284
    %v871 = vpop.f32.mrf.mxu0
    %v872 = vadd.f32 0.0, %v871
    %873 = vmatmul.f32.gmra.mxu0 %v288
    %v874 = vpop.f32.mrf.mxu0
    %v875 = vadd.f32 0.0, %v874
    %876 = vmatmul.f32.gmra.mxu0 %v292
    %v877 = vpop.f32.mrf.mxu0
    %v878 = vadd.f32 0.0, %v877
    %879 = vmatmul.f32.gmra.mxu0 %v296
    %v880 = vpop.f32.mrf.mxu0
    %v881 = vadd.f32 0.0, %v880
    %882 = vmatmul.f32.gmra.mxu0 %v300
    %v883 = vpop.f32.mrf.mxu0
    %v884 = vadd.f32 0.0, %v883
    %885 = vmatmul.f32.gmra.mxu0 %v304
    %v886 = vpop.f32.mrf.mxu0
    %v887 = vadd.f32 0.0, %v886
    %888 = vmatmul.f32.gmra.mxu0 %v308
    %v889 = vpop.f32.mrf.mxu0
    %v890 = vadd.f32 0.0, %v889
    %891 = vmatmul.f32.gmra.mxu0 %v312
    %v892 = vpop.f32.mrf.mxu0
    %v893 = vadd.f32 0.0, %v892
    %894 = vmatmul.f32.gmra.mxu0 %v316
    %v895 = vpop.f32.mrf.mxu0
    %v896 = vadd.f32 0.0, %v895
    %897 = vmatmul.f32.gmra.mxu0 %v320
    %v898 = vpop.f32.mrf.mxu0
    %v899 = vadd.f32 0.0, %v898
    %900 = vmatmul.f32.gmra.mxu0 %v324
    %v901 = vpop.f32.mrf.mxu0
    %v902 = vadd.f32 0.0, %v901
    %903 = vmatmul.f32.gmra.mxu0 %v328
    %v904 = vpop.f32.mrf.mxu0
    %v905 = vadd.f32 0.0, %v904
    %906 = vmatmul.f32.gmra.mxu0 %v332
    %v907 = vpop.f32.mrf.mxu0
    %v908 = vadd.f32 0.0, %v907
    %909 = vmatmul.f32.gmra.mxu0 %v336
    %v910 = vpop.f32.mrf.mxu0
    %v911 = vadd.f32 0.0, %v910
    %912 = vmatmul.f32.gmra.mxu0 %v340
    %v913 = vpop.f32.mrf.mxu0
    %v914 = vadd.f32 0.0, %v913
    %915 = vmatmul.f32.gmra.mxu0 %v344
    %v916 = vpop.f32.mrf.mxu0
    %v917 = vadd.f32 0.0, %v916
    %918 = vmatmul.f32.gmra.mxu0 %v348
    %v919 = vpop.f32.mrf.mxu0
    %v920 = vadd.f32 0.0, %v919
    %921 = vmatmul.f32.gmra.mxu0 %v352
    %v922 = vpop.f32.mrf.mxu0
    %v923 = vadd.f32 0.0, %v922
    %924 = vmatmul.f32.gmra.mxu0 %v356
    %v925 = vpop.f32.mrf.mxu0
    %v926 = vadd.f32 0.0, %v925
    %927 = vmatmul.f32.gmra.mxu0 %v360
    %v928 = vpop.f32.mrf.mxu0
    %v929 = vadd.f32 0.0, %v928
    %930 = vmatmul.f32.gmra.mxu0 %v364
    %v931 = vpop.f32.mrf.mxu0
    %v932 = vadd.f32 0.0, %v931
    %933 = vmatmul.f32.gmra.mxu0 %v368
    %v934 = vpop.f32.mrf.mxu0
    %v935 = vadd.f32 0.0, %v934
    %936 = vmatmul.f32.gmra.mxu0 %v372
    %v937 = vpop.f32.mrf.mxu0
    %v938 = vadd.f32 0.0, %v937
    %939 = vmatmul.f32.gmra.mxu0 %v376
    %v940 = vpop.f32.mrf.mxu0
    %v941 = vadd.f32 0.0, %v940
    %942 = vmatmul.f32.gmra.mxu0 %v380
    %v943 = vpop.f32.mrf.mxu0
    %v944 = vadd.f32 0.0, %v943
    %945 = vmatmul.f32.gmra.mxu0 %v384
    %v946 = vpop.f32.mrf.mxu0
    %v947 = vadd.f32 0.0, %v946
    %948 = vmatmul.f32.gmra.mxu0 %v388
    %v949 = vpop.f32.mrf.mxu0
    %v950 = vadd.f32 0.0, %v949
    %951 = vmatmul.f32.gmra.mxu0 %v392
    %v952 = vpop.f32.mrf.mxu0
    %v953 = vadd.f32 0.0, %v952
    %954 = vmatmul.f32.gmra.mxu0 %v396
    %v955 = vpop.f32.mrf.mxu0
    %v956 = vadd.f32 0.0, %v955
    %957 = vmatmul.f32.gmra.mxu0 %v400
    %v958 = vpop.f32.mrf.mxu0
    %v959 = vadd.f32 0.0, %v958
    %960 = vmatmul.f32.gmra.mxu0 %v404
    %v961 = vpop.f32.mrf.mxu0
    %v962 = vadd.f32 0.0, %v961
    %963 = vmatmul.f32.gmra.mxu0 %v408
    %v964 = vpop.f32.mrf.mxu0
    %v965 = vadd.f32 0.0, %v964
    %966 = vmatmul.f32.gmra.mxu0 %v412
    %v967 = vpop.f32.mrf.mxu0
    %v968 = vadd.f32 0.0, %v967
    %969 = vmatmul.f32.gmra.mxu0 %v416
    %v970 = vpop.f32.mrf.mxu0
    %v971 = vadd.f32 0.0, %v970
    %972 = vmatmul.f32.gmra.mxu0 %v420
    %v973 = vpop.f32.mrf.mxu0
    %v974 = vadd.f32 0.0, %v973
    %975 = vmatmul.f32.gmra.mxu0 %v424
    %v976 = vpop.f32.mrf.mxu0
    %v977 = vadd.f32 0.0, %v976
    %978 = vmatmul.f32.gmra.mxu0 %v428
    %v979 = vpop.f32.mrf.mxu0
    %v980 = vadd.f32 0.0, %v979
    %981 = vmatmul.f32.gmra.mxu0 %v432
    %v982 = vpop.f32.mrf.mxu0
    %v983 = vadd.f32 0.0, %v982
    %984 = vmatmul.f32.gmra.mxu0 %v436
    %v985 = vpop.f32.mrf.mxu0
    %v986 = vadd.f32 0.0, %v985
    %987 = vmatmul.f32.gmra.mxu0 %v440
    %v988 = vpop.f32.mrf.mxu0
    %v989 = vadd.f32 0.0, %v988
    %990 = vmatmul.f32.gmra.mxu0 %v444
    %v991 = vpop.f32.mrf.mxu0
    %v992 = vadd.f32 0.0, %v991
    %993 = vmatmul.f32.gmra.mxu0 %v448
    %v994 = vpop.f32.mrf.mxu0
    %v995 = vadd.f32 0.0, %v994
    %996 = vmatmul.f32.gmra.mxu0 %v452
    %v997 = vpop.f32.mrf.mxu0
    %v998 = vadd.f32 0.0, %v997
    %999 = vmatmul.f32.gmra.mxu0 %v456
    %v1000 = vpop.f32.mrf.mxu0
    %v1001 = vadd.f32 0.0, %v1000
    %1002 = vmatmul.f32.gmra.mxu0 %v460
    %v1003 = vpop.f32.mrf.mxu0
    %v1004 = vadd.f32 0.0, %v1003
    %1005 = vmatmul.f32.gmra.mxu0 %v464
    %v1006 = vpop.f32.mrf.mxu0
    %v1007 = vadd.f32 0.0, %v1006
    %1008 = vmatmul.f32.gmra.mxu0 %v468
    %v1009 = vpop.f32.mrf.mxu0
    %v1010 = vadd.f32 0.0, %v1009
    %1011 = vmatmul.f32.gmra.mxu0 %v472
    %v1012 = vpop.f32.mrf.mxu0
    %v1013 = vadd.f32 0.0, %v1012
    %1014 = vmatmul.f32.gmra.mxu0 %v476
    %v1015 = vpop.f32.mrf.mxu0
    %v1016 = vadd.f32 0.0, %v1015
    %1017 = vmatmul.f32.gmra.mxu0 %v480
    %v1018 = vpop.f32.mrf.mxu0
    %v1019 = vadd.f32 0.0, %v1018
    %1020 = vmatmul.f32.gmra.mxu0 %v484
    %v1021 = vpop.f32.mrf.mxu0
    %v1022 = vadd.f32 0.0, %v1021
    %1023 = vmatmul.f32.gmra.mxu0 %v488
    %v1024 = vpop.f32.mrf.mxu0
    %v1025 = vadd.f32 0.0, %v1024
    %1026 = vmatmul.f32.gmra.mxu0 %v492
    %v1027 = vpop.f32.mrf.mxu0
    %v1028 = vadd.f32 0.0, %v1027
    %1029 = vmatmul.f32.gmra.mxu0 %v496
    %v1030 = vpop.f32.mrf.mxu0
    %v1031 = vadd.f32 0.0, %v1030
    %1032 = vmatmul.f32.gmra.mxu0 %v500
    %v1033 = vpop.f32.mrf.mxu0
    %v1034 = vadd.f32 0.0, %v1033
    %1035 = vmatmul.f32.gmra.mxu0 %v504
    %v1036 = vpop.f32.mrf.mxu0
    %v1037 = vadd.f32 0.0, %v1036
    %1038 = vmatmul.f32.gmra.mxu0 %v508
    %v1039 = vpop.f32.mrf.mxu0
    %v1040 = vadd.f32 0.0, %v1039
    %1041 = vmatmul.f32.gmra.mxu0 %v512
    %v1042 = vpop.f32.mrf.mxu0
    %v1043 = vadd.f32 0.0, %v1042
    %1044 = vmatmul.f32.gmra.mxu0 %v516
    %v1045 = vpop.f32.mrf.mxu0
    %v1046 = vadd.f32 0.0, %v1045
    %1047 = vmatmul.f32.gmra.mxu0 %v520
    %v1048 = vpop.f32.mrf.mxu0
    %v1049 = vadd.f32 0.0, %v1048
    %1050 = vmatmul.f32.gmra.mxu0 %v524
    %v1051 = vpop.f32.mrf.mxu0
    %v1052 = vadd.f32 0.0, %v1051
    %1053 = vmatmul.f32.gmra.mxu0 %v528
    %v1054 = vpop.f32.mrf.mxu0
    %v1055 = vadd.f32 0.0, %v1054
    %1056 = vmatmul.f32.gmra.mxu0 %v532
    %v1057 = vpop.f32.mrf.mxu0
    %v1058 = vadd.f32 0.0, %v1057
    %1059 = vmatmul.f32.gmra.mxu0 %v536
    %v1060 = vpop.f32.mrf.mxu0
    %v1061 = vadd.f32 0.0, %v1060
    %1062 = vmatmul.f32.gmra.mxu0 %v540
    %v1063 = vpop.f32.mrf.mxu0
    %v1064 = vadd.f32 0.0, %v1063
    %1065 = vmatmul.f32.gmra.mxu0 %v544
    %v1066 = vpop.f32.mrf.mxu0
    %v1067 = vadd.f32 0.0, %v1066
    %1068 = vmatmul.f32.gmra.mxu0 %v548
    %v1069 = vpop.f32.mrf.mxu0
    %v1070 = vadd.f32 0.0, %v1069
    %1071 = vmatmul.f32.gmra.mxu0 %v552
    %v1072 = vpop.f32.mrf.mxu0
    %v1073 = vadd.f32 0.0, %v1072
    %1074 = vmatmul.f32.gmra.mxu0 %v556
    %v1075 = vpop.f32.mrf.mxu0
    %v1076 = vadd.f32 0.0, %v1075
    %1077 = vmatmul.f32.gmra.mxu0 %v560
    %v1078 = vpop.f32.mrf.mxu0
    %v1079 = vadd.f32 0.0, %v1078
    %1080 = vmatmul.f32.gmra.mxu0 %v564
    %v1081 = vpop.f32.mrf.mxu0
    %v1082 = vadd.f32 0.0, %v1081
    %1083 = vmatmul.f32.gmra.mxu0 %v568
    %v1084 = vpop.f32.mrf.mxu0
    %v1085 = vadd.f32 0.0, %v1084
    %1086 = vmatmul.f32.gmra.mxu0 %v572
    %v1087 = vpop.f32.mrf.mxu0
    %v1088 = vadd.f32 0.0, %v1087
    %1089 = vmatmul.f32.gmra.mxu0 %v576
    %v1090 = vpop.f32.mrf.mxu0
    %v1091 = vadd.f32 0.0, %v1090
    %1092 = vmatmul.f32.gmra.mxu0 %v580
    %v1093 = vpop.f32.mrf.mxu0
    %v1094 = vadd.f32 0.0, %v1093
    %1095 = vmatmul.f32.gmra.mxu0 %v584
    %v1096 = vpop.f32.mrf.mxu0
    %v1097 = vadd.f32 0.0, %v1096
    %1098 = vmatmul.f32.gmra.mxu0 %v588
    %v1099 = vpop.f32.mrf.mxu0
    %v1100 = vadd.f32 0.0, %v1099
    %1101 = vmatmul.f32.gmra.mxu0 %v592
    %v1102 = vpop.f32.mrf.mxu0
    %v1103 = vadd.f32 0.0, %v1102
    %1104 = vmatmul.f32.gmra.mxu0 %v596
    %v1105 = vpop.f32.mrf.mxu0
    %v1106 = vadd.f32 0.0, %v1105
    %1107 = vmatmul.f32.gmra.mxu0 %v600
    %v1108 = vpop.f32.mrf.mxu0
    %v1109 = vadd.f32 0.0, %v1108
    %1110 = vmatmul.f32.gmra.mxu0 %v604
    %v1111 = vpop.f32.mrf.mxu0
    %v1112 = vadd.f32 0.0, %v1111
    %1113 = vmatmul.f32.gmra.mxu0 %v608
    %v1114 = vpop.f32.mrf.mxu0
    %v1115 = vadd.f32 0.0, %v1114
    %1116 = vmatmul.f32.gmra.mxu0 %v612
    %v1117 = vpop.f32.mrf.mxu0
    %v1118 = vadd.f32 0.0, %v1117
    %1119 = vmatmul.f32.gmra.mxu0 %v616
    %v1120 = vpop.f32.mrf.mxu0
    %v1121 = vadd.f32 0.0, %v1120
    %1122 = vmatmul.f32.gmra.mxu0 %v620
    %v1123 = vpop.f32.mrf.mxu0
    %v1124 = vadd.f32 0.0, %v1123
    %1125 = vmatmul.f32.gmra.mxu0 %v624
    %v1126 = vpop.f32.mrf.mxu0
    %v1127 = vadd.f32 0.0, %v1126
    %1128 = vmatmul.f32.gmra.mxu0 %v628
    %v1129 = vpop.f32.mrf.mxu0
    %v1130 = vadd.f32 0.0, %v1129
    %1131 = vmatmul.f32.gmra.mxu0 %v632
    %v1132 = vpop.f32.mrf.mxu0
    %v1133 = vadd.f32 0.0, %v1132
    %1134 = vmatmul.f32.gmra.mxu0 %v636
    %v1135 = vpop.f32.mrf.mxu0
    %v1136 = vadd.f32 0.0, %v1135
    %1137 = vmatmul.f32.gmra.mxu0 %v640
    %v1138 = vpop.f32.mrf.mxu0
    %v1139 = vadd.f32 0.0, %v1138
    %1140 = vmatmul.f32.gmra.mxu0 %v644
    %v1141 = vpop.f32.mrf.mxu0
    %v1142 = vadd.f32 0.0, %v1141
    %1143 = vmatmul.f32.gmra.mxu0 %v648
    %v1144 = vpop.f32.mrf.mxu0
    %v1145 = vadd.f32 0.0, %v1144
    %1146 = vmatmul.f32.gmra.mxu0 %v652
    %v1147 = vpop.f32.mrf.mxu0
    %v1148 = vadd.f32 0.0, %v1147
    %1149 = vmatmul.f32.gmra.mxu0 %v656
    %v1150 = vpop.f32.mrf.mxu0
    %v1151 = vadd.f32 0.0, %v1150
    %1152 = vmatmul.f32.gmra.mxu0 %v660
    %v1153 = vpop.f32.mrf.mxu0
    %v1154 = vadd.f32 0.0, %v1153
    %1155 = vmatmul.f32.gmra.mxu0 %v664
    %v1156 = vpop.f32.mrf.mxu0
    %v1157 = vadd.f32 0.0, %v1156
    %1158 = vmatmul.f32.gmra.mxu0 %v668
    %v1159 = vpop.f32.mrf.mxu0
    %v1160 = vadd.f32 0.0, %v1159
    %1161 = vmatmul.f32.gmra.mxu0 %v672
    %v1162 = vpop.f32.mrf.mxu0
    %v1163 = vadd.f32 0.0, %v1162
    %1164 = vmatmul.f32.gmra.mxu0 %v676
    %v1165 = vpop.f32.mrf.mxu0
    %v1166 = vadd.f32 0.0, %v1165
    %1167 = vmatmul.f32.gmra.mxu0 %v680
    %v1168 = vpop.f32.mrf.mxu0
    %v1169 = vadd.f32 0.0, %v1168
    %1170 = vmatmul.f32.gmra.mxu0 %v684
    %v1171 = vpop.f32.mrf.mxu0
    %v1172 = vadd.f32 0.0, %v1171
    %1173 = vmatmul.f32.gmra.mxu0 %v688
    %v1174 = vpop.f32.mrf.mxu0
    %v1175 = vadd.f32 0.0, %v1174
    %1176 = vmatmul.f32.gmra.mxu0 %v692
    %v1177 = vpop.f32.mrf.mxu0
    %v1178 = vadd.f32 0.0, %v1177
    %1179 = vmatmul.f32.gmra.mxu0 %v696
    %v1180 = vpop.f32.mrf.mxu0
    %v1181 = vadd.f32 0.0, %v1180
    %1182 = vmatmul.f32.gmra.mxu0 %v700
    %v1183 = vpop.f32.mrf.mxu0
    %v1184 = vadd.f32 0.0, %v1183
    %1185 = vmatmul.f32.gmra.mxu0 %v704
    %v1186 = vpop.f32.mrf.mxu0
    %v1187 = vadd.f32 0.0, %v1186
    %1188 = vmatmul.f32.gmra.mxu0 %v708
    %v1189 = vpop.f32.mrf.mxu0
    %v1190 = vadd.f32 0.0, %v1189
    %1191 = vmatmul.f32.gmra.mxu0 %v712
    %v1192 = vpop.f32.mrf.mxu0
    %v1193 = vadd.f32 0.0, %v1192
    %1194 = vmatmul.f32.gmra.mxu0 %v716
    %v1195 = vpop.f32.mrf.mxu0
    %v1196 = vadd.f32 0.0, %v1195
    %1197 = vmatmul.f32.gmra.mxu0 %v720
    %v1198 = vpop.f32.mrf.mxu0
    %v1199 = vadd.f32 0.0, %v1198
    %1200 = vmatmul.f32.gmra.mxu0 %v724
    %v1201 = vpop.f32.mrf.mxu0
    %v1202 = vadd.f32 0.0, %v1201
    %1203 = vmatmul.f32.gmra.mxu0 %v728
    %v1204 = vpop.f32.mrf.mxu0
    %v1205 = vadd.f32 0.0, %v1204
    %1206 = vmatmul.f32.gmra.mxu0 %v732
    %v1207 = vpop.f32.mrf.mxu0
    %v1208 = vadd.f32 0.0, %v1207
    %1209 = vmatmul.f32.gmra.mxu0 %v736
    %v1210 = vpop.f32.mrf.mxu0
    %v1211 = vadd.f32 0.0, %v1210
    %1212 = vmatmul.f32.gmra.mxu0 %v740
    %v1213 = vpop.f32.mrf.mxu0
    %v1214 = vadd.f32 0.0, %v1213
    %1215 = vmatmul.f32.gmra.mxu0 %v744
    %v1216 = vpop.f32.mrf.mxu0
    %v1217 = vadd.f32 0.0, %v1216
    %1218 = vmatmul.f32.gmra.mxu0 %v748
    %v1219 = vpop.f32.mrf.mxu0
    %v1220 = vadd.f32 0.0, %v1219
    %1221 = vmatmul.f32.gmra.mxu0 %v752
    %v1222 = vpop.f32.mrf.mxu0
    %v1223 = vadd.f32 0.0, %v1222
    %1224 = vmatmul.f32.gmra.mxu0 %v756
    %v1225 = vpop.f32.mrf.mxu0
    %v1226 = vadd.f32 0.0, %v1225
    %1227 = vmatmul.f32.gmra.mxu0 %v760
    %v1228 = vpop.f32.mrf.mxu0
    %v1229 = vadd.f32 0.0, %v1228
    %1230 = vmatmul.f32.gmra.mxu0 %v764
    %v1231 = vpop.f32.mrf.mxu0
    %v1232 = vadd.f32 0.0, %v1231
    %1233 = vmatmul.f32.gmra.mxu0 %v768
    %v1234 = vpop.f32.mrf.mxu0
    %v1235 = vadd.f32 0.0, %v1234
    %1236 = vmatmul.f32.gmra.mxu0 %v772
    %v1237 = vpop.f32.mrf.mxu0
    %v1238 = vadd.f32 0.0, %v1237
    %1239 = vmatmul.f32.gmra.mxu0 %v776
    %v1240 = vpop.f32.mrf.mxu0
    %v1241 = vadd.f32 0.0, %v1240
    %1242 = vmatmul.f32.gmra.mxu0 %v780
    %v1243 = vpop.f32.mrf.mxu0
    %v1244 = vadd.f32 0.0, %v1243
    %1245 = vmatmul.f32.gmra.mxu0 %v784
    %v1246 = vpop.f32.mrf.mxu0
    %v1247 = vadd.f32 0.0, %v1246
    %1248 = vmatmul.f32.gmra.mxu0 %v788
    %v1249 = vpop.f32.mrf.mxu0
    %v1250 = vadd.f32 0.0, %v1249
    %1251 = vmatmul.f32.gmra.mxu0 %v792
    %v1252 = vpop.f32.mrf.mxu0
    %v1253 = vadd.f32 0.0, %v1252
    %1254 = vmatmul.f32.gmra.mxu0 %v796
    %v1255 = vpop.f32.mrf.mxu0
    %v1256 = vadd.f32 0.0, %v1255
    %1257 = vmatmul.f32.gmra.mxu0 %v800
    %v1258 = vpop.f32.mrf.mxu0
    %v1259 = vadd.f32 0.0, %v1258
    %1260 = vmatmul.f32.gmra.mxu0 %v804
    %v1261 = vpop.f32.mrf.mxu0
    %v1262 = vadd.f32 0.0, %v1261
    %1263 = vmatmul.f32.gmra.mxu0 %v808
    %v1264 = vpop.f32.mrf.mxu0
    %v1265 = vadd.f32 0.0, %v1264
    %1266 = vmatmul.f32.gmra.mxu0 %v812
    %v1267 = vpop.f32.mrf.mxu0
    %v1268 = vadd.f32 0.0, %v1267
    %1269 = vmatmul.f32.gmra.mxu0 %v816
    %v1270 = vpop.f32.mrf.mxu0
    %v1271 = vadd.f32 0.0, %v1270
    %1272 = vmatmul.f32.gmra.mxu0 %v820
    %v1273 = vpop.f32.mrf.mxu0
    %v1274 = vadd.f32 0.0, %v1273
    %1275 = vmatmul.f32.gmra.mxu0 %v824
    %v1276 = vpop.f32.mrf.mxu0
    %v1277 = vadd.f32 0.0, %v1276
    %1278 = vmatmul.f32.gmra.mxu0 %v828
    %v1279 = vpop.f32.mrf.mxu0
    %v1280 = vadd.f32 0.0, %v1279
    %1281 = vmatmul.f32.gmra.mxu0 %v832
    %v1282 = vpop.f32.mrf.mxu0
    %v1283 = vadd.f32 0.0, %v1282
    %1284 = vdwg.mxu0
    %1285 = vmatpush.msra.mxu0 %v227
    %1286 = vmatpush.msra.mxu0 %v226
    %1287 = vmatpush.msra.mxu0 %v225
    %1288 = vmatpush.msra.mxu0 %v224
    %1289 = vmatpush.msra.mxu0 %v223
    %1290 = vmatpush.msra.mxu0 %v222
    %1291 = vmatpush.msra.mxu0 %v221
    %1292 = vmatpush.msra.mxu0 %v220
    %1293 = vmatpush.msra.mxu0 %v219
    %1294 = vmatpush.msra.mxu0 %v218
    %1295 = vmatpush.msra.mxu0 %v217
    %1296 = vmatpush.msra.mxu0 %v216
    %1297 = vmatpush.msra.mxu0 %v215
    %1298 = vmatpush.msra.mxu0 %v214
    %1299 = vmatpush.msra.mxu0 %v213
    %1300 = vmatpush.msra.mxu0 %v212
    %1301 = vmatmul.f32.gmra.mxu0 %v261
    %v1302 = vpop.f32.mrf.mxu0
    %v1303 = vadd.f32 %v854, %v1302
    %1304 = vmatmul.f32.gmra.mxu0 %v265
    %v1305 = vpop.f32.mrf.mxu0
    %v1306 = vadd.f32 %v857, %v1305
    %1307 = vmatmul.f32.gmra.mxu0 %v269
    %v1308 = vpop.f32.mrf.mxu0
    %v1309 = vadd.f32 %v860, %v1308
    %1310 = vmatmul.f32.gmra.mxu0 %v273
    %v1311 = vpop.f32.mrf.mxu0
    %v1312 = vadd.f32 %v863, %v1311
    %1313 = vmatmul.f32.gmra.mxu0 %v277
    %v1314 = vpop.f32.mrf.mxu0
    %v1315 = vadd.f32 %v866, %v1314
    %1316 = vmatmul.f32.gmra.mxu0 %v281
    %v1317 = vpop.f32.mrf.mxu0
    %v1318 = vadd.f32 %v869, %v1317
    %1319 = vmatmul.f32.gmra.mxu0 %v285
    %v1320 = vpop.f32.mrf.mxu0
    %v1321 = vadd.f32 %v872, %v1320
    %1322 = vmatmul.f32.gmra.mxu0 %v289
    %v1323 = vpop.f32.mrf.mxu0
    %v1324 = vadd.f32 %v875, %v1323
    %1325 = vmatmul.f32.gmra.mxu0 %v293
    %v1326 = vpop.f32.mrf.mxu0
    %v1327 = vadd.f32 %v878, %v1326
    %1328 = vmatmul.f32.gmra.mxu0 %v297
    %v1329 = vpop.f32.mrf.mxu0
    %v1330 = vadd.f32 %v881, %v1329
    %1331 = vmatmul.f32.gmra.mxu0 %v301
    %v1332 = vpop.f32.mrf.mxu0
    %v1333 = vadd.f32 %v884, %v1332
    %1334 = vmatmul.f32.gmra.mxu0 %v305
    %v1335 = vpop.f32.mrf.mxu0
    %v1336 = vadd.f32 %v887, %v1335
    %1337 = vmatmul.f32.gmra.mxu0 %v309
    %v1338 = vpop.f32.mrf.mxu0
    %v1339 = vadd.f32 %v890, %v1338
    %1340 = vmatmul.f32.gmra.mxu0 %v313
    %v1341 = vpop.f32.mrf.mxu0
    %v1342 = vadd.f32 %v893, %v1341
    %1343 = vmatmul.f32.gmra.mxu0 %v317
    %v1344 = vpop.f32.mrf.mxu0
    %v1345 = vadd.f32 %v896, %v1344
    %1346 = vmatmul.f32.gmra.mxu0 %v321
    %v1347 = vpop.f32.mrf.mxu0
    %v1348 = vadd.f32 %v899, %v1347
    %1349 = vmatmul.f32.gmra.mxu0 %v325
    %v1350 = vpop.f32.mrf.mxu0
    %v1351 = vadd.f32 %v902, %v1350
    %1352 = vmatmul.f32.gmra.mxu0 %v329
    %v1353 = vpop.f32.mrf.mxu0
    %v1354 = vadd.f32 %v905, %v1353
    %1355 = vmatmul.f32.gmra.mxu0 %v333
    %v1356 = vpop.f32.mrf.mxu0
    %v1357 = vadd.f32 %v908, %v1356
    %1358 = vmatmul.f32.gmra.mxu0 %v337
    %v1359 = vpop.f32.mrf.mxu0
    %v1360 = vadd.f32 %v911, %v1359
    %1361 = vmatmul.f32.gmra.mxu0 %v341
    %v1362 = vpop.f32.mrf.mxu0
    %v1363 = vadd.f32 %v914, %v1362
    %1364 = vmatmul.f32.gmra.mxu0 %v345
    %v1365 = vpop.f32.mrf.mxu0
    %v1366 = vadd.f32 %v917, %v1365
    %1367 = vmatmul.f32.gmra.mxu0 %v349
    %v1368 = vpop.f32.mrf.mxu0
    %v1369 = vadd.f32 %v920, %v1368
    %1370 = vmatmul.f32.gmra.mxu0 %v353
    %v1371 = vpop.f32.mrf.mxu0
    %v1372 = vadd.f32 %v923, %v1371
    %1373 = vmatmul.f32.gmra.mxu0 %v357
    %v1374 = vpop.f32.mrf.mxu0
    %v1375 = vadd.f32 %v926, %v1374
    %1376 = vmatmul.f32.gmra.mxu0 %v361
    %v1377 = vpop.f32.mrf.mxu0
    %v1378 = vadd.f32 %v929, %v1377
    %1379 = vmatmul.f32.gmra.mxu0 %v365
    %v1380 = vpop.f32.mrf.mxu0
    %v1381 = vadd.f32 %v932, %v1380
    %1382 = vmatmul.f32.gmra.mxu0 %v369
    %v1383 = vpop.f32.mrf.mxu0
    %v1384 = vadd.f32 %v935, %v1383
    %1385 = vmatmul.f32.gmra.mxu0 %v373
    %v1386 = vpop.f32.mrf.mxu0
    %v1387 = vadd.f32 %v938, %v1386
    %1388 = vmatmul.f32.gmra.mxu0 %v377
    %v1389 = vpop.f32.mrf.mxu0
    %v1390 = vadd.f32 %v941, %v1389
    %1391 = vmatmul.f32.gmra.mxu0 %v381
    %v1392 = vpop.f32.mrf.mxu0
    %v1393 = vadd.f32 %v944, %v1392
    %1394 = vmatmul.f32.gmra.mxu0 %v385
    %v1395 = vpop.f32.mrf.mxu0
    %v1396 = vadd.f32 %v947, %v1395
    %1397 = vmatmul.f32.gmra.mxu0 %v389
    %v1398 = vpop.f32.mrf.mxu0
    %v1399 = vadd.f32 %v950, %v1398
    %1400 = vmatmul.f32.gmra.mxu0 %v393
    %v1401 = vpop.f32.mrf.mxu0
    %v1402 = vadd.f32 %v953, %v1401
    %1403 = vmatmul.f32.gmra.mxu0 %v397
    %v1404 = vpop.f32.mrf.mxu0
    %v1405 = vadd.f32 %v956, %v1404
    %1406 = vmatmul.f32.gmra.mxu0 %v401
    %v1407 = vpop.f32.mrf.mxu0
    %v1408 = vadd.f32 %v959, %v1407
    %1409 = vmatmul.f32.gmra.mxu0 %v405
    %v1410 = vpop.f32.mrf.mxu0
    %v1411 = vadd.f32 %v962, %v1410
    %1412 = vmatmul.f32.gmra.mxu0 %v409
    %v1413 = vpop.f32.mrf.mxu0
    %v1414 = vadd.f32 %v965, %v1413
    %1415 = vmatmul.f32.gmra.mxu0 %v413
    %v1416 = vpop.f32.mrf.mxu0
    %v1417 = vadd.f32 %v968, %v1416
    %1418 = vmatmul.f32.gmra.mxu0 %v417
    %v1419 = vpop.f32.mrf.mxu0
    %v1420 = vadd.f32 %v971, %v1419
    %1421 = vmatmul.f32.gmra.mxu0 %v421
    %v1422 = vpop.f32.mrf.mxu0
    %v1423 = vadd.f32 %v974, %v1422
    %1424 = vmatmul.f32.gmra.mxu0 %v425
    %v1425 = vpop.f32.mrf.mxu0
    %v1426 = vadd.f32 %v977, %v1425
    %1427 = vmatmul.f32.gmra.mxu0 %v429
    %v1428 = vpop.f32.mrf.mxu0
    %v1429 = vadd.f32 %v980, %v1428
    %1430 = vmatmul.f32.gmra.mxu0 %v433
    %v1431 = vpop.f32.mrf.mxu0
    %v1432 = vadd.f32 %v983, %v1431
    %1433 = vmatmul.f32.gmra.mxu0 %v437
    %v1434 = vpop.f32.mrf.mxu0
    %v1435 = vadd.f32 %v986, %v1434
    %1436 = vmatmul.f32.gmra.mxu0 %v441
    %v1437 = vpop.f32.mrf.mxu0
    %v1438 = vadd.f32 %v989, %v1437
    %1439 = vmatmul.f32.gmra.mxu0 %v445
    %v1440 = vpop.f32.mrf.mxu0
    %v1441 = vadd.f32 %v992, %v1440
    %1442 = vmatmul.f32.gmra.mxu0 %v449
    %v1443 = vpop.f32.mrf.mxu0
    %v1444 = vadd.f32 %v995, %v1443
    %1445 = vmatmul.f32.gmra.mxu0 %v453
    %v1446 = vpop.f32.mrf.mxu0
    %v1447 = vadd.f32 %v998, %v1446
    %1448 = vmatmul.f32.gmra.mxu0 %v457
    %v1449 = vpop.f32.mrf.mxu0
    %v1450 = vadd.f32 %v1001, %v1449
    %1451 = vmatmul.f32.gmra.mxu0 %v461
    %v1452 = vpop.f32.mrf.mxu0
    %v1453 = vadd.f32 %v1004, %v1452
    %1454 = vmatmul.f32.gmra.mxu0 %v465
    %v1455 = vpop.f32.mrf.mxu0
    %v1456 = vadd.f32 %v1007, %v1455
    %1457 = vmatmul.f32.gmra.mxu0 %v469
    %v1458 = vpop.f32.mrf.mxu0
    %v1459 = vadd.f32 %v1010, %v1458
    %1460 = vmatmul.f32.gmra.mxu0 %v473
    %v1461 = vpop.f32.mrf.mxu0
    %v1462 = vadd.f32 %v1013, %v1461
    %1463 = vmatmul.f32.gmra.mxu0 %v477
    %v1464 = vpop.f32.mrf.mxu0
    %v1465 = vadd.f32 %v1016, %v1464
    %1466 = vmatmul.f32.gmra.mxu0 %v481
    %v1467 = vpop.f32.mrf.mxu0
    %v1468 = vadd.f32 %v1019, %v1467
    %1469 = vmatmul.f32.gmra.mxu0 %v485
    %v1470 = vpop.f32.mrf.mxu0
    %v1471 = vadd.f32 %v1022, %v1470
    %1472 = vmatmul.f32.gmra.mxu0 %v489
    %v1473 = vpop.f32.mrf.mxu0
    %v1474 = vadd.f32 %v1025, %v1473
    %1475 = vmatmul.f32.gmra.mxu0 %v493
    %v1476 = vpop.f32.mrf.mxu0
    %v1477 = vadd.f32 %v1028, %v1476
    %1478 = vmatmul.f32.gmra.mxu0 %v497
    %v1479 = vpop.f32.mrf.mxu0
    %v1480 = vadd.f32 %v1031, %v1479
    %1481 = vmatmul.f32.gmra.mxu0 %v501
    %v1482 = vpop.f32.mrf.mxu0
    %v1483 = vadd.f32 %v1034, %v1482
    %1484 = vmatmul.f32.gmra.mxu0 %v505
    %v1485 = vpop.f32.mrf.mxu0
    %v1486 = vadd.f32 %v1037, %v1485
    %1487 = vmatmul.f32.gmra.mxu0 %v509
    %v1488 = vpop.f32.mrf.mxu0
    %v1489 = vadd.f32 %v1040, %v1488
    %1490 = vmatmul.f32.gmra.mxu0 %v513
    %v1491 = vpop.f32.mrf.mxu0
    %v1492 = vadd.f32 %v1043, %v1491
    %1493 = vmatmul.f32.gmra.mxu0 %v517
    %v1494 = vpop.f32.mrf.mxu0
    %v1495 = vadd.f32 %v1046, %v1494
    %1496 = vmatmul.f32.gmra.mxu0 %v521
    %v1497 = vpop.f32.mrf.mxu0
    %v1498 = vadd.f32 %v1049, %v1497
    %1499 = vmatmul.f32.gmra.mxu0 %v525
    %v1500 = vpop.f32.mrf.mxu0
    %v1501 = vadd.f32 %v1052, %v1500
    %1502 = vmatmul.f32.gmra.mxu0 %v529
    %v1503 = vpop.f32.mrf.mxu0
    %v1504 = vadd.f32 %v1055, %v1503
    %1505 = vmatmul.f32.gmra.mxu0 %v533
    %v1506 = vpop.f32.mrf.mxu0
    %v1507 = vadd.f32 %v1058, %v1506
    %1508 = vmatmul.f32.gmra.mxu0 %v537
    %v1509 = vpop.f32.mrf.mxu0
    %v1510 = vadd.f32 %v1061, %v1509
    %1511 = vmatmul.f32.gmra.mxu0 %v541
    %v1512 = vpop.f32.mrf.mxu0
    %v1513 = vadd.f32 %v1064, %v1512
    %1514 = vmatmul.f32.gmra.mxu0 %v545
    %v1515 = vpop.f32.mrf.mxu0
    %v1516 = vadd.f32 %v1067, %v1515
    %1517 = vmatmul.f32.gmra.mxu0 %v549
    %v1518 = vpop.f32.mrf.mxu0
    %v1519 = vadd.f32 %v1070, %v1518
    %1520 = vmatmul.f32.gmra.mxu0 %v553
    %v1521 = vpop.f32.mrf.mxu0
    %v1522 = vadd.f32 %v1073, %v1521
    %1523 = vmatmul.f32.gmra.mxu0 %v557
    %v1524 = vpop.f32.mrf.mxu0
    %v1525 = vadd.f32 %v1076, %v1524
    %1526 = vmatmul.f32.gmra.mxu0 %v561
    %v1527 = vpop.f32.mrf.mxu0
    %v1528 = vadd.f32 %v1079, %v1527
    %1529 = vmatmul.f32.gmra.mxu0 %v565
    %v1530 = vpop.f32.mrf.mxu0
    %v1531 = vadd.f32 %v1082, %v1530
    %1532 = vmatmul.f32.gmra.mxu0 %v569
    %v1533 = vpop.f32.mrf.mxu0
    %v1534 = vadd.f32 %v1085, %v1533
    %1535 = vmatmul.f32.gmra.mxu0 %v573
    %v1536 = vpop.f32.mrf.mxu0
    %v1537 = vadd.f32 %v1088, %v1536
    %1538 = vmatmul.f32.gmra.mxu0 %v577
    %v1539 = vpop.f32.mrf.mxu0
    %v1540 = vadd.f32 %v1091, %v1539
    %1541 = vmatmul.f32.gmra.mxu0 %v581
    %v1542 = vpop.f32.mrf.mxu0
    %v1543 = vadd.f32 %v1094, %v1542
    %1544 = vmatmul.f32.gmra.mxu0 %v585
    %v1545 = vpop.f32.mrf.mxu0
    %v1546 = vadd.f32 %v1097, %v1545
    %1547 = vmatmul.f32.gmra.mxu0 %v589
    %v1548 = vpop.f32.mrf.mxu0
    %v1549 = vadd.f32 %v1100, %v1548
    %1550 = vmatmul.f32.gmra.mxu0 %v593
    %v1551 = vpop.f32.mrf.mxu0
    %v1552 = vadd.f32 %v1103, %v1551
    %1553 = vmatmul.f32.gmra.mxu0 %v597
    %v1554 = vpop.f32.mrf.mxu0
    %v1555 = vadd.f32 %v1106, %v1554
    %1556 = vmatmul.f32.gmra.mxu0 %v601
    %v1557 = vpop.f32.mrf.mxu0
    %v1558 = vadd.f32 %v1109, %v1557
    %1559 = vmatmul.f32.gmra.mxu0 %v605
    %v1560 = vpop.f32.mrf.mxu0
    %v1561 = vadd.f32 %v1112, %v1560
    %1562 = vmatmul.f32.gmra.mxu0 %v609
    %v1563 = vpop.f32.mrf.mxu0
    %v1564 = vadd.f32 %v1115, %v1563
    %1565 = vmatmul.f32.gmra.mxu0 %v613
    %v1566 = vpop.f32.mrf.mxu0
    %v1567 = vadd.f32 %v1118, %v1566
    %1568 = vmatmul.f32.gmra.mxu0 %v617
    %v1569 = vpop.f32.mrf.mxu0
    %v1570 = vadd.f32 %v1121, %v1569
    %1571 = vmatmul.f32.gmra.mxu0 %v621
    %v1572 = vpop.f32.mrf.mxu0
    %v1573 = vadd.f32 %v1124, %v1572
    %1574 = vmatmul.f32.gmra.mxu0 %v625
    %v1575 = vpop.f32.mrf.mxu0
    %v1576 = vadd.f32 %v1127, %v1575
    %1577 = vmatmul.f32.gmra.mxu0 %v629
    %v1578 = vpop.f32.mrf.mxu0
    %v1579 = vadd.f32 %v1130, %v1578
    %1580 = vmatmul.f32.gmra.mxu0 %v633
    %v1581 = vpop.f32.mrf.mxu0
    %v1582 = vadd.f32 %v1133, %v1581
    %1583 = vmatmul.f32.gmra.mxu0 %v637
    %v1584 = vpop.f32.mrf.mxu0
    %v1585 = vadd.f32 %v1136, %v1584
    %1586 = vmatmul.f32.gmra.mxu0 %v641
    %v1587 = vpop.f32.mrf.mxu0
    %v1588 = vadd.f32 %v1139, %v1587
    %1589 = vmatmul.f32.gmra.mxu0 %v645
    %v1590 = vpop.f32.mrf.mxu0
    %v1591 = vadd.f32 %v1142, %v1590
    %1592 = vmatmul.f32.gmra.mxu0 %v649
    %v1593 = vpop.f32.mrf.mxu0
    %v1594 = vadd.f32 %v1145, %v1593
    %1595 = vmatmul.f32.gmra.mxu0 %v653
    %v1596 = vpop.f32.mrf.mxu0
    %v1597 = vadd.f32 %v1148, %v1596
    %1598 = vmatmul.f32.gmra.mxu0 %v657
    %v1599 = vpop.f32.mrf.mxu0
    %v1600 = vadd.f32 %v1151, %v1599
    %1601 = vmatmul.f32.gmra.mxu0 %v661
    %v1602 = vpop.f32.mrf.mxu0
    %v1603 = vadd.f32 %v1154, %v1602
    %1604 = vmatmul.f32.gmra.mxu0 %v665
    %v1605 = vpop.f32.mrf.mxu0
    %v1606 = vadd.f32 %v1157, %v1605
    %1607 = vmatmul.f32.gmra.mxu0 %v669
    %v1608 = vpop.f32.mrf.mxu0
    %v1609 = vadd.f32 %v1160, %v1608
    %1610 = vmatmul.f32.gmra.mxu0 %v673
    %v1611 = vpop.f32.mrf.mxu0
    %v1612 = vadd.f32 %v1163, %v1611
    %1613 = vmatmul.f32.gmra.mxu0 %v677
    %v1614 = vpop.f32.mrf.mxu0
    %v1615 = vadd.f32 %v1166, %v1614
    %1616 = vmatmul.f32.gmra.mxu0 %v681
    %v1617 = vpop.f32.mrf.mxu0
    %v1618 = vadd.f32 %v1169, %v1617
    %1619 = vmatmul.f32.gmra.mxu0 %v685
    %v1620 = vpop.f32.mrf.mxu0
    %v1621 = vadd.f32 %v1172, %v1620
    %1622 = vmatmul.f32.gmra.mxu0 %v689
    %v1623 = vpop.f32.mrf.mxu0
    %v1624 = vadd.f32 %v1175, %v1623
    %1625 = vmatmul.f32.gmra.mxu0 %v693
    %v1626 = vpop.f32.mrf.mxu0
    %v1627 = vadd.f32 %v1178, %v1626
    %1628 = vmatmul.f32.gmra.mxu0 %v697
    %v1629 = vpop.f32.mrf.mxu0
    %v1630 = vadd.f32 %v1181, %v1629
    %1631 = vmatmul.f32.gmra.mxu0 %v701
    %v1632 = vpop.f32.mrf.mxu0
    %v1633 = vadd.f32 %v1184, %v1632
    %1634 = vmatmul.f32.gmra.mxu0 %v705
    %v1635 = vpop.f32.mrf.mxu0
    %v1636 = vadd.f32 %v1187, %v1635
    %1637 = vmatmul.f32.gmra.mxu0 %v709
    %v1638 = vpop.f32.mrf.mxu0
    %v1639 = vadd.f32 %v1190, %v1638
    %1640 = vmatmul.f32.gmra.mxu0 %v713
    %v1641 = vpop.f32.mrf.mxu0
    %v1642 = vadd.f32 %v1193, %v1641
    %1643 = vmatmul.f32.gmra.mxu0 %v717
    %v1644 = vpop.f32.mrf.mxu0
    %v1645 = vadd.f32 %v1196, %v1644
    %1646 = vmatmul.f32.gmra.mxu0 %v721
    %v1647 = vpop.f32.mrf.mxu0
    %v1648 = vadd.f32 %v1199, %v1647
    %1649 = vmatmul.f32.gmra.mxu0 %v725
    %v1650 = vpop.f32.mrf.mxu0
    %v1651 = vadd.f32 %v1202, %v1650
    %1652 = vmatmul.f32.gmra.mxu0 %v729
    %v1653 = vpop.f32.mrf.mxu0
    %v1654 = vadd.f32 %v1205, %v1653
    %1655 = vmatmul.f32.gmra.mxu0 %v733
    %v1656 = vpop.f32.mrf.mxu0
    %v1657 = vadd.f32 %v1208, %v1656
    %1658 = vmatmul.f32.gmra.mxu0 %v737
    %v1659 = vpop.f32.mrf.mxu0
    %v1660 = vadd.f32 %v1211, %v1659
    %1661 = vmatmul.f32.gmra.mxu0 %v741
    %v1662 = vpop.f32.mrf.mxu0
    %v1663 = vadd.f32 %v1214, %v1662
    %1664 = vmatmul.f32.gmra.mxu0 %v745
    %v1665 = vpop.f32.mrf.mxu0
    %v1666 = vadd.f32 %v1217, %v1665
    %1667 = vmatmul.f32.gmra.mxu0 %v749
    %v1668 = vpop.f32.mrf.mxu0
    %v1669 = vadd.f32 %v1220, %v1668
    %1670 = vmatmul.f32.gmra.mxu0 %v753
    %v1671 = vpop.f32.mrf.mxu0
    %v1672 = vadd.f32 %v1223, %v1671
    %1673 = vmatmul.f32.gmra.mxu0 %v757
    %v1674 = vpop.f32.mrf.mxu0
    %v1675 = vadd.f32 %v1226, %v1674
    %1676 = vmatmul.f32.gmra.mxu0 %v761
    %v1677 = vpop.f32.mrf.mxu0
    %v1678 = vadd.f32 %v1229, %v1677
    %1679 = vmatmul.f32.gmra.mxu0 %v765
    %v1680 = vpop.f32.mrf.mxu0
    %v1681 = vadd.f32 %v1232, %v1680
    %1682 = vmatmul.f32.gmra.mxu0 %v769
    %v1683 = vpop.f32.mrf.mxu0
    %v1684 = vadd.f32 %v1235, %v1683
    %1685 = vmatmul.f32.gmra.mxu0 %v773
    %v1686 = vpop.f32.mrf.mxu0
    %v1687 = vadd.f32 %v1238, %v1686
    %1688 = vmatmul.f32.gmra.mxu0 %v777
    %v1689 = vpop.f32.mrf.mxu0
    %v1690 = vadd.f32 %v1241, %v1689
    %1691 = vmatmul.f32.gmra.mxu0 %v781
    %v1692 = vpop.f32.mrf.mxu0
    %v1693 = vadd.f32 %v1244, %v1692
    %1694 = vmatmul.f32.gmra.mxu0 %v785
    %v1695 = vpop.f32.mrf.mxu0
    %v1696 = vadd.f32 %v1247, %v1695
    %1697 = vmatmul.f32.gmra.mxu0 %v789
    %v1698 = vpop.f32.mrf.mxu0
    %v1699 = vadd.f32 %v1250, %v1698
    %1700 = vmatmul.f32.gmra.mxu0 %v793
    %v1701 = vpop.f32.mrf.mxu0
    %v1702 = vadd.f32 %v1253, %v1701
    %1703 = vmatmul.f32.gmra.mxu0 %v797
    %v1704 = vpop.f32.mrf.mxu0
    %v1705 = vadd.f32 %v1256, %v1704
    %1706 = vmatmul.f32.gmra.mxu0 %v801
    %v1707 = vpop.f32.mrf.mxu0
    %v1708 = vadd.f32 %v1259, %v1707
    %1709 = vmatmul.f32.gmra.mxu0 %v805
    %v1710 = vpop.f32.mrf.mxu0
    %v1711 = vadd.f32 %v1262, %v1710
    %1712 = vmatmul.f32.gmra.mxu0 %v809
    %v1713 = vpop.f32.mrf.mxu0
    %v1714 = vadd.f32 %v1265, %v1713
    %1715 = vmatmul.f32.gmra.mxu0 %v813
    %v1716 = vpop.f32.mrf.mxu0
    %v1717 = vadd.f32 %v1268, %v1716
    %1718 = vmatmul.f32.gmra.mxu0 %v817
    %v1719 = vpop.f32.mrf.mxu0
    %v1720 = vadd.f32 %v1271, %v1719
    %1721 = vmatmul.f32.gmra.mxu0 %v821
    %v1722 = vpop.f32.mrf.mxu0
    %v1723 = vadd.f32 %v1274, %v1722
    %1724 = vmatmul.f32.gmra.mxu0 %v825
    %v1725 = vpop.f32.mrf.mxu0
    %v1726 = vadd.f32 %v1277, %v1725
    %1727 = vmatmul.f32.gmra.mxu0 %v829
    %v1728 = vpop.f32.mrf.mxu0
    %v1729 = vadd.f32 %v1280, %v1728
    %1730 = vmatmul.f32.gmra.mxu0 %v833
    %v1731 = vpop.f32.mrf.mxu0
    %v1732 = vadd.f32 %v1283, %v1731
    %1733 = vdwg.mxu0
    %1734 = vmatpush.msra.mxu0 %v243
    %1735 = vmatpush.msra.mxu0 %v242
    %1736 = vmatpush.msra.mxu0 %v241
    %1737 = vmatpush.msra.mxu0 %v240
    %1738 = vmatpush.msra.mxu0 %v239
    %1739 = vmatpush.msra.mxu0 %v238
    %1740 = vmatpush.msra.mxu0 %v237
    %1741 = vmatpush.msra.mxu0 %v236
    %1742 = vmatpush.msra.mxu0 %v235
    %1743 = vmatpush.msra.mxu0 %v234
    %1744 = vmatpush.msra.mxu0 %v233
    %1745 = vmatpush.msra.mxu0 %v232
    %1746 = vmatpush.msra.mxu0 %v231
    %1747 = vmatpush.msra.mxu0 %v230
    %1748 = vmatpush.msra.mxu0 %v229
    %1749 = vmatpush.msra.mxu0 %v228
    %1750 = vmatmul.f32.gmra.mxu0 %v262
    %v1751 = vpop.f32.mrf.mxu0
    %v1752 = vadd.f32 %v1303, %v1751
    %1753 = vmatmul.f32.gmra.mxu0 %v266
    %v1754 = vpop.f32.mrf.mxu0
    %v1755 = vadd.f32 %v1306, %v1754
    %1756 = vmatmul.f32.gmra.mxu0 %v270
    %v1757 = vpop.f32.mrf.mxu0
    %v1758 = vadd.f32 %v1309, %v1757
    %1759 = vmatmul.f32.gmra.mxu0 %v274
    %v1760 = vpop.f32.mrf.mxu0
    %v1761 = vadd.f32 %v1312, %v1760
    %1762 = vmatmul.f32.gmra.mxu0 %v278
    %v1763 = vpop.f32.mrf.mxu0
    %v1764 = vadd.f32 %v1315, %v1763
    %1765 = vmatmul.f32.gmra.mxu0 %v282
    %v1766 = vpop.f32.mrf.mxu0
    %v1767 = vadd.f32 %v1318, %v1766
    %1768 = vmatmul.f32.gmra.mxu0 %v286
    %v1769 = vpop.f32.mrf.mxu0
    %v1770 = vadd.f32 %v1321, %v1769
    %1771 = vmatmul.f32.gmra.mxu0 %v290
    %v1772 = vpop.f32.mrf.mxu0
    %v1773 = vadd.f32 %v1324, %v1772
    %1774 = vmatmul.f32.gmra.mxu0 %v294
    %v1775 = vpop.f32.mrf.mxu0
    %v1776 = vadd.f32 %v1327, %v1775
    %1777 = vmatmul.f32.gmra.mxu0 %v298
    %v1778 = vpop.f32.mrf.mxu0
    %v1779 = vadd.f32 %v1330, %v1778
    %1780 = vmatmul.f32.gmra.mxu0 %v302
    %v1781 = vpop.f32.mrf.mxu0
    %v1782 = vadd.f32 %v1333, %v1781
    %1783 = vmatmul.f32.gmra.mxu0 %v306
    %v1784 = vpop.f32.mrf.mxu0
    %v1785 = vadd.f32 %v1336, %v1784
    %1786 = vmatmul.f32.gmra.mxu0 %v310
    %v1787 = vpop.f32.mrf.mxu0
    %v1788 = vadd.f32 %v1339, %v1787
    %1789 = vmatmul.f32.gmra.mxu0 %v314
    %v1790 = vpop.f32.mrf.mxu0
    %v1791 = vadd.f32 %v1342, %v1790
    %1792 = vmatmul.f32.gmra.mxu0 %v318
    %v1793 = vpop.f32.mrf.mxu0
    %v1794 = vadd.f32 %v1345, %v1793
    %1795 = vmatmul.f32.gmra.mxu0 %v322
    %v1796 = vpop.f32.mrf.mxu0
    %v1797 = vadd.f32 %v1348, %v1796
    %1798 = vmatmul.f32.gmra.mxu0 %v326
    %v1799 = vpop.f32.mrf.mxu0
    %v1800 = vadd.f32 %v1351, %v1799
    %1801 = vmatmul.f32.gmra.mxu0 %v330
    %v1802 = vpop.f32.mrf.mxu0
    %v1803 = vadd.f32 %v1354, %v1802
    %1804 = vmatmul.f32.gmra.mxu0 %v334
    %v1805 = vpop.f32.mrf.mxu0
    %v1806 = vadd.f32 %v1357, %v1805
    %1807 = vmatmul.f32.gmra.mxu0 %v338
    %v1808 = vpop.f32.mrf.mxu0
    %v1809 = vadd.f32 %v1360, %v1808
    %1810 = vmatmul.f32.gmra.mxu0 %v342
    %v1811 = vpop.f32.mrf.mxu0
    %v1812 = vadd.f32 %v1363, %v1811
    %1813 = vmatmul.f32.gmra.mxu0 %v346
    %v1814 = vpop.f32.mrf.mxu0
    %v1815 = vadd.f32 %v1366, %v1814
    %1816 = vmatmul.f32.gmra.mxu0 %v350
    %v1817 = vpop.f32.mrf.mxu0
    %v1818 = vadd.f32 %v1369, %v1817
    %1819 = vmatmul.f32.gmra.mxu0 %v354
    %v1820 = vpop.f32.mrf.mxu0
    %v1821 = vadd.f32 %v1372, %v1820
    %1822 = vmatmul.f32.gmra.mxu0 %v358
    %v1823 = vpop.f32.mrf.mxu0
    %v1824 = vadd.f32 %v1375, %v1823
    %1825 = vmatmul.f32.gmra.mxu0 %v362
    %v1826 = vpop.f32.mrf.mxu0
    %v1827 = vadd.f32 %v1378, %v1826
    %1828 = vmatmul.f32.gmra.mxu0 %v366
    %v1829 = vpop.f32.mrf.mxu0
    %v1830 = vadd.f32 %v1381, %v1829
    %1831 = vmatmul.f32.gmra.mxu0 %v370
    %v1832 = vpop.f32.mrf.mxu0
    %v1833 = vadd.f32 %v1384, %v1832
    %1834 = vmatmul.f32.gmra.mxu0 %v374
    %v1835 = vpop.f32.mrf.mxu0
    %v1836 = vadd.f32 %v1387, %v1835
    %1837 = vmatmul.f32.gmra.mxu0 %v378
    %v1838 = vpop.f32.mrf.mxu0
    %v1839 = vadd.f32 %v1390, %v1838
    %1840 = vmatmul.f32.gmra.mxu0 %v382
    %v1841 = vpop.f32.mrf.mxu0
    %v1842 = vadd.f32 %v1393, %v1841
    %1843 = vmatmul.f32.gmra.mxu0 %v386
    %v1844 = vpop.f32.mrf.mxu0
    %v1845 = vadd.f32 %v1396, %v1844
    %1846 = vmatmul.f32.gmra.mxu0 %v390
    %v1847 = vpop.f32.mrf.mxu0
    %v1848 = vadd.f32 %v1399, %v1847
    %1849 = vmatmul.f32.gmra.mxu0 %v394
    %v1850 = vpop.f32.mrf.mxu0
    %v1851 = vadd.f32 %v1402, %v1850
    %1852 = vmatmul.f32.gmra.mxu0 %v398
    %v1853 = vpop.f32.mrf.mxu0
    %v1854 = vadd.f32 %v1405, %v1853
    %1855 = vmatmul.f32.gmra.mxu0 %v402
    %v1856 = vpop.f32.mrf.mxu0
    %v1857 = vadd.f32 %v1408, %v1856
    %1858 = vmatmul.f32.gmra.mxu0 %v406
    %v1859 = vpop.f32.mrf.mxu0
    %v1860 = vadd.f32 %v1411, %v1859
    %1861 = vmatmul.f32.gmra.mxu0 %v410
    %v1862 = vpop.f32.mrf.mxu0
    %v1863 = vadd.f32 %v1414, %v1862
    %1864 = vmatmul.f32.gmra.mxu0 %v414
    %v1865 = vpop.f32.mrf.mxu0
    %v1866 = vadd.f32 %v1417, %v1865
    %1867 = vmatmul.f32.gmra.mxu0 %v418
    %v1868 = vpop.f32.mrf.mxu0
    %v1869 = vadd.f32 %v1420, %v1868
    %1870 = vmatmul.f32.gmra.mxu0 %v422
    %v1871 = vpop.f32.mrf.mxu0
    %v1872 = vadd.f32 %v1423, %v1871
    %1873 = vmatmul.f32.gmra.mxu0 %v426
    %v1874 = vpop.f32.mrf.mxu0
    %v1875 = vadd.f32 %v1426, %v1874
    %1876 = vmatmul.f32.gmra.mxu0 %v430
    %v1877 = vpop.f32.mrf.mxu0
    %v1878 = vadd.f32 %v1429, %v1877
    %1879 = vmatmul.f32.gmra.mxu0 %v434
    %v1880 = vpop.f32.mrf.mxu0
    %v1881 = vadd.f32 %v1432, %v1880
    %1882 = vmatmul.f32.gmra.mxu0 %v438
    %v1883 = vpop.f32.mrf.mxu0
    %v1884 = vadd.f32 %v1435, %v1883
    %1885 = vmatmul.f32.gmra.mxu0 %v442
    %v1886 = vpop.f32.mrf.mxu0
    %v1887 = vadd.f32 %v1438, %v1886
    %1888 = vmatmul.f32.gmra.mxu0 %v446
    %v1889 = vpop.f32.mrf.mxu0
    %v1890 = vadd.f32 %v1441, %v1889
    %1891 = vmatmul.f32.gmra.mxu0 %v450
    %v1892 = vpop.f32.mrf.mxu0
    %v1893 = vadd.f32 %v1444, %v1892
    %1894 = vmatmul.f32.gmra.mxu0 %v454
    %v1895 = vpop.f32.mrf.mxu0
    %v1896 = vadd.f32 %v1447, %v1895
    %1897 = vmatmul.f32.gmra.mxu0 %v458
    %v1898 = vpop.f32.mrf.mxu0
    %v1899 = vadd.f32 %v1450, %v1898
    %1900 = vmatmul.f32.gmra.mxu0 %v462
    %v1901 = vpop.f32.mrf.mxu0
    %v1902 = vadd.f32 %v1453, %v1901
    %1903 = vmatmul.f32.gmra.mxu0 %v466
    %v1904 = vpop.f32.mrf.mxu0
    %v1905 = vadd.f32 %v1456, %v1904
    %1906 = vmatmul.f32.gmra.mxu0 %v470
    %v1907 = vpop.f32.mrf.mxu0
    %v1908 = vadd.f32 %v1459, %v1907
    %1909 = vmatmul.f32.gmra.mxu0 %v474
    %v1910 = vpop.f32.mrf.mxu0
    %v1911 = vadd.f32 %v1462, %v1910
    %1912 = vmatmul.f32.gmra.mxu0 %v478
    %v1913 = vpop.f32.mrf.mxu0
    %v1914 = vadd.f32 %v1465, %v1913
    %1915 = vmatmul.f32.gmra.mxu0 %v482
    %v1916 = vpop.f32.mrf.mxu0
    %v1917 = vadd.f32 %v1468, %v1916
    %1918 = vmatmul.f32.gmra.mxu0 %v486
    %v1919 = vpop.f32.mrf.mxu0
    %v1920 = vadd.f32 %v1471, %v1919
    %1921 = vmatmul.f32.gmra.mxu0 %v490
    %v1922 = vpop.f32.mrf.mxu0
    %v1923 = vadd.f32 %v1474, %v1922
    %1924 = vmatmul.f32.gmra.mxu0 %v494
    %v1925 = vpop.f32.mrf.mxu0
    %v1926 = vadd.f32 %v1477, %v1925
    %1927 = vmatmul.f32.gmra.mxu0 %v498
    %v1928 = vpop.f32.mrf.mxu0
    %v1929 = vadd.f32 %v1480, %v1928
    %1930 = vmatmul.f32.gmra.mxu0 %v502
    %v1931 = vpop.f32.mrf.mxu0
    %v1932 = vadd.f32 %v1483, %v1931
    %1933 = vmatmul.f32.gmra.mxu0 %v506
    %v1934 = vpop.f32.mrf.mxu0
    %v1935 = vadd.f32 %v1486, %v1934
    %1936 = vmatmul.f32.gmra.mxu0 %v510
    %v1937 = vpop.f32.mrf.mxu0
    %v1938 = vadd.f32 %v1489, %v1937
    %1939 = vmatmul.f32.gmra.mxu0 %v514
    %v1940 = vpop.f32.mrf.mxu0
    %v1941 = vadd.f32 %v1492, %v1940
    %1942 = vmatmul.f32.gmra.mxu0 %v518
    %v1943 = vpop.f32.mrf.mxu0
    %v1944 = vadd.f32 %v1495, %v1943
    %1945 = vmatmul.f32.gmra.mxu0 %v522
    %v1946 = vpop.f32.mrf.mxu0
    %v1947 = vadd.f32 %v1498, %v1946
    %1948 = vmatmul.f32.gmra.mxu0 %v526
    %v1949 = vpop.f32.mrf.mxu0
    %v1950 = vadd.f32 %v1501, %v1949
    %1951 = vmatmul.f32.gmra.mxu0 %v530
    %v1952 = vpop.f32.mrf.mxu0
    %v1953 = vadd.f32 %v1504, %v1952
    %1954 = vmatmul.f32.gmra.mxu0 %v534
    %v1955 = vpop.f32.mrf.mxu0
    %v1956 = vadd.f32 %v1507, %v1955
    %1957 = vmatmul.f32.gmra.mxu0 %v538
    %v1958 = vpop.f32.mrf.mxu0
    %v1959 = vadd.f32 %v1510, %v1958
    %1960 = vmatmul.f32.gmra.mxu0 %v542
    %v1961 = vpop.f32.mrf.mxu0
    %v1962 = vadd.f32 %v1513, %v1961
    %1963 = vmatmul.f32.gmra.mxu0 %v546
    %v1964 = vpop.f32.mrf.mxu0
    %v1965 = vadd.f32 %v1516, %v1964
    %1966 = vmatmul.f32.gmra.mxu0 %v550
    %v1967 = vpop.f32.mrf.mxu0
    %v1968 = vadd.f32 %v1519, %v1967
    %1969 = vmatmul.f32.gmra.mxu0 %v554
    %v1970 = vpop.f32.mrf.mxu0
    %v1971 = vadd.f32 %v1522, %v1970
    %1972 = vmatmul.f32.gmra.mxu0 %v558
    %v1973 = vpop.f32.mrf.mxu0
    %v1974 = vadd.f32 %v1525, %v1973
    %1975 = vmatmul.f32.gmra.mxu0 %v562
    %v1976 = vpop.f32.mrf.mxu0
    %v1977 = vadd.f32 %v1528, %v1976
    %1978 = vmatmul.f32.gmra.mxu0 %v566
    %v1979 = vpop.f32.mrf.mxu0
    %v1980 = vadd.f32 %v1531, %v1979
    %1981 = vmatmul.f32.gmra.mxu0 %v570
    %v1982 = vpop.f32.mrf.mxu0
    %v1983 = vadd.f32 %v1534, %v1982
    %1984 = vmatmul.f32.gmra.mxu0 %v574
    %v1985 = vpop.f32.mrf.mxu0
    %v1986 = vadd.f32 %v1537, %v1985
    %1987 = vmatmul.f32.gmra.mxu0 %v578
    %v1988 = vpop.f32.mrf.mxu0
    %v1989 = vadd.f32 %v1540, %v1988
    %1990 = vmatmul.f32.gmra.mxu0 %v582
    %v1991 = vpop.f32.mrf.mxu0
    %v1992 = vadd.f32 %v1543, %v1991
    %1993 = vmatmul.f32.gmra.mxu0 %v586
    %v1994 = vpop.f32.mrf.mxu0
    %v1995 = vadd.f32 %v1546, %v1994
    %1996 = vmatmul.f32.gmra.mxu0 %v590
    %v1997 = vpop.f32.mrf.mxu0
    %v1998 = vadd.f32 %v1549, %v1997
    %1999 = vmatmul.f32.gmra.mxu0 %v594
    %v2000 = vpop.f32.mrf.mxu0
    %v2001 = vadd.f32 %v1552, %v2000
    %2002 = vmatmul.f32.gmra.mxu0 %v598
    %v2003 = vpop.f32.mrf.mxu0
    %v2004 = vadd.f32 %v1555, %v2003
    %2005 = vmatmul.f32.gmra.mxu0 %v602
    %v2006 = vpop.f32.mrf.mxu0
    %v2007 = vadd.f32 %v1558, %v2006
    %2008 = vmatmul.f32.gmra.mxu0 %v606
    %v2009 = vpop.f32.mrf.mxu0
    %v2010 = vadd.f32 %v1561, %v2009
    %2011 = vmatmul.f32.gmra.mxu0 %v610
    %v2012 = vpop.f32.mrf.mxu0
    %v2013 = vadd.f32 %v1564, %v2012
    %2014 = vmatmul.f32.gmra.mxu0 %v614
    %v2015 = vpop.f32.mrf.mxu0
    %v2016 = vadd.f32 %v1567, %v2015
    %2017 = vmatmul.f32.gmra.mxu0 %v618
    %v2018 = vpop.f32.mrf.mxu0
    %v2019 = vadd.f32 %v1570, %v2018
    %2020 = vmatmul.f32.gmra.mxu0 %v622
    %v2021 = vpop.f32.mrf.mxu0
    %v2022 = vadd.f32 %v1573, %v2021
    %2023 = vmatmul.f32.gmra.mxu0 %v626
    %v2024 = vpop.f32.mrf.mxu0
    %v2025 = vadd.f32 %v1576, %v2024
    %2026 = vmatmul.f32.gmra.mxu0 %v630
    %v2027 = vpop.f32.mrf.mxu0
    %v2028 = vadd.f32 %v1579, %v2027
    %2029 = vmatmul.f32.gmra.mxu0 %v634
    %v2030 = vpop.f32.mrf.mxu0
    %v2031 = vadd.f32 %v1582, %v2030
    %2032 = vmatmul.f32.gmra.mxu0 %v638
    %v2033 = vpop.f32.mrf.mxu0
    %v2034 = vadd.f32 %v1585, %v2033
    %2035 = vmatmul.f32.gmra.mxu0 %v642
    %v2036 = vpop.f32.mrf.mxu0
    %v2037 = vadd.f32 %v1588, %v2036
    %2038 = vmatmul.f32.gmra.mxu0 %v646
    %v2039 = vpop.f32.mrf.mxu0
    %v2040 = vadd.f32 %v1591, %v2039
    %2041 = vmatmul.f32.gmra.mxu0 %v650
    %v2042 = vpop.f32.mrf.mxu0
    %v2043 = vadd.f32 %v1594, %v2042
    %2044 = vmatmul.f32.gmra.mxu0 %v654
    %v2045 = vpop.f32.mrf.mxu0
    %v2046 = vadd.f32 %v1597, %v2045
    %2047 = vmatmul.f32.gmra.mxu0 %v658
    %v2048 = vpop.f32.mrf.mxu0
    %v2049 = vadd.f32 %v1600, %v2048
    %2050 = vmatmul.f32.gmra.mxu0 %v662
    %v2051 = vpop.f32.mrf.mxu0
    %v2052 = vadd.f32 %v1603, %v2051
    %2053 = vmatmul.f32.gmra.mxu0 %v666
    %v2054 = vpop.f32.mrf.mxu0
    %v2055 = vadd.f32 %v1606, %v2054
    %2056 = vmatmul.f32.gmra.mxu0 %v670
    %v2057 = vpop.f32.mrf.mxu0
    %v2058 = vadd.f32 %v1609, %v2057
    %2059 = vmatmul.f32.gmra.mxu0 %v674
    %v2060 = vpop.f32.mrf.mxu0
    %v2061 = vadd.f32 %v1612, %v2060
    %2062 = vmatmul.f32.gmra.mxu0 %v678
    %v2063 = vpop.f32.mrf.mxu0
    %v2064 = vadd.f32 %v1615, %v2063
    %2065 = vmatmul.f32.gmra.mxu0 %v682
    %v2066 = vpop.f32.mrf.mxu0
    %v2067 = vadd.f32 %v1618, %v2066
    %2068 = vmatmul.f32.gmra.mxu0 %v686
    %v2069 = vpop.f32.mrf.mxu0
    %v2070 = vadd.f32 %v1621, %v2069
    %2071 = vmatmul.f32.gmra.mxu0 %v690
    %v2072 = vpop.f32.mrf.mxu0
    %v2073 = vadd.f32 %v1624, %v2072
    %2074 = vmatmul.f32.gmra.mxu0 %v694
    %v2075 = vpop.f32.mrf.mxu0
    %v2076 = vadd.f32 %v1627, %v2075
    %2077 = vmatmul.f32.gmra.mxu0 %v698
    %v2078 = vpop.f32.mrf.mxu0
    %v2079 = vadd.f32 %v1630, %v2078
    %2080 = vmatmul.f32.gmra.mxu0 %v702
    %v2081 = vpop.f32.mrf.mxu0
    %v2082 = vadd.f32 %v1633, %v2081
    %2083 = vmatmul.f32.gmra.mxu0 %v706
    %v2084 = vpop.f32.mrf.mxu0
    %v2085 = vadd.f32 %v1636, %v2084
    %2086 = vmatmul.f32.gmra.mxu0 %v710
    %v2087 = vpop.f32.mrf.mxu0
    %v2088 = vadd.f32 %v1639, %v2087
    %2089 = vmatmul.f32.gmra.mxu0 %v714
    %v2090 = vpop.f32.mrf.mxu0
    %v2091 = vadd.f32 %v1642, %v2090
    %2092 = vmatmul.f32.gmra.mxu0 %v718
    %v2093 = vpop.f32.mrf.mxu0
    %v2094 = vadd.f32 %v1645, %v2093
    %2095 = vmatmul.f32.gmra.mxu0 %v722
    %v2096 = vpop.f32.mrf.mxu0
    %v2097 = vadd.f32 %v1648, %v2096
    %2098 = vmatmul.f32.gmra.mxu0 %v726
    %v2099 = vpop.f32.mrf.mxu0
    %v2100 = vadd.f32 %v1651, %v2099
    %2101 = vmatmul.f32.gmra.mxu0 %v730
    %v2102 = vpop.f32.mrf.mxu0
    %v2103 = vadd.f32 %v1654, %v2102
    %2104 = vmatmul.f32.gmra.mxu0 %v734
    %v2105 = vpop.f32.mrf.mxu0
    %v2106 = vadd.f32 %v1657, %v2105
    %2107 = vmatmul.f32.gmra.mxu0 %v738
    %v2108 = vpop.f32.mrf.mxu0
    %v2109 = vadd.f32 %v1660, %v2108
    %2110 = vmatmul.f32.gmra.mxu0 %v742
    %v2111 = vpop.f32.mrf.mxu0
    %v2112 = vadd.f32 %v1663, %v2111
    %2113 = vmatmul.f32.gmra.mxu0 %v746
    %v2114 = vpop.f32.mrf.mxu0
    %v2115 = vadd.f32 %v1666, %v2114
    %2116 = vmatmul.f32.gmra.mxu0 %v750
    %v2117 = vpop.f32.mrf.mxu0
    %v2118 = vadd.f32 %v1669, %v2117
    %2119 = vmatmul.f32.gmra.mxu0 %v754
    %v2120 = vpop.f32.mrf.mxu0
    %v2121 = vadd.f32 %v1672, %v2120
    %2122 = vmatmul.f32.gmra.mxu0 %v758
    %v2123 = vpop.f32.mrf.mxu0
    %v2124 = vadd.f32 %v1675, %v2123
    %2125 = vmatmul.f32.gmra.mxu0 %v762
    %v2126 = vpop.f32.mrf.mxu0
    %v2127 = vadd.f32 %v1678, %v2126
    %2128 = vmatmul.f32.gmra.mxu0 %v766
    %v2129 = vpop.f32.mrf.mxu0
    %v2130 = vadd.f32 %v1681, %v2129
    %2131 = vmatmul.f32.gmra.mxu0 %v770
    %v2132 = vpop.f32.mrf.mxu0
    %v2133 = vadd.f32 %v1684, %v2132
    %2134 = vmatmul.f32.gmra.mxu0 %v774
    %v2135 = vpop.f32.mrf.mxu0
    %v2136 = vadd.f32 %v1687, %v2135
    %2137 = vmatmul.f32.gmra.mxu0 %v778
    %v2138 = vpop.f32.mrf.mxu0
    %v2139 = vadd.f32 %v1690, %v2138
    %2140 = vmatmul.f32.gmra.mxu0 %v782
    %v2141 = vpop.f32.mrf.mxu0
    %v2142 = vadd.f32 %v1693, %v2141
    %2143 = vmatmul.f32.gmra.mxu0 %v786
    %v2144 = vpop.f32.mrf.mxu0
    %v2145 = vadd.f32 %v1696, %v2144
    %2146 = vmatmul.f32.gmra.mxu0 %v790
    %v2147 = vpop.f32.mrf.mxu0
    %v2148 = vadd.f32 %v1699, %v2147
    %2149 = vmatmul.f32.gmra.mxu0 %v794
    %v2150 = vpop.f32.mrf.mxu0
    %v2151 = vadd.f32 %v1702, %v2150
    %2152 = vmatmul.f32.gmra.mxu0 %v798
    %v2153 = vpop.f32.mrf.mxu0
    %v2154 = vadd.f32 %v1705, %v2153
    %2155 = vmatmul.f32.gmra.mxu0 %v802
    %v2156 = vpop.f32.mrf.mxu0
    %v2157 = vadd.f32 %v1708, %v2156
    %2158 = vmatmul.f32.gmra.mxu0 %v806
    %v2159 = vpop.f32.mrf.mxu0
    %v2160 = vadd.f32 %v1711, %v2159
    %2161 = vmatmul.f32.gmra.mxu0 %v810
    %v2162 = vpop.f32.mrf.mxu0
    %v2163 = vadd.f32 %v1714, %v2162
    %2164 = vmatmul.f32.gmra.mxu0 %v814
    %v2165 = vpop.f32.mrf.mxu0
    %v2166 = vadd.f32 %v1717, %v2165
    %2167 = vmatmul.f32.gmra.mxu0 %v818
    %v2168 = vpop.f32.mrf.mxu0
    %v2169 = vadd.f32 %v1720, %v2168
    %2170 = vmatmul.f32.gmra.mxu0 %v822
    %v2171 = vpop.f32.mrf.mxu0
    %v2172 = vadd.f32 %v1723, %v2171
    %2173 = vmatmul.f32.gmra.mxu0 %v826
    %v2174 = vpop.f32.mrf.mxu0
    %v2175 = vadd.f32 %v1726, %v2174
    %2176 = vmatmul.f32.gmra.mxu0 %v830
    %v2177 = vpop.f32.mrf.mxu0
    %v2178 = vadd.f32 %v1729, %v2177
    %2179 = vmatmul.f32.gmra.mxu0 %v834
    %v2180 = vpop.f32.mrf.mxu0
    %v2181 = vadd.f32 %v1732, %v2180
    %2182 = vdwg.mxu0
    %2183 = vmatpush.msra.mxu0 %v259
    %2184 = vmatpush.msra.mxu0 %v258
    %2185 = vmatpush.msra.mxu0 %v257
    %2186 = vmatpush.msra.mxu0 %v256
    %2187 = vmatpush.msra.mxu0 %v255
    %2188 = vmatpush.msra.mxu0 %v254
    %2189 = vmatpush.msra.mxu0 %v253
    %2190 = vmatpush.msra.mxu0 %v252
    %2191 = vmatpush.msra.mxu0 %v251
    %2192 = vmatpush.msra.mxu0 %v250
    %2193 = vmatpush.msra.mxu0 %v249
    %2194 = vmatpush.msra.mxu0 %v248
    %2195 = vmatpush.msra.mxu0 %v247
    %2196 = vmatpush.msra.mxu0 %v246
    %2197 = vmatpush.msra.mxu0 %v245
    %2198 = vmatpush.msra.mxu0 %v244
    %2199 = vmatmul.f32.gmra.mxu0 %v263
    %v2200 = vpop.f32.mrf.mxu0
    %v2201 = vadd.f32 %v1752, %v2200
    %2202 = vmatmul.f32.gmra.mxu0 %v267
    %v2203 = vpop.f32.mrf.mxu0
    %v2204 = vadd.f32 %v1755, %v2203
    %2205 = vmatmul.f32.gmra.mxu0 %v271
    %v2206 = vpop.f32.mrf.mxu0
    %v2207 = vadd.f32 %v1758, %v2206
    %2208 = vmatmul.f32.gmra.mxu0 %v275
    %v2209 = vpop.f32.mrf.mxu0
    %v2210 = vadd.f32 %v1761, %v2209
    %2211 = vmatmul.f32.gmra.mxu0 %v279
    %v2212 = vpop.f32.mrf.mxu0
    %v2213 = vadd.f32 %v1764, %v2212
    %2214 = vmatmul.f32.gmra.mxu0 %v283
    %v2215 = vpop.f32.mrf.mxu0
    %v2216 = vadd.f32 %v1767, %v2215
    %2217 = vmatmul.f32.gmra.mxu0 %v287
    %v2218 = vpop.f32.mrf.mxu0
    %v2219 = vadd.f32 %v1770, %v2218
    %2220 = vmatmul.f32.gmra.mxu0 %v291
    %v2221 = vpop.f32.mrf.mxu0
    %v2222 = vadd.f32 %v1773, %v2221
    %2223 = vmatmul.f32.gmra.mxu0 %v295
    %v2224 = vpop.f32.mrf.mxu0
    %v2225 = vadd.f32 %v1776, %v2224
    %2226 = vmatmul.f32.gmra.mxu0 %v299
    %v2227 = vpop.f32.mrf.mxu0
    %v2228 = vadd.f32 %v1779, %v2227
    %2229 = vmatmul.f32.gmra.mxu0 %v303
    %v2230 = vpop.f32.mrf.mxu0
    %v2231 = vadd.f32 %v1782, %v2230
    %2232 = vmatmul.f32.gmra.mxu0 %v307
    %v2233 = vpop.f32.mrf.mxu0
    %v2234 = vadd.f32 %v1785, %v2233
    %2235 = vmatmul.f32.gmra.mxu0 %v311
    %v2236 = vpop.f32.mrf.mxu0
    %v2237 = vadd.f32 %v1788, %v2236
    %2238 = vmatmul.f32.gmra.mxu0 %v315
    %v2239 = vpop.f32.mrf.mxu0
    %v2240 = vadd.f32 %v1791, %v2239
    %2241 = vmatmul.f32.gmra.mxu0 %v319
    %v2242 = vpop.f32.mrf.mxu0
    %v2243 = vadd.f32 %v1794, %v2242
    %2244 = vmatmul.f32.gmra.mxu0 %v323
    %v2245 = vpop.f32.mrf.mxu0
    %v2246 = vadd.f32 %v1797, %v2245
    %2247 = vmatmul.f32.gmra.mxu0 %v327
    %v2248 = vpop.f32.mrf.mxu0
    %v2249 = vadd.f32 %v1800, %v2248
    %2250 = vmatmul.f32.gmra.mxu0 %v331
    %v2251 = vpop.f32.mrf.mxu0
    %v2252 = vadd.f32 %v1803, %v2251
    %2253 = vmatmul.f32.gmra.mxu0 %v335
    %v2254 = vpop.f32.mrf.mxu0
    %v2255 = vadd.f32 %v1806, %v2254
    %2256 = vmatmul.f32.gmra.mxu0 %v339
    %v2257 = vpop.f32.mrf.mxu0
    %v2258 = vadd.f32 %v1809, %v2257
    %2259 = vmatmul.f32.gmra.mxu0 %v343
    %v2260 = vpop.f32.mrf.mxu0
    %v2261 = vadd.f32 %v1812, %v2260
    %2262 = vmatmul.f32.gmra.mxu0 %v347
    %v2263 = vpop.f32.mrf.mxu0
    %v2264 = vadd.f32 %v1815, %v2263
    %2265 = vmatmul.f32.gmra.mxu0 %v351
    %v2266 = vpop.f32.mrf.mxu0
    %v2267 = vadd.f32 %v1818, %v2266
    %2268 = vmatmul.f32.gmra.mxu0 %v355
    %v2269 = vpop.f32.mrf.mxu0
    %v2270 = vadd.f32 %v1821, %v2269
    %2271 = vmatmul.f32.gmra.mxu0 %v359
    %v2272 = vpop.f32.mrf.mxu0
    %v2273 = vadd.f32 %v1824, %v2272
    %2274 = vmatmul.f32.gmra.mxu0 %v363
    %v2275 = vpop.f32.mrf.mxu0
    %v2276 = vadd.f32 %v1827, %v2275
    %2277 = vmatmul.f32.gmra.mxu0 %v367
    %v2278 = vpop.f32.mrf.mxu0
    %v2279 = vadd.f32 %v1830, %v2278
    %2280 = vmatmul.f32.gmra.mxu0 %v371
    %v2281 = vpop.f32.mrf.mxu0
    %v2282 = vadd.f32 %v1833, %v2281
    %2283 = vmatmul.f32.gmra.mxu0 %v375
    %v2284 = vpop.f32.mrf.mxu0
    %v2285 = vadd.f32 %v1836, %v2284
    %2286 = vmatmul.f32.gmra.mxu0 %v379
    %v2287 = vpop.f32.mrf.mxu0
    %v2288 = vadd.f32 %v1839, %v2287
    %2289 = vmatmul.f32.gmra.mxu0 %v383
    %v2290 = vpop.f32.mrf.mxu0
    %v2291 = vadd.f32 %v1842, %v2290
    %2292 = vmatmul.f32.gmra.mxu0 %v387
    %v2293 = vpop.f32.mrf.mxu0
    %v2294 = vadd.f32 %v1845, %v2293
    %2295 = vmatmul.f32.gmra.mxu0 %v391
    %v2296 = vpop.f32.mrf.mxu0
    %v2297 = vadd.f32 %v1848, %v2296
    %2298 = vmatmul.f32.gmra.mxu0 %v395
    %v2299 = vpop.f32.mrf.mxu0
    %v2300 = vadd.f32 %v1851, %v2299
    %2301 = vmatmul.f32.gmra.mxu0 %v399
    %v2302 = vpop.f32.mrf.mxu0
    %v2303 = vadd.f32 %v1854, %v2302
    %2304 = vmatmul.f32.gmra.mxu0 %v403
    %v2305 = vpop.f32.mrf.mxu0
    %v2306 = vadd.f32 %v1857, %v2305
    %2307 = vmatmul.f32.gmra.mxu0 %v407
    %v2308 = vpop.f32.mrf.mxu0
    %v2309 = vadd.f32 %v1860, %v2308
    %2310 = vmatmul.f32.gmra.mxu0 %v411
    %v2311 = vpop.f32.mrf.mxu0
    %v2312 = vadd.f32 %v1863, %v2311
    %2313 = vmatmul.f32.gmra.mxu0 %v415
    %v2314 = vpop.f32.mrf.mxu0
    %v2315 = vadd.f32 %v1866, %v2314
    %2316 = vmatmul.f32.gmra.mxu0 %v419
    %v2317 = vpop.f32.mrf.mxu0
    %v2318 = vadd.f32 %v1869, %v2317
    %2319 = vmatmul.f32.gmra.mxu0 %v423
    %v2320 = vpop.f32.mrf.mxu0
    %v2321 = vadd.f32 %v1872, %v2320
    %2322 = vmatmul.f32.gmra.mxu0 %v427
    %v2323 = vpop.f32.mrf.mxu0
    %v2324 = vadd.f32 %v1875, %v2323
    %2325 = vmatmul.f32.gmra.mxu0 %v431
    %v2326 = vpop.f32.mrf.mxu0
    %v2327 = vadd.f32 %v1878, %v2326
    %2328 = vmatmul.f32.gmra.mxu0 %v435
    %v2329 = vpop.f32.mrf.mxu0
    %v2330 = vadd.f32 %v1881, %v2329
    %2331 = vmatmul.f32.gmra.mxu0 %v439
    %v2332 = vpop.f32.mrf.mxu0
    %v2333 = vadd.f32 %v1884, %v2332
    %2334 = vmatmul.f32.gmra.mxu0 %v443
    %v2335 = vpop.f32.mrf.mxu0
    %v2336 = vadd.f32 %v1887, %v2335
    %2337 = vmatmul.f32.gmra.mxu0 %v447
    %v2338 = vpop.f32.mrf.mxu0
    %v2339 = vadd.f32 %v1890, %v2338
    %2340 = vmatmul.f32.gmra.mxu0 %v451
    %v2341 = vpop.f32.mrf.mxu0
    %v2342 = vadd.f32 %v1893, %v2341
    %2343 = vmatmul.f32.gmra.mxu0 %v455
    %v2344 = vpop.f32.mrf.mxu0
    %v2345 = vadd.f32 %v1896, %v2344
    %2346 = vmatmul.f32.gmra.mxu0 %v459
    %v2347 = vpop.f32.mrf.mxu0
    %v2348 = vadd.f32 %v1899, %v2347
    %2349 = vmatmul.f32.gmra.mxu0 %v463
    %v2350 = vpop.f32.mrf.mxu0
    %v2351 = vadd.f32 %v1902, %v2350
    %2352 = vmatmul.f32.gmra.mxu0 %v467
    %v2353 = vpop.f32.mrf.mxu0
    %v2354 = vadd.f32 %v1905, %v2353
    %2355 = vmatmul.f32.gmra.mxu0 %v471
    %v2356 = vpop.f32.mrf.mxu0
    %v2357 = vadd.f32 %v1908, %v2356
    %2358 = vmatmul.f32.gmra.mxu0 %v475
    %v2359 = vpop.f32.mrf.mxu0
    %v2360 = vadd.f32 %v1911, %v2359
    %2361 = vmatmul.f32.gmra.mxu0 %v479
    %v2362 = vpop.f32.mrf.mxu0
    %v2363 = vadd.f32 %v1914, %v2362
    %2364 = vmatmul.f32.gmra.mxu0 %v483
    %v2365 = vpop.f32.mrf.mxu0
    %v2366 = vadd.f32 %v1917, %v2365
    %2367 = vmatmul.f32.gmra.mxu0 %v487
    %v2368 = vpop.f32.mrf.mxu0
    %v2369 = vadd.f32 %v1920, %v2368
    %2370 = vmatmul.f32.gmra.mxu0 %v491
    %v2371 = vpop.f32.mrf.mxu0
    %v2372 = vadd.f32 %v1923, %v2371
    %2373 = vmatmul.f32.gmra.mxu0 %v495
    %v2374 = vpop.f32.mrf.mxu0
    %v2375 = vadd.f32 %v1926, %v2374
    %2376 = vmatmul.f32.gmra.mxu0 %v499
    %v2377 = vpop.f32.mrf.mxu0
    %v2378 = vadd.f32 %v1929, %v2377
    %2379 = vmatmul.f32.gmra.mxu0 %v503
    %v2380 = vpop.f32.mrf.mxu0
    %v2381 = vadd.f32 %v1932, %v2380
    %2382 = vmatmul.f32.gmra.mxu0 %v507
    %v2383 = vpop.f32.mrf.mxu0
    %v2384 = vadd.f32 %v1935, %v2383
    %2385 = vmatmul.f32.gmra.mxu0 %v511
    %v2386 = vpop.f32.mrf.mxu0
    %v2387 = vadd.f32 %v1938, %v2386
    %2388 = vmatmul.f32.gmra.mxu0 %v515
    %v2389 = vpop.f32.mrf.mxu0
    %v2390 = vadd.f32 %v1941, %v2389
    %2391 = vmatmul.f32.gmra.mxu0 %v519
    %v2392 = vpop.f32.mrf.mxu0
    %v2393 = vadd.f32 %v1944, %v2392
    %2394 = vmatmul.f32.gmra.mxu0 %v523
    %v2395 = vpop.f32.mrf.mxu0
    %v2396 = vadd.f32 %v1947, %v2395
    %2397 = vmatmul.f32.gmra.mxu0 %v527
    %v2398 = vpop.f32.mrf.mxu0
    %v2399 = vadd.f32 %v1950, %v2398
    %2400 = vmatmul.f32.gmra.mxu0 %v531
    %v2401 = vpop.f32.mrf.mxu0
    %v2402 = vadd.f32 %v1953, %v2401
    %2403 = vmatmul.f32.gmra.mxu0 %v535
    %v2404 = vpop.f32.mrf.mxu0
    %v2405 = vadd.f32 %v1956, %v2404
    %2406 = vmatmul.f32.gmra.mxu0 %v539
    %v2407 = vpop.f32.mrf.mxu0
    %v2408 = vadd.f32 %v1959, %v2407
    %2409 = vmatmul.f32.gmra.mxu0 %v543
    %v2410 = vpop.f32.mrf.mxu0
    %v2411 = vadd.f32 %v1962, %v2410
    %2412 = vmatmul.f32.gmra.mxu0 %v547
    %v2413 = vpop.f32.mrf.mxu0
    %v2414 = vadd.f32 %v1965, %v2413
    %2415 = vmatmul.f32.gmra.mxu0 %v551
    %v2416 = vpop.f32.mrf.mxu0
    %v2417 = vadd.f32 %v1968, %v2416
    %2418 = vmatmul.f32.gmra.mxu0 %v555
    %v2419 = vpop.f32.mrf.mxu0
    %v2420 = vadd.f32 %v1971, %v2419
    %2421 = vmatmul.f32.gmra.mxu0 %v559
    %v2422 = vpop.f32.mrf.mxu0
    %v2423 = vadd.f32 %v1974, %v2422
    %2424 = vmatmul.f32.gmra.mxu0 %v563
    %v2425 = vpop.f32.mrf.mxu0
    %v2426 = vadd.f32 %v1977, %v2425
    %2427 = vmatmul.f32.gmra.mxu0 %v567
    %v2428 = vpop.f32.mrf.mxu0
    %v2429 = vadd.f32 %v1980, %v2428
    %2430 = vmatmul.f32.gmra.mxu0 %v571
    %v2431 = vpop.f32.mrf.mxu0
    %v2432 = vadd.f32 %v1983, %v2431
    %2433 = vmatmul.f32.gmra.mxu0 %v575
    %v2434 = vpop.f32.mrf.mxu0
    %v2435 = vadd.f32 %v1986, %v2434
    %2436 = vmatmul.f32.gmra.mxu0 %v579
    %v2437 = vpop.f32.mrf.mxu0
    %v2438 = vadd.f32 %v1989, %v2437
    %2439 = vmatmul.f32.gmra.mxu0 %v583
    %v2440 = vpop.f32.mrf.mxu0
    %v2441 = vadd.f32 %v1992, %v2440
    %2442 = vmatmul.f32.gmra.mxu0 %v587
    %v2443 = vpop.f32.mrf.mxu0
    %v2444 = vadd.f32 %v1995, %v2443
    %2445 = vmatmul.f32.gmra.mxu0 %v591
    %v2446 = vpop.f32.mrf.mxu0
    %v2447 = vadd.f32 %v1998, %v2446
    %2448 = vmatmul.f32.gmra.mxu0 %v595
    %v2449 = vpop.f32.mrf.mxu0
    %v2450 = vadd.f32 %v2001, %v2449
    %2451 = vmatmul.f32.gmra.mxu0 %v599
    %v2452 = vpop.f32.mrf.mxu0
    %v2453 = vadd.f32 %v2004, %v2452
    %2454 = vmatmul.f32.gmra.mxu0 %v603
    %v2455 = vpop.f32.mrf.mxu0
    %v2456 = vadd.f32 %v2007, %v2455
    %2457 = vmatmul.f32.gmra.mxu0 %v607
    %v2458 = vpop.f32.mrf.mxu0
    %v2459 = vadd.f32 %v2010, %v2458
    %2460 = vmatmul.f32.gmra.mxu0 %v611
    %v2461 = vpop.f32.mrf.mxu0
    %v2462 = vadd.f32 %v2013, %v2461
    %2463 = vmatmul.f32.gmra.mxu0 %v615
    %v2464 = vpop.f32.mrf.mxu0
    %v2465 = vadd.f32 %v2016, %v2464
    %2466 = vmatmul.f32.gmra.mxu0 %v619
    %v2467 = vpop.f32.mrf.mxu0
    %v2468 = vadd.f32 %v2019, %v2467
    %2469 = vmatmul.f32.gmra.mxu0 %v623
    %v2470 = vpop.f32.mrf.mxu0
    %v2471 = vadd.f32 %v2022, %v2470
    %2472 = vmatmul.f32.gmra.mxu0 %v627
    %v2473 = vpop.f32.mrf.mxu0
    %v2474 = vadd.f32 %v2025, %v2473
    %2475 = vmatmul.f32.gmra.mxu0 %v631
    %v2476 = vpop.f32.mrf.mxu0
    %v2477 = vadd.f32 %v2028, %v2476
    %2478 = vmatmul.f32.gmra.mxu0 %v635
    %v2479 = vpop.f32.mrf.mxu0
    %v2480 = vadd.f32 %v2031, %v2479
    %2481 = vmatmul.f32.gmra.mxu0 %v639
    %v2482 = vpop.f32.mrf.mxu0
    %v2483 = vadd.f32 %v2034, %v2482
    %2484 = vmatmul.f32.gmra.mxu0 %v643
    %v2485 = vpop.f32.mrf.mxu0
    %v2486 = vadd.f32 %v2037, %v2485
    %2487 = vmatmul.f32.gmra.mxu0 %v647
    %v2488 = vpop.f32.mrf.mxu0
    %v2489 = vadd.f32 %v2040, %v2488
    %2490 = vmatmul.f32.gmra.mxu0 %v651
    %v2491 = vpop.f32.mrf.mxu0
    %v2492 = vadd.f32 %v2043, %v2491
    %2493 = vmatmul.f32.gmra.mxu0 %v655
    %v2494 = vpop.f32.mrf.mxu0
    %v2495 = vadd.f32 %v2046, %v2494
    %2496 = vmatmul.f32.gmra.mxu0 %v659
    %v2497 = vpop.f32.mrf.mxu0
    %v2498 = vadd.f32 %v2049, %v2497
    %2499 = vmatmul.f32.gmra.mxu0 %v663
    %v2500 = vpop.f32.mrf.mxu0
    %v2501 = vadd.f32 %v2052, %v2500
    %2502 = vmatmul.f32.gmra.mxu0 %v667
    %v2503 = vpop.f32.mrf.mxu0
    %v2504 = vadd.f32 %v2055, %v2503
    %2505 = vmatmul.f32.gmra.mxu0 %v671
    %v2506 = vpop.f32.mrf.mxu0
    %v2507 = vadd.f32 %v2058, %v2506
    %2508 = vmatmul.f32.gmra.mxu0 %v675
    %v2509 = vpop.f32.mrf.mxu0
    %v2510 = vadd.f32 %v2061, %v2509
    %2511 = vmatmul.f32.gmra.mxu0 %v679
    %v2512 = vpop.f32.mrf.mxu0
    %v2513 = vadd.f32 %v2064, %v2512
    %2514 = vmatmul.f32.gmra.mxu0 %v683
    %v2515 = vpop.f32.mrf.mxu0
    %v2516 = vadd.f32 %v2067, %v2515
    %2517 = vmatmul.f32.gmra.mxu0 %v687
    %v2518 = vpop.f32.mrf.mxu0
    %v2519 = vadd.f32 %v2070, %v2518
    %2520 = vmatmul.f32.gmra.mxu0 %v691
    %v2521 = vpop.f32.mrf.mxu0
    %v2522 = vadd.f32 %v2073, %v2521
    %2523 = vmatmul.f32.gmra.mxu0 %v695
    %v2524 = vpop.f32.mrf.mxu0
    %v2525 = vadd.f32 %v2076, %v2524
    %2526 = vmatmul.f32.gmra.mxu0 %v699
    %v2527 = vpop.f32.mrf.mxu0
    %v2528 = vadd.f32 %v2079, %v2527
    %2529 = vmatmul.f32.gmra.mxu0 %v703
    %v2530 = vpop.f32.mrf.mxu0
    %v2531 = vadd.f32 %v2082, %v2530
    %2532 = vmatmul.f32.gmra.mxu0 %v707
    %v2533 = vpop.f32.mrf.mxu0
    %v2534 = vadd.f32 %v2085, %v2533
    %2535 = vmatmul.f32.gmra.mxu0 %v711
    %v2536 = vpop.f32.mrf.mxu0
    %v2537 = vadd.f32 %v2088, %v2536
    %2538 = vmatmul.f32.gmra.mxu0 %v715
    %v2539 = vpop.f32.mrf.mxu0
    %v2540 = vadd.f32 %v2091, %v2539
    %2541 = vmatmul.f32.gmra.mxu0 %v719
    %v2542 = vpop.f32.mrf.mxu0
    %v2543 = vadd.f32 %v2094, %v2542
    %2544 = vmatmul.f32.gmra.mxu0 %v723
    %v2545 = vpop.f32.mrf.mxu0
    %v2546 = vadd.f32 %v2097, %v2545
    %2547 = vmatmul.f32.gmra.mxu0 %v727
    %v2548 = vpop.f32.mrf.mxu0
    %v2549 = vadd.f32 %v2100, %v2548
    %2550 = vmatmul.f32.gmra.mxu0 %v731
    %v2551 = vpop.f32.mrf.mxu0
    %v2552 = vadd.f32 %v2103, %v2551
    %2553 = vmatmul.f32.gmra.mxu0 %v735
    %v2554 = vpop.f32.mrf.mxu0
    %v2555 = vadd.f32 %v2106, %v2554
    %2556 = vmatmul.f32.gmra.mxu0 %v739
    %v2557 = vpop.f32.mrf.mxu0
    %v2558 = vadd.f32 %v2109, %v2557
    %2559 = vmatmul.f32.gmra.mxu0 %v743
    %v2560 = vpop.f32.mrf.mxu0
    %v2561 = vadd.f32 %v2112, %v2560
    %2562 = vmatmul.f32.gmra.mxu0 %v747
    %v2563 = vpop.f32.mrf.mxu0
    %v2564 = vadd.f32 %v2115, %v2563
    %2565 = vmatmul.f32.gmra.mxu0 %v751
    %v2566 = vpop.f32.mrf.mxu0
    %v2567 = vadd.f32 %v2118, %v2566
    %2568 = vmatmul.f32.gmra.mxu0 %v755
    %v2569 = vpop.f32.mrf.mxu0
    %v2570 = vadd.f32 %v2121, %v2569
    %2571 = vmatmul.f32.gmra.mxu0 %v759
    %v2572 = vpop.f32.mrf.mxu0
    %v2573 = vadd.f32 %v2124, %v2572
    %2574 = vmatmul.f32.gmra.mxu0 %v763
    %v2575 = vpop.f32.mrf.mxu0
    %v2576 = vadd.f32 %v2127, %v2575
    %2577 = vmatmul.f32.gmra.mxu0 %v767
    %v2578 = vpop.f32.mrf.mxu0
    %v2579 = vadd.f32 %v2130, %v2578
    %2580 = vmatmul.f32.gmra.mxu0 %v771
    %v2581 = vpop.f32.mrf.mxu0
    %v2582 = vadd.f32 %v2133, %v2581
    %2583 = vmatmul.f32.gmra.mxu0 %v775
    %v2584 = vpop.f32.mrf.mxu0
    %v2585 = vadd.f32 %v2136, %v2584
    %2586 = vmatmul.f32.gmra.mxu0 %v779
    %v2587 = vpop.f32.mrf.mxu0
    %v2588 = vadd.f32 %v2139, %v2587
    %2589 = vmatmul.f32.gmra.mxu0 %v783
    %v2590 = vpop.f32.mrf.mxu0
    %v2591 = vadd.f32 %v2142, %v2590
    %2592 = vmatmul.f32.gmra.mxu0 %v787
    %v2593 = vpop.f32.mrf.mxu0
    %v2594 = vadd.f32 %v2145, %v2593
    %2595 = vmatmul.f32.gmra.mxu0 %v791
    %v2596 = vpop.f32.mrf.mxu0
    %v2597 = vadd.f32 %v2148, %v2596
    %2598 = vmatmul.f32.gmra.mxu0 %v795
    %v2599 = vpop.f32.mrf.mxu0
    %v2600 = vadd.f32 %v2151, %v2599
    %2601 = vmatmul.f32.gmra.mxu0 %v799
    %v2602 = vpop.f32.mrf.mxu0
    %v2603 = vadd.f32 %v2154, %v2602
    %2604 = vmatmul.f32.gmra.mxu0 %v803
    %v2605 = vpop.f32.mrf.mxu0
    %v2606 = vadd.f32 %v2157, %v2605
    %2607 = vmatmul.f32.gmra.mxu0 %v807
    %v2608 = vpop.f32.mrf.mxu0
    %v2609 = vadd.f32 %v2160, %v2608
    %2610 = vmatmul.f32.gmra.mxu0 %v811
    %v2611 = vpop.f32.mrf.mxu0
    %v2612 = vadd.f32 %v2163, %v2611
    %2613 = vmatmul.f32.gmra.mxu0 %v815
    %v2614 = vpop.f32.mrf.mxu0
    %v2615 = vadd.f32 %v2166, %v2614
    %2616 = vmatmul.f32.gmra.mxu0 %v819
    %v2617 = vpop.f32.mrf.mxu0
    %v2618 = vadd.f32 %v2169, %v2617
    %2619 = vmatmul.f32.gmra.mxu0 %v823
    %v2620 = vpop.f32.mrf.mxu0
    %v2621 = vadd.f32 %v2172, %v2620
    %2622 = vmatmul.f32.gmra.mxu0 %v827
    %v2623 = vpop.f32.mrf.mxu0
    %v2624 = vadd.f32 %v2175, %v2623
    %2625 = vmatmul.f32.gmra.mxu0 %v831
    %v2626 = vpop.f32.mrf.mxu0
    %v2627 = vadd.f32 %v2178, %v2626
    %2628 = vmatmul.f32.gmra.mxu0 %v835
    %v2629 = vpop.f32.mrf.mxu0
    %v2630 = vadd.f32 %v2181, %v2629
    %2631 = vdwg.mxu0
    %v2632 = vld [vmem:[%s2] sm:$0xf]
    %s2633 = scalar_lea.vmem %s2, 4
    %v2634 = vld [vmem:[%s2633] sm:$0xf]
    %vm2635 = vcmask 31744
    %v2637 = vsel %vm2635, %v2249, 0
    %v2640 = vsel %vm2635, %v2252, 0
    %v2643 = vsel %vm2635, %v2255, 0
    %v2646 = vsel %vm2635, %v2258, 0
    %v2649 = vsel %vm2635, %v2261, 0
    %v2652 = vsel %vm2635, %v2264, 0
    %v2655 = vsel %vm2635, %v2267, 0
    %v2658 = vsel %vm2635, %v2270, 0
    %v2661 = vsel %vm2635, %v2273, 0
    %v2664 = vsel %vm2635, %v2276, 0
    %v2667 = vsel %vm2635, %v2279, 0
    %v2670 = vsel %vm2635, %v2282, 0
    %v2673 = vsel %vm2635, %v2285, 0
    %v2676 = vsel %vm2635, %v2288, 0
    %v2679 = vsel %vm2635, %v2291, 0
    %v2682 = vsel %vm2635, %v2294, 0
    %vm2684 = vcmask 1043456
    %v2686 = vsel %vm2684, %v2634, 0
    %2688 = vmatpush.msra.mxu0 0.0
    %2689 = vmatpush.msra.mxu0 0.0
    %2690 = vmatpush.msra.mxu0 0.0
    %2691 = vmatpush.msra.mxu0 0.0
    %2692 = vmatpush.msra.mxu0 0.0
    %2693 = vmatpush.msra.mxu0 0.0
    %2694 = vmatpush.msra.mxu0 0.0
    %2695 = vmatpush.msra.mxu0 0.0
    %2696 = vmatpush.msra.mxu0 0.0
    %2697 = vmatpush.msra.mxu0 0.0
    %2698 = vmatpush.msra.mxu0 0.0
    %2699 = vmatpush.msra.mxu0 0.0
    %2700 = vmatpush.msra.mxu0 0.0
    %2701 = vmatpush.msra.mxu0 0.0
    %2702 = vmatpush.msra.mxu0 0.0
    %2703 = vmatpush.msra.mxu0 %v2686
    %2704 = vmatmul.f32.gmra.mxu0 %v2637
    %v2705 = vpop.f32.mrf.mxu0
    %v2706 = vadd.f32 0.0, %v2705
    %2707 = vmatmul.f32.gmra.mxu0 %v2640
    %v2708 = vpop.f32.mrf.mxu0
    %v2709 = vadd.f32 0.0, %v2708
    %2710 = vmatmul.f32.gmra.mxu0 %v2643
    %v2711 = vpop.f32.mrf.mxu0
    %v2712 = vadd.f32 0.0, %v2711
    %2713 = vmatmul.f32.gmra.mxu0 %v2646
    %v2714 = vpop.f32.mrf.mxu0
    %v2715 = vadd.f32 0.0, %v2714
    %2716 = vmatmul.f32.gmra.mxu0 %v2649
    %v2717 = vpop.f32.mrf.mxu0
    %v2718 = vadd.f32 0.0, %v2717
    %2719 = vmatmul.f32.gmra.mxu0 %v2652
    %v2720 = vpop.f32.mrf.mxu0
    %v2721 = vadd.f32 0.0, %v2720
    %2722 = vmatmul.f32.gmra.mxu0 %v2655
    %v2723 = vpop.f32.mrf.mxu0
    %v2724 = vadd.f32 0.0, %v2723
    %2725 = vmatmul.f32.gmra.mxu0 %v2658
    %v2726 = vpop.f32.mrf.mxu0
    %v2727 = vadd.f32 0.0, %v2726
    %2728 = vmatmul.f32.gmra.mxu0 %v2661
    %v2729 = vpop.f32.mrf.mxu0
    %v2730 = vadd.f32 0.0, %v2729
    %2731 = vmatmul.f32.gmra.mxu0 %v2664
    %v2732 = vpop.f32.mrf.mxu0
    %v2733 = vadd.f32 0.0, %v2732
    %2734 = vmatmul.f32.gmra.mxu0 %v2667
    %v2735 = vpop.f32.mrf.mxu0
    %v2736 = vadd.f32 0.0, %v2735
    %2737 = vmatmul.f32.gmra.mxu0 %v2670
    %v2738 = vpop.f32.mrf.mxu0
    %v2739 = vadd.f32 0.0, %v2738
    %2740 = vmatmul.f32.gmra.mxu0 %v2673
    %v2741 = vpop.f32.mrf.mxu0
    %v2742 = vadd.f32 0.0, %v2741
    %2743 = vmatmul.f32.gmra.mxu0 %v2676
    %v2744 = vpop.f32.mrf.mxu0
    %v2745 = vadd.f32 0.0, %v2744
    %2746 = vmatmul.f32.gmra.mxu0 %v2679
    %v2747 = vpop.f32.mrf.mxu0
    %v2748 = vadd.f32 0.0, %v2747
    %2749 = vmatmul.f32.gmra.mxu0 %v2682
    %v2750 = vpop.f32.mrf.mxu0
    %v2751 = vadd.f32 0.0, %v2750
    %2752 = vdwg.mxu0
    %v2754 = vsel %vm2635, %v2201, 0
    %v2757 = vsel %vm2635, %v2204, 0
    %v2760 = vsel %vm2635, %v2207, 0
    %v2763 = vsel %vm2635, %v2210, 0
    %v2766 = vsel %vm2635, %v2213, 0
    %v2769 = vsel %vm2635, %v2216, 0
    %v2772 = vsel %vm2635, %v2219, 0
    %v2775 = vsel %vm2635, %v2222, 0
    %v2778 = vsel %vm2635, %v2225, 0
    %v2781 = vsel %vm2635, %v2228, 0
    %v2784 = vsel %vm2635, %v2231, 0
    %v2787 = vsel %vm2635, %v2234, 0
    %v2790 = vsel %vm2635, %v2237, 0
    %v2793 = vsel %vm2635, %v2240, 0
    %v2796 = vsel %vm2635, %v2243, 0
    %v2799 = vsel %vm2635, %v2246, 0
    %v2802 = vsel %vm2684, %v2632, 0
    %2804 = vmatpush.msra.mxu0 0.0
    %2805 = vmatpush.msra.mxu0 0.0
    %2806 = vmatpush.msra.mxu0 0.0
    %2807 = vmatpush.msra.mxu0 0.0
    %2808 = vmatpush.msra.mxu0 0.0
    %2809 = vmatpush.msra.mxu0 0.0
    %2810 = vmatpush.msra.mxu0 0.0
    %2811 = vmatpush.msra.mxu0 0.0
    %2812 = vmatpush.msra.mxu0 0.0
    %2813 = vmatpush.msra.mxu0 0.0
    %2814 = vmatpush.msra.mxu0 0.0
    %2815 = vmatpush.msra.mxu0 0.0
    %2816 = vmatpush.msra.mxu0 0.0
    %2817 = vmatpush.msra.mxu0 0.0
    %2818 = vmatpush.msra.mxu0 0.0
    %2819 = vmatpush.msra.mxu0 %v2802
    %2820 = vmatmul.f32.gmra.mxu0 %v2754
    %v2821 = vpop.f32.mrf.mxu0
    %v2822 = vadd.f32 %v2706, %v2821
    %2823 = vmatmul.f32.gmra.mxu0 %v2757
    %v2824 = vpop.f32.mrf.mxu0
    %v2825 = vadd.f32 %v2709, %v2824
    %2826 = vmatmul.f32.gmra.mxu0 %v2760
    %v2827 = vpop.f32.mrf.mxu0
    %v2828 = vadd.f32 %v2712, %v2827
    %2829 = vmatmul.f32.gmra.mxu0 %v2763
    %v2830 = vpop.f32.mrf.mxu0
    %v2831 = vadd.f32 %v2715, %v2830
    %2832 = vmatmul.f32.gmra.mxu0 %v2766
    %v2833 = vpop.f32.mrf.mxu0
    %v2834 = vadd.f32 %v2718, %v2833
    %2835 = vmatmul.f32.gmra.mxu0 %v2769
    %v2836 = vpop.f32.mrf.mxu0
    %v2837 = vadd.f32 %v2721, %v2836
    %2838 = vmatmul.f32.gmra.mxu0 %v2772
    %v2839 = vpop.f32.mrf.mxu0
    %v2840 = vadd.f32 %v2724, %v2839
    %2841 = vmatmul.f32.gmra.mxu0 %v2775
    %v2842 = vpop.f32.mrf.mxu0
    %v2843 = vadd.f32 %v2727, %v2842
    %2844 = vmatmul.f32.gmra.mxu0 %v2778
    %v2845 = vpop.f32.mrf.mxu0
    %v2846 = vadd.f32 %v2730, %v2845
    %2847 = vmatmul.f32.gmra.mxu0 %v2781
    %v2848 = vpop.f32.mrf.mxu0
    %v2849 = vadd.f32 %v2733, %v2848
    %2850 = vmatmul.f32.gmra.mxu0 %v2784
    %v2851 = vpop.f32.mrf.mxu0
    %v2852 = vadd.f32 %v2736, %v2851
    %2853 = vmatmul.f32.gmra.mxu0 %v2787
    %v2854 = vpop.f32.mrf.mxu0
    %v2855 = vadd.f32 %v2739, %v2854
    %2856 = vmatmul.f32.gmra.mxu0 %v2790
    %v2857 = vpop.f32.mrf.mxu0
    %v2858 = vadd.f32 %v2742, %v2857
    %2859 = vmatmul.f32.gmra.mxu0 %v2793
    %v2860 = vpop.f32.mrf.mxu0
    %v2861 = vadd.f32 %v2745, %v2860
    %2862 = vmatmul.f32.gmra.mxu0 %v2796
    %v2863 = vpop.f32.mrf.mxu0
    %v2864 = vadd.f32 %v2748, %v2863
    %2865 = vmatmul.f32.gmra.mxu0 %v2799
    %v2866 = vpop.f32.mrf.mxu0
    %v2867 = vadd.f32 %v2751, %v2866
    %2868 = vdwg.mxu0
    %s2869 = scalar_lea.vmem %s2, 8
    %v2870 = vld [vmem:[%s2869] sm:$0xf]
    %v2872 = vsel %vm2635, %v2297, 0
    %v2875 = vsel %vm2635, %v2300, 0
    %v2878 = vsel %vm2635, %v2303, 0
    %v2881 = vsel %vm2635, %v2306, 0
    %v2884 = vsel %vm2635, %v2309, 0
    %v2887 = vsel %vm2635, %v2312, 0
    %v2890 = vsel %vm2635, %v2315, 0
    %v2893 = vsel %vm2635, %v2318, 0
    %v2896 = vsel %vm2635, %v2321, 0
    %v2899 = vsel %vm2635, %v2324, 0
    %v2902 = vsel %vm2635, %v2327, 0
    %v2905 = vsel %vm2635, %v2330, 0
    %v2908 = vsel %vm2635, %v2333, 0
    %v2911 = vsel %vm2635, %v2336, 0
    %v2914 = vsel %vm2635, %v2339, 0
    %v2917 = vsel %vm2635, %v2342, 0
    %v2920 = vsel %vm2684, %v2870, 0
    %2922 = vmatpush.msra.mxu0 0.0
    %2923 = vmatpush.msra.mxu0 0.0
    %2924 = vmatpush.msra.mxu0 0.0
    %2925 = vmatpush.msra.mxu0 0.0
    %2926 = vmatpush.msra.mxu0 0.0
    %2927 = vmatpush.msra.mxu0 0.0
    %2928 = vmatpush.msra.mxu0 0.0
    %2929 = vmatpush.msra.mxu0 0.0
    %2930 = vmatpush.msra.mxu0 0.0
    %2931 = vmatpush.msra.mxu0 0.0
    %2932 = vmatpush.msra.mxu0 0.0
    %2933 = vmatpush.msra.mxu0 0.0
    %2934 = vmatpush.msra.mxu0 0.0
    %2935 = vmatpush.msra.mxu0 0.0
    %2936 = vmatpush.msra.mxu0 0.0
    %2937 = vmatpush.msra.mxu0 %v2920
    %2938 = vmatmul.f32.gmra.mxu0 %v2872
    %v2939 = vpop.f32.mrf.mxu0
    %v2940 = vadd.f32 0.0, %v2939
    %2941 = vmatmul.f32.gmra.mxu0 %v2875
    %v2942 = vpop.f32.mrf.mxu0
    %v2943 = vadd.f32 0.0, %v2942
    %2944 = vmatmul.f32.gmra.mxu0 %v2878
    %v2945 = vpop.f32.mrf.mxu0
    %v2946 = vadd.f32 0.0, %v2945
    %2947 = vmatmul.f32.gmra.mxu0 %v2881
    %v2948 = vpop.f32.mrf.mxu0
    %v2949 = vadd.f32 0.0, %v2948
    %2950 = vmatmul.f32.gmra.mxu0 %v2884
    %v2951 = vpop.f32.mrf.mxu0
    %v2952 = vadd.f32 0.0, %v2951
    %2953 = vmatmul.f32.gmra.mxu0 %v2887
    %v2954 = vpop.f32.mrf.mxu0
    %v2955 = vadd.f32 0.0, %v2954
    %2956 = vmatmul.f32.gmra.mxu0 %v2890
    %v2957 = vpop.f32.mrf.mxu0
    %v2958 = vadd.f32 0.0, %v2957
    %2959 = vmatmul.f32.gmra.mxu0 %v2893
    %v2960 = vpop.f32.mrf.mxu0
    %v2961 = vadd.f32 0.0, %v2960
    %2962 = vmatmul.f32.gmra.mxu0 %v2896
    %v2963 = vpop.f32.mrf.mxu0
    %v2964 = vadd.f32 0.0, %v2963
    %2965 = vmatmul.f32.gmra.mxu0 %v2899
    %v2966 = vpop.f32.mrf.mxu0
    %v2967 = vadd.f32 0.0, %v2966
    %2968 = vmatmul.f32.gmra.mxu0 %v2902
    %v2969 = vpop.f32.mrf.mxu0
    %v2970 = vadd.f32 0.0, %v2969
    %2971 = vmatmul.f32.gmra.mxu0 %v2905
    %v2972 = vpop.f32.mrf.mxu0
    %v2973 = vadd.f32 0.0, %v2972
    %2974 = vmatmul.f32.gmra.mxu0 %v2908
    %v2975 = vpop.f32.mrf.mxu0
    %v2976 = vadd.f32 0.0, %v2975
    %2977 = vmatmul.f32.gmra.mxu0 %v2911
    %v2978 = vpop.f32.mrf.mxu0
    %v2979 = vadd.f32 0.0, %v2978
    %2980 = vmatmul.f32.gmra.mxu0 %v2914
    %v2981 = vpop.f32.mrf.mxu0
    %v2982 = vadd.f32 0.0, %v2981
    %2983 = vmatmul.f32.gmra.mxu0 %v2917
    %v2984 = vpop.f32.mrf.mxu0
    %v2985 = vadd.f32 0.0, %v2984
    %2986 = vdwg.mxu0
    %v2987 = vadd.f32 %v2822, %v2940
    %v2988 = vadd.f32 %v2825, %v2943
    %v2989 = vadd.f32 %v2828, %v2946
    %v2990 = vadd.f32 %v2831, %v2949
    %v2991 = vadd.f32 %v2834, %v2952
    %v2992 = vadd.f32 %v2837, %v2955
    %v2993 = vadd.f32 %v2840, %v2958
    %v2994 = vadd.f32 %v2843, %v2961
    %v2995 = vadd.f32 %v2846, %v2964
    %v2996 = vadd.f32 %v2849, %v2967
    %v2997 = vadd.f32 %v2852, %v2970
    %v2998 = vadd.f32 %v2855, %v2973
    %v2999 = vadd.f32 %v2858, %v2976
    %v3000 = vadd.f32 %v2861, %v2979
    %v3001 = vadd.f32 %v2864, %v2982
    %v3002 = vadd.f32 %v2867, %v2985
    %s3003 = scalar_lea.vmem %s2, 12
    %v3004 = vld [vmem:[%s3003] sm:$0xf]
    %v3006 = vsel %vm2635, %v2345, 0
    %v3009 = vsel %vm2635, %v2348, 0
    %v3012 = vsel %vm2635, %v2351, 0
    %v3015 = vsel %vm2635, %v2354, 0
    %v3018 = vsel %vm2635, %v2357, 0
    %v3021 = vsel %vm2635, %v2360, 0
    %v3024 = vsel %vm2635, %v2363, 0
    %v3027 = vsel %vm2635, %v2366, 0
    %v3030 = vsel %vm2635, %v2369, 0
    %v3033 = vsel %vm2635, %v2372, 0
    %v3036 = vsel %vm2635, %v2375, 0
    %v3039 = vsel %vm2635, %v2378, 0
    %v3042 = vsel %vm2635, %v2381, 0
    %v3045 = vsel %vm2635, %v2384, 0
    %v3048 = vsel %vm2635, %v2387, 0
    %v3051 = vsel %vm2635, %v2390, 0
    %v3054 = vsel %vm2684, %v3004, 0
    %3056 = vmatpush.msra.mxu0 0.0
    %3057 = vmatpush.msra.mxu0 0.0
    %3058 = vmatpush.msra.mxu0 0.0
    %3059 = vmatpush.msra.mxu0 0.0
    %3060 = vmatpush.msra.mxu0 0.0
    %3061 = vmatpush.msra.mxu0 0.0
    %3062 = vmatpush.msra.mxu0 0.0
    %3063 = vmatpush.msra.mxu0 0.0
    %3064 = vmatpush.msra.mxu0 0.0
    %3065 = vmatpush.msra.mxu0 0.0
    %3066 = vmatpush.msra.mxu0 0.0
    %3067 = vmatpush.msra.mxu0 0.0
    %3068 = vmatpush.msra.mxu0 0.0
    %3069 = vmatpush.msra.mxu0 0.0
    %3070 = vmatpush.msra.mxu0 0.0
    %3071 = vmatpush.msra.mxu0 %v3054
    %3072 = vmatmul.f32.gmra.mxu0 %v3006
    %v3073 = vpop.f32.mrf.mxu0
    %v3074 = vadd.f32 0.0, %v3073
    %3075 = vmatmul.f32.gmra.mxu0 %v3009
    %v3076 = vpop.f32.mrf.mxu0
    %v3077 = vadd.f32 0.0, %v3076
    %3078 = vmatmul.f32.gmra.mxu0 %v3012
    %v3079 = vpop.f32.mrf.mxu0
    %v3080 = vadd.f32 0.0, %v3079
    %3081 = vmatmul.f32.gmra.mxu0 %v3015
    %v3082 = vpop.f32.mrf.mxu0
    %v3083 = vadd.f32 0.0, %v3082
    %3084 = vmatmul.f32.gmra.mxu0 %v3018
    %v3085 = vpop.f32.mrf.mxu0
    %v3086 = vadd.f32 0.0, %v3085
    %3087 = vmatmul.f32.gmra.mxu0 %v3021
    %v3088 = vpop.f32.mrf.mxu0
    %v3089 = vadd.f32 0.0, %v3088
    %3090 = vmatmul.f32.gmra.mxu0 %v3024
    %v3091 = vpop.f32.mrf.mxu0
    %v3092 = vadd.f32 0.0, %v3091
    %3093 = vmatmul.f32.gmra.mxu0 %v3027
    %v3094 = vpop.f32.mrf.mxu0
    %v3095 = vadd.f32 0.0, %v3094
    %3096 = vmatmul.f32.gmra.mxu0 %v3030
    %v3097 = vpop.f32.mrf.mxu0
    %v3098 = vadd.f32 0.0, %v3097
    %3099 = vmatmul.f32.gmra.mxu0 %v3033
    %v3100 = vpop.f32.mrf.mxu0
    %v3101 = vadd.f32 0.0, %v3100
    %3102 = vmatmul.f32.gmra.mxu0 %v3036
    %v3103 = vpop.f32.mrf.mxu0
    %v3104 = vadd.f32 0.0, %v3103
    %3105 = vmatmul.f32.gmra.mxu0 %v3039
    %v3106 = vpop.f32.mrf.mxu0
    %v3107 = vadd.f32 0.0, %v3106
    %3108 = vmatmul.f32.gmra.mxu0 %v3042
    %v3109 = vpop.f32.mrf.mxu0
    %v3110 = vadd.f32 0.0, %v3109
    %3111 = vmatmul.f32.gmra.mxu0 %v3045
    %v3112 = vpop.f32.mrf.mxu0
    %v3113 = vadd.f32 0.0, %v3112
    %3114 = vmatmul.f32.gmra.mxu0 %v3048
    %v3115 = vpop.f32.mrf.mxu0
    %v3116 = vadd.f32 0.0, %v3115
    %3117 = vmatmul.f32.gmra.mxu0 %v3051
    %v3118 = vpop.f32.mrf.mxu0
    %v3119 = vadd.f32 0.0, %v3118
    %3120 = vdwg.mxu0
    %v3121 = vadd.f32 %v2987, %v3074
    %v3122 = vadd.f32 %v2988, %v3077
    %v3123 = vadd.f32 %v2989, %v3080
    %v3124 = vadd.f32 %v2990, %v3083
    %v3125 = vadd.f32 %v2991, %v3086
    %v3126 = vadd.f32 %v2992, %v3089
    %v3127 = vadd.f32 %v2993, %v3092
    %v3128 = vadd.f32 %v2994, %v3095
    %v3129 = vadd.f32 %v2995, %v3098
    %v3130 = vadd.f32 %v2996, %v3101
    %v3131 = vadd.f32 %v2997, %v3104
    %v3132 = vadd.f32 %v2998, %v3107
    %v3133 = vadd.f32 %v2999, %v3110
    %v3134 = vadd.f32 %v3000, %v3113
    %v3135 = vadd.f32 %v3001, %v3116
    %v3136 = vadd.f32 %v3002, %v3119
    %s3137 = scalar_lea.vmem %s2, 16
    %v3138 = vld [vmem:[%s3137] sm:$0xf]
    %v3140 = vsel %vm2635, %v2393, 0
    %v3143 = vsel %vm2635, %v2396, 0
    %v3146 = vsel %vm2635, %v2399, 0
    %v3149 = vsel %vm2635, %v2402, 0
    %v3152 = vsel %vm2635, %v2405, 0
    %v3155 = vsel %vm2635, %v2408, 0
    %v3158 = vsel %vm2635, %v2411, 0
    %v3161 = vsel %vm2635, %v2414, 0
    %v3164 = vsel %vm2635, %v2417, 0
    %v3167 = vsel %vm2635, %v2420, 0
    %v3170 = vsel %vm2635, %v2423, 0
    %v3173 = vsel %vm2635, %v2426, 0
    %v3176 = vsel %vm2635, %v2429, 0
    %v3179 = vsel %vm2635, %v2432, 0
    %v3182 = vsel %vm2635, %v2435, 0
    %v3185 = vsel %vm2635, %v2438, 0
    %v3188 = vsel %vm2684, %v3138, 0
    %3190 = vmatpush.msra.mxu0 0.0
    %3191 = vmatpush.msra.mxu0 0.0
    %3192 = vmatpush.msra.mxu0 0.0
    %3193 = vmatpush.msra.mxu0 0.0
    %3194 = vmatpush.msra.mxu0 0.0
    %3195 = vmatpush.msra.mxu0 0.0
    %3196 = vmatpush.msra.mxu0 0.0
    %3197 = vmatpush.msra.mxu0 0.0
    %3198 = vmatpush.msra.mxu0 0.0
    %3199 = vmatpush.msra.mxu0 0.0
    %3200 = vmatpush.msra.mxu0 0.0
    %3201 = vmatpush.msra.mxu0 0.0
    %3202 = vmatpush.msra.mxu0 0.0
    %3203 = vmatpush.msra.mxu0 0.0
    %3204 = vmatpush.msra.mxu0 0.0
    %3205 = vmatpush.msra.mxu0 %v3188
    %3206 = vmatmul.f32.gmra.mxu0 %v3140
    %v3207 = vpop.f32.mrf.mxu0
    %v3208 = vadd.f32 0.0, %v3207
    %3209 = vmatmul.f32.gmra.mxu0 %v3143
    %v3210 = vpop.f32.mrf.mxu0
    %v3211 = vadd.f32 0.0, %v3210
    %3212 = vmatmul.f32.gmra.mxu0 %v3146
    %v3213 = vpop.f32.mrf.mxu0
    %v3214 = vadd.f32 0.0, %v3213
    %3215 = vmatmul.f32.gmra.mxu0 %v3149
    %v3216 = vpop.f32.mrf.mxu0
    %v3217 = vadd.f32 0.0, %v3216
    %3218 = vmatmul.f32.gmra.mxu0 %v3152
    %v3219 = vpop.f32.mrf.mxu0
    %v3220 = vadd.f32 0.0, %v3219
    %3221 = vmatmul.f32.gmra.mxu0 %v3155
    %v3222 = vpop.f32.mrf.mxu0
    %v3223 = vadd.f32 0.0, %v3222
    %3224 = vmatmul.f32.gmra.mxu0 %v3158
    %v3225 = vpop.f32.mrf.mxu0
    %v3226 = vadd.f32 0.0, %v3225
    %3227 = vmatmul.f32.gmra.mxu0 %v3161
    %v3228 = vpop.f32.mrf.mxu0
    %v3229 = vadd.f32 0.0, %v3228
    %3230 = vmatmul.f32.gmra.mxu0 %v3164
    %v3231 = vpop.f32.mrf.mxu0
    %v3232 = vadd.f32 0.0, %v3231
    %3233 = vmatmul.f32.gmra.mxu0 %v3167
    %v3234 = vpop.f32.mrf.mxu0
    %v3235 = vadd.f32 0.0, %v3234
    %3236 = vmatmul.f32.gmra.mxu0 %v3170
    %v3237 = vpop.f32.mrf.mxu0
    %v3238 = vadd.f32 0.0, %v3237
    %3239 = vmatmul.f32.gmra.mxu0 %v3173
    %v3240 = vpop.f32.mrf.mxu0
    %v3241 = vadd.f32 0.0, %v3240
    %3242 = vmatmul.f32.gmra.mxu0 %v3176
    %v3243 = vpop.f32.mrf.mxu0
    %v3244 = vadd.f32 0.0, %v3243
    %3245 = vmatmul.f32.gmra.mxu0 %v3179
    %v3246 = vpop.f32.mrf.mxu0
    %v3247 = vadd.f32 0.0, %v3246
    %3248 = vmatmul.f32.gmra.mxu0 %v3182
    %v3249 = vpop.f32.mrf.mxu0
    %v3250 = vadd.f32 0.0, %v3249
    %3251 = vmatmul.f32.gmra.mxu0 %v3185
    %v3252 = vpop.f32.mrf.mxu0
    %v3253 = vadd.f32 0.0, %v3252
    %3254 = vdwg.mxu0
    %v3255 = vadd.f32 %v3121, %v3208
    %v3256 = vadd.f32 %v3122, %v3211
    %v3257 = vadd.f32 %v3123, %v3214
    %v3258 = vadd.f32 %v3124, %v3217
    %v3259 = vadd.f32 %v3125, %v3220
    %v3260 = vadd.f32 %v3126, %v3223
    %v3261 = vadd.f32 %v3127, %v3226
    %v3262 = vadd.f32 %v3128, %v3229
    %v3263 = vadd.f32 %v3129, %v3232
    %v3264 = vadd.f32 %v3130, %v3235
    %v3265 = vadd.f32 %v3131, %v3238
    %v3266 = vadd.f32 %v3132, %v3241
    %v3267 = vadd.f32 %v3133, %v3244
    %v3268 = vadd.f32 %v3134, %v3247
    %v3269 = vadd.f32 %v3135, %v3250
    %v3270 = vadd.f32 %v3136, %v3253
    %s3271 = scalar_lea.vmem %s2, 20
    %v3272 = vld [vmem:[%s3271] sm:$0xf]
    %v3274 = vsel %vm2635, %v2441, 0
    %v3277 = vsel %vm2635, %v2444, 0
    %v3280 = vsel %vm2635, %v2447, 0
    %v3283 = vsel %vm2635, %v2450, 0
    %v3286 = vsel %vm2635, %v2453, 0
    %v3289 = vsel %vm2635, %v2456, 0
    %v3292 = vsel %vm2635, %v2459, 0
    %v3295 = vsel %vm2635, %v2462, 0
    %v3298 = vsel %vm2635, %v2465, 0
    %v3301 = vsel %vm2635, %v2468, 0
    %v3304 = vsel %vm2635, %v2471, 0
    %v3307 = vsel %vm2635, %v2474, 0
    %v3310 = vsel %vm2635, %v2477, 0
    %v3313 = vsel %vm2635, %v2480, 0
    %v3316 = vsel %vm2635, %v2483, 0
    %v3319 = vsel %vm2635, %v2486, 0
    %v3322 = vsel %vm2684, %v3272, 0
    %3324 = vmatpush.msra.mxu0 0.0
    %3325 = vmatpush.msra.mxu0 0.0
    %3326 = vmatpush.msra.mxu0 0.0
    %3327 = vmatpush.msra.mxu0 0.0
    %3328 = vmatpush.msra.mxu0 0.0
    %3329 = vmatpush.msra.mxu0 0.0
    %3330 = vmatpush.msra.mxu0 0.0
    %3331 = vmatpush.msra.mxu0 0.0
    %3332 = vmatpush.msra.mxu0 0.0
    %3333 = vmatpush.msra.mxu0 0.0
    %3334 = vmatpush.msra.mxu0 0.0
    %3335 = vmatpush.msra.mxu0 0.0
    %3336 = vmatpush.msra.mxu0 0.0
    %3337 = vmatpush.msra.mxu0 0.0
    %3338 = vmatpush.msra.mxu0 0.0
    %3339 = vmatpush.msra.mxu0 %v3322
    %3340 = vmatmul.f32.gmra.mxu0 %v3274
    %v3341 = vpop.f32.mrf.mxu0
    %v3342 = vadd.f32 0.0, %v3341
    %3343 = vmatmul.f32.gmra.mxu0 %v3277
    %v3344 = vpop.f32.mrf.mxu0
    %v3345 = vadd.f32 0.0, %v3344
    %3346 = vmatmul.f32.gmra.mxu0 %v3280
    %v3347 = vpop.f32.mrf.mxu0
    %v3348 = vadd.f32 0.0, %v3347
    %3349 = vmatmul.f32.gmra.mxu0 %v3283
    %v3350 = vpop.f32.mrf.mxu0
    %v3351 = vadd.f32 0.0, %v3350
    %3352 = vmatmul.f32.gmra.mxu0 %v3286
    %v3353 = vpop.f32.mrf.mxu0
    %v3354 = vadd.f32 0.0, %v3353
    %3355 = vmatmul.f32.gmra.mxu0 %v3289
    %v3356 = vpop.f32.mrf.mxu0
    %v3357 = vadd.f32 0.0, %v3356
    %3358 = vmatmul.f32.gmra.mxu0 %v3292
    %v3359 = vpop.f32.mrf.mxu0
    %v3360 = vadd.f32 0.0, %v3359
    %3361 = vmatmul.f32.gmra.mxu0 %v3295
    %v3362 = vpop.f32.mrf.mxu0
    %v3363 = vadd.f32 0.0, %v3362
    %3364 = vmatmul.f32.gmra.mxu0 %v3298
    %v3365 = vpop.f32.mrf.mxu0
    %v3366 = vadd.f32 0.0, %v3365
    %3367 = vmatmul.f32.gmra.mxu0 %v3301
    %v3368 = vpop.f32.mrf.mxu0
    %v3369 = vadd.f32 0.0, %v3368
    %3370 = vmatmul.f32.gmra.mxu0 %v3304
    %v3371 = vpop.f32.mrf.mxu0
    %v3372 = vadd.f32 0.0, %v3371
    %3373 = vmatmul.f32.gmra.mxu0 %v3307
    %v3374 = vpop.f32.mrf.mxu0
    %v3375 = vadd.f32 0.0, %v3374
    %3376 = vmatmul.f32.gmra.mxu0 %v3310
    %v3377 = vpop.f32.mrf.mxu0
    %v3378 = vadd.f32 0.0, %v3377
    %3379 = vmatmul.f32.gmra.mxu0 %v3313
    %v3380 = vpop.f32.mrf.mxu0
    %v3381 = vadd.f32 0.0, %v3380
    %3382 = vmatmul.f32.gmra.mxu0 %v3316
    %v3383 = vpop.f32.mrf.mxu0
    %v3384 = vadd.f32 0.0, %v3383
    %3385 = vmatmul.f32.gmra.mxu0 %v3319
    %v3386 = vpop.f32.mrf.mxu0
    %v3387 = vadd.f32 0.0, %v3386
    %3388 = vdwg.mxu0
    %v3389 = vadd.f32 %v3255, %v3342
    %v3390 = vadd.f32 %v3256, %v3345
    %v3391 = vadd.f32 %v3257, %v3348
    %v3392 = vadd.f32 %v3258, %v3351
    %v3393 = vadd.f32 %v3259, %v3354
    %v3394 = vadd.f32 %v3260, %v3357
    %v3395 = vadd.f32 %v3261, %v3360
    %v3396 = vadd.f32 %v3262, %v3363
    %v3397 = vadd.f32 %v3263, %v3366
    %v3398 = vadd.f32 %v3264, %v3369
    %v3399 = vadd.f32 %v3265, %v3372
    %v3400 = vadd.f32 %v3266, %v3375
    %v3401 = vadd.f32 %v3267, %v3378
    %v3402 = vadd.f32 %v3268, %v3381
    %v3403 = vadd.f32 %v3269, %v3384
    %v3404 = vadd.f32 %v3270, %v3387
    %s3405 = scalar_lea.vmem %s2, 24
    %v3406 = vld [vmem:[%s3405] sm:$0xf]
    %v3408 = vsel %vm2635, %v2489, 0
    %v3411 = vsel %vm2635, %v2492, 0
    %v3414 = vsel %vm2635, %v2495, 0
    %v3417 = vsel %vm2635, %v2498, 0
    %v3420 = vsel %vm2635, %v2501, 0
    %v3423 = vsel %vm2635, %v2504, 0
    %v3426 = vsel %vm2635, %v2507, 0
    %v3429 = vsel %vm2635, %v2510, 0
    %v3432 = vsel %vm2635, %v2513, 0
    %v3435 = vsel %vm2635, %v2516, 0
    %v3438 = vsel %vm2635, %v2519, 0
    %v3441 = vsel %vm2635, %v2522, 0
    %v3444 = vsel %vm2635, %v2525, 0
    %v3447 = vsel %vm2635, %v2528, 0
    %v3450 = vsel %vm2635, %v2531, 0
    %v3453 = vsel %vm2635, %v2534, 0
    %v3456 = vsel %vm2684, %v3406, 0
    %3458 = vmatpush.msra.mxu0 0.0
    %3459 = vmatpush.msra.mxu0 0.0
    %3460 = vmatpush.msra.mxu0 0.0
    %3461 = vmatpush.msra.mxu0 0.0
    %3462 = vmatpush.msra.mxu0 0.0
    %3463 = vmatpush.msra.mxu0 0.0
    %3464 = vmatpush.msra.mxu0 0.0
    %3465 = vmatpush.msra.mxu0 0.0
    %3466 = vmatpush.msra.mxu0 0.0
    %3467 = vmatpush.msra.mxu0 0.0
    %3468 = vmatpush.msra.mxu0 0.0
    %3469 = vmatpush.msra.mxu0 0.0
    %3470 = vmatpush.msra.mxu0 0.0
    %3471 = vmatpush.msra.mxu0 0.0
    %3472 = vmatpush.msra.mxu0 0.0
    %3473 = vmatpush.msra.mxu0 %v3456
    %3474 = vmatmul.f32.gmra.mxu0 %v3408
    %v3475 = vpop.f32.mrf.mxu0
    %v3476 = vadd.f32 0.0, %v3475
    %3477 = vmatmul.f32.gmra.mxu0 %v3411
    %v3478 = vpop.f32.mrf.mxu0
    %v3479 = vadd.f32 0.0, %v3478
    %3480 = vmatmul.f32.gmra.mxu0 %v3414
    %v3481 = vpop.f32.mrf.mxu0
    %v3482 = vadd.f32 0.0, %v3481
    %3483 = vmatmul.f32.gmra.mxu0 %v3417
    %v3484 = vpop.f32.mrf.mxu0
    %v3485 = vadd.f32 0.0, %v3484
    %3486 = vmatmul.f32.gmra.mxu0 %v3420
    %v3487 = vpop.f32.mrf.mxu0
    %v3488 = vadd.f32 0.0, %v3487
    %3489 = vmatmul.f32.gmra.mxu0 %v3423
    %v3490 = vpop.f32.mrf.mxu0
    %v3491 = vadd.f32 0.0, %v3490
    %3492 = vmatmul.f32.gmra.mxu0 %v3426
    %v3493 = vpop.f32.mrf.mxu0
    %v3494 = vadd.f32 0.0, %v3493
    %3495 = vmatmul.f32.gmra.mxu0 %v3429
    %v3496 = vpop.f32.mrf.mxu0
    %v3497 = vadd.f32 0.0, %v3496
    %3498 = vmatmul.f32.gmra.mxu0 %v3432
    %v3499 = vpop.f32.mrf.mxu0
    %v3500 = vadd.f32 0.0, %v3499
    %3501 = vmatmul.f32.gmra.mxu0 %v3435
    %v3502 = vpop.f32.mrf.mxu0
    %v3503 = vadd.f32 0.0, %v3502
    %3504 = vmatmul.f32.gmra.mxu0 %v3438
    %v3505 = vpop.f32.mrf.mxu0
    %v3506 = vadd.f32 0.0, %v3505
    %3507 = vmatmul.f32.gmra.mxu0 %v3441
    %v3508 = vpop.f32.mrf.mxu0
    %v3509 = vadd.f32 0.0, %v3508
    %3510 = vmatmul.f32.gmra.mxu0 %v3444
    %v3511 = vpop.f32.mrf.mxu0
    %v3512 = vadd.f32 0.0, %v3511
    %3513 = vmatmul.f32.gmra.mxu0 %v3447
    %v3514 = vpop.f32.mrf.mxu0
    %v3515 = vadd.f32 0.0, %v3514
    %3516 = vmatmul.f32.gmra.mxu0 %v3450
    %v3517 = vpop.f32.mrf.mxu0
    %v3518 = vadd.f32 0.0, %v3517
    %3519 = vmatmul.f32.gmra.mxu0 %v3453
    %v3520 = vpop.f32.mrf.mxu0
    %v3521 = vadd.f32 0.0, %v3520
    %3522 = vdwg.mxu0
    %v3523 = vadd.f32 %v3389, %v3476
    %v3524 = vadd.f32 %v3390, %v3479
    %v3525 = vadd.f32 %v3391, %v3482
    %v3526 = vadd.f32 %v3392, %v3485
    %v3527 = vadd.f32 %v3393, %v3488
    %v3528 = vadd.f32 %v3394, %v3491
    %v3529 = vadd.f32 %v3395, %v3494
    %v3530 = vadd.f32 %v3396, %v3497
    %v3531 = vadd.f32 %v3397, %v3500
    %v3532 = vadd.f32 %v3398, %v3503
    %v3533 = vadd.f32 %v3399, %v3506
    %v3534 = vadd.f32 %v3400, %v3509
    %v3535 = vadd.f32 %v3401, %v3512
    %v3536 = vadd.f32 %v3402, %v3515
    %v3537 = vadd.f32 %v3403, %v3518
    %v3538 = vadd.f32 %v3404, %v3521
    %s3539 = scalar_lea.vmem %s2, 28
    %v3540 = vld [vmem:[%s3539] sm:$0xf]
    %v3542 = vsel %vm2635, %v2537, 0
    %v3545 = vsel %vm2635, %v2540, 0
    %v3548 = vsel %vm2635, %v2543, 0
    %v3551 = vsel %vm2635, %v2546, 0
    %v3554 = vsel %vm2635, %v2549, 0
    %v3557 = vsel %vm2635, %v2552, 0
    %v3560 = vsel %vm2635, %v2555, 0
    %v3563 = vsel %vm2635, %v2558, 0
    %v3566 = vsel %vm2635, %v2561, 0
    %v3569 = vsel %vm2635, %v2564, 0
    %v3572 = vsel %vm2635, %v2567, 0
    %v3575 = vsel %vm2635, %v2570, 0
    %v3578 = vsel %vm2635, %v2573, 0
    %v3581 = vsel %vm2635, %v2576, 0
    %v3584 = vsel %vm2635, %v2579, 0
    %v3587 = vsel %vm2635, %v2582, 0
    %v3590 = vsel %vm2684, %v3540, 0
    %3592 = vmatpush.msra.mxu0 0.0
    %3593 = vmatpush.msra.mxu0 0.0
    %3594 = vmatpush.msra.mxu0 0.0
    %3595 = vmatpush.msra.mxu0 0.0
    %3596 = vmatpush.msra.mxu0 0.0
    %3597 = vmatpush.msra.mxu0 0.0
    %3598 = vmatpush.msra.mxu0 0.0
    %3599 = vmatpush.msra.mxu0 0.0
    %3600 = vmatpush.msra.mxu0 0.0
    %3601 = vmatpush.msra.mxu0 0.0
    %3602 = vmatpush.msra.mxu0 0.0
    %3603 = vmatpush.msra.mxu0 0.0
    %3604 = vmatpush.msra.mxu0 0.0
    %3605 = vmatpush.msra.mxu0 0.0
    %3606 = vmatpush.msra.mxu0 0.0
    %3607 = vmatpush.msra.mxu0 %v3590
    %3608 = vmatmul.f32.gmra.mxu0 %v3542
    %v3609 = vpop.f32.mrf.mxu0
    %v3610 = vadd.f32 0.0, %v3609
    %3611 = vmatmul.f32.gmra.mxu0 %v3545
    %v3612 = vpop.f32.mrf.mxu0
    %v3613 = vadd.f32 0.0, %v3612
    %3614 = vmatmul.f32.gmra.mxu0 %v3548
    %v3615 = vpop.f32.mrf.mxu0
    %v3616 = vadd.f32 0.0, %v3615
    %3617 = vmatmul.f32.gmra.mxu0 %v3551
    %v3618 = vpop.f32.mrf.mxu0
    %v3619 = vadd.f32 0.0, %v3618
    %3620 = vmatmul.f32.gmra.mxu0 %v3554
    %v3621 = vpop.f32.mrf.mxu0
    %v3622 = vadd.f32 0.0, %v3621
    %3623 = vmatmul.f32.gmra.mxu0 %v3557
    %v3624 = vpop.f32.mrf.mxu0
    %v3625 = vadd.f32 0.0, %v3624
    %3626 = vmatmul.f32.gmra.mxu0 %v3560
    %v3627 = vpop.f32.mrf.mxu0
    %v3628 = vadd.f32 0.0, %v3627
    %3629 = vmatmul.f32.gmra.mxu0 %v3563
    %v3630 = vpop.f32.mrf.mxu0
    %v3631 = vadd.f32 0.0, %v3630
    %3632 = vmatmul.f32.gmra.mxu0 %v3566
    %v3633 = vpop.f32.mrf.mxu0
    %v3634 = vadd.f32 0.0, %v3633
    %3635 = vmatmul.f32.gmra.mxu0 %v3569
    %v3636 = vpop.f32.mrf.mxu0
    %v3637 = vadd.f32 0.0, %v3636
    %3638 = vmatmul.f32.gmra.mxu0 %v3572
    %v3639 = vpop.f32.mrf.mxu0
    %v3640 = vadd.f32 0.0, %v3639
    %3641 = vmatmul.f32.gmra.mxu0 %v3575
    %v3642 = vpop.f32.mrf.mxu0
    %v3643 = vadd.f32 0.0, %v3642
    %3644 = vmatmul.f32.gmra.mxu0 %v3578
    %v3645 = vpop.f32.mrf.mxu0
    %v3646 = vadd.f32 0.0, %v3645
    %3647 = vmatmul.f32.gmra.mxu0 %v3581
    %v3648 = vpop.f32.mrf.mxu0
    %v3649 = vadd.f32 0.0, %v3648
    %3650 = vmatmul.f32.gmra.mxu0 %v3584
    %v3651 = vpop.f32.mrf.mxu0
    %v3652 = vadd.f32 0.0, %v3651
    %3653 = vmatmul.f32.gmra.mxu0 %v3587
    %v3654 = vpop.f32.mrf.mxu0
    %v3655 = vadd.f32 0.0, %v3654
    %3656 = vdwg.mxu0
    %v3657 = vadd.f32 %v3523, %v3610
    %v3658 = vadd.f32 %v3524, %v3613
    %v3659 = vadd.f32 %v3525, %v3616
    %v3660 = vadd.f32 %v3526, %v3619
    %v3661 = vadd.f32 %v3527, %v3622
    %v3662 = vadd.f32 %v3528, %v3625
    %v3663 = vadd.f32 %v3529, %v3628
    %v3664 = vadd.f32 %v3530, %v3631
    %v3665 = vadd.f32 %v3531, %v3634
    %v3666 = vadd.f32 %v3532, %v3637
    %v3667 = vadd.f32 %v3533, %v3640
    %v3668 = vadd.f32 %v3534, %v3643
    %v3669 = vadd.f32 %v3535, %v3646
    %v3670 = vadd.f32 %v3536, %v3649
    %v3671 = vadd.f32 %v3537, %v3652
    %v3672 = vadd.f32 %v3538, %v3655
    %s3673 = scalar_lea.vmem %s2, 32
    %v3674 = vld [vmem:[%s3673] sm:$0xf]
    %v3676 = vsel %vm2635, %v2585, 0
    %v3679 = vsel %vm2635, %v2588, 0
    %v3682 = vsel %vm2635, %v2591, 0
    %v3685 = vsel %vm2635, %v2594, 0
    %v3688 = vsel %vm2635, %v2597, 0
    %v3691 = vsel %vm2635, %v2600, 0
    %v3694 = vsel %vm2635, %v2603, 0
    %v3697 = vsel %vm2635, %v2606, 0
    %v3700 = vsel %vm2635, %v2609, 0
    %v3703 = vsel %vm2635, %v2612, 0
    %v3706 = vsel %vm2635, %v2615, 0
    %v3709 = vsel %vm2635, %v2618, 0
    %v3712 = vsel %vm2635, %v2621, 0
    %v3715 = vsel %vm2635, %v2624, 0
    %v3718 = vsel %vm2635, %v2627, 0
    %v3721 = vsel %vm2635, %v2630, 0
    %v3724 = vsel %vm2684, %v3674, 0
    %3726 = vmatpush.msra.mxu0 0.0
    %3727 = vmatpush.msra.mxu0 0.0
    %3728 = vmatpush.msra.mxu0 0.0
    %3729 = vmatpush.msra.mxu0 0.0
    %3730 = vmatpush.msra.mxu0 0.0
    %3731 = vmatpush.msra.mxu0 0.0
    %3732 = vmatpush.msra.mxu0 0.0
    %3733 = vmatpush.msra.mxu0 0.0
    %3734 = vmatpush.msra.mxu0 0.0
    %3735 = vmatpush.msra.mxu0 0.0
    %3736 = vmatpush.msra.mxu0 0.0
    %3737 = vmatpush.msra.mxu0 0.0
    %3738 = vmatpush.msra.mxu0 0.0
    %3739 = vmatpush.msra.mxu0 0.0
    %3740 = vmatpush.msra.mxu0 0.0
    %3741 = vmatpush.msra.mxu0 %v3724
    %3742 = vmatmul.f32.gmra.mxu0 %v3676
    %v3743 = vpop.f32.mrf.mxu0
    %v3744 = vadd.f32 0.0, %v3743
    %3745 = vmatmul.f32.gmra.mxu0 %v3679
    %v3746 = vpop.f32.mrf.mxu0
    %v3747 = vadd.f32 0.0, %v3746
    %3748 = vmatmul.f32.gmra.mxu0 %v3682
    %v3749 = vpop.f32.mrf.mxu0
    %v3750 = vadd.f32 0.0, %v3749
    %3751 = vmatmul.f32.gmra.mxu0 %v3685
    %v3752 = vpop.f32.mrf.mxu0
    %v3753 = vadd.f32 0.0, %v3752
    %3754 = vmatmul.f32.gmra.mxu0 %v3688
    %v3755 = vpop.f32.mrf.mxu0
    %v3756 = vadd.f32 0.0, %v3755
    %3757 = vmatmul.f32.gmra.mxu0 %v3691
    %v3758 = vpop.f32.mrf.mxu0
    %v3759 = vadd.f32 0.0, %v3758
    %3760 = vmatmul.f32.gmra.mxu0 %v3694
    %v3761 = vpop.f32.mrf.mxu0
    %v3762 = vadd.f32 0.0, %v3761
    %3763 = vmatmul.f32.gmra.mxu0 %v3697
    %v3764 = vpop.f32.mrf.mxu0
    %v3765 = vadd.f32 0.0, %v3764
    %3766 = vmatmul.f32.gmra.mxu0 %v3700
    %v3767 = vpop.f32.mrf.mxu0
    %v3768 = vadd.f32 0.0, %v3767
    %3769 = vmatmul.f32.gmra.mxu0 %v3703
    %v3770 = vpop.f32.mrf.mxu0
    %v3771 = vadd.f32 0.0, %v3770
    %3772 = vmatmul.f32.gmra.mxu0 %v3706
    %v3773 = vpop.f32.mrf.mxu0
    %v3774 = vadd.f32 0.0, %v3773
    %3775 = vmatmul.f32.gmra.mxu0 %v3709
    %v3776 = vpop.f32.mrf.mxu0
    %v3777 = vadd.f32 0.0, %v3776
    %3778 = vmatmul.f32.gmra.mxu0 %v3712
    %v3779 = vpop.f32.mrf.mxu0
    %v3780 = vadd.f32 0.0, %v3779
    %3781 = vmatmul.f32.gmra.mxu0 %v3715
    %v3782 = vpop.f32.mrf.mxu0
    %v3783 = vadd.f32 0.0, %v3782
    %3784 = vmatmul.f32.gmra.mxu0 %v3718
    %v3785 = vpop.f32.mrf.mxu0
    %v3786 = vadd.f32 0.0, %v3785
    %3787 = vmatmul.f32.gmra.mxu0 %v3721
    %v3788 = vpop.f32.mrf.mxu0
    %v3789 = vadd.f32 0.0, %v3788
    %3790 = vdwg.mxu0
    %v3791 = vadd.f32 %v3657, %v3744
    %v3792 = vadd.f32 %v3658, %v3747
    %v3793 = vadd.f32 %v3659, %v3750
    %v3794 = vadd.f32 %v3660, %v3753
    %v3795 = vadd.f32 %v3661, %v3756
    %v3796 = vadd.f32 %v3662, %v3759
    %v3797 = vadd.f32 %v3663, %v3762
    %v3798 = vadd.f32 %v3664, %v3765
    %v3799 = vadd.f32 %v3665, %v3768
    %v3800 = vadd.f32 %v3666, %v3771
    %v3801 = vadd.f32 %v3667, %v3774
    %v3802 = vadd.f32 %v3668, %v3777
    %v3803 = vadd.f32 %v3669, %v3780
    %v3804 = vadd.f32 %v3670, %v3783
    %v3805 = vadd.f32 %v3671, %v3786
    %v3806 = vadd.f32 %v3672, %v3789
    %v3807 = vld [vmem:[#allocation5] sm:$0x1]
    %v3808 = vperm.slane %v3807, 0
    %v3809 = vadd.f32 %v3791, %v3808
    %v3810 = vadd.f32 %v3792, %v3808
    %v3811 = vadd.f32 %v3793, %v3808
    %v3812 = vadd.f32 %v3794, %v3808
    %v3813 = vadd.f32 %v3795, %v3808
    %v3814 = vadd.f32 %v3796, %v3808
    %v3815 = vadd.f32 %v3797, %v3808
    %v3816 = vadd.f32 %v3798, %v3808
    %v3817 = vadd.f32 %v3799, %v3808
    %v3818 = vadd.f32 %v3800, %v3808
    %v3819 = vadd.f32 %v3801, %v3808
    %v3820 = vadd.f32 %v3802, %v3808
    %v3821 = vadd.f32 %v3803, %v3808
    %v3822 = vadd.f32 %v3804, %v3808
    %v3823 = vadd.f32 %v3805, %v3808
    %v3824 = vadd.f32 %v3806, %v3808
    %vm3825 = vcmask 64512
    %v3826 = vsel %vm3825, %v3809, 0.0
    %v3827 = vsel %vm3825, %v3810, 0.0
    %v3828 = vadd.f32 %v3826, %v3827
    %v3829 = vsel %vm3825, %v3811, 0.0
    %v3830 = vadd.f32 %v3828, %v3829
    %v3831 = vsel %vm3825, %v3812, 0.0
    %v3832 = vadd.f32 %v3830, %v3831
    %v3833 = vsel %vm3825, %v3813, 0.0
    %v3834 = vadd.f32 %v3832, %v3833
    %v3835 = vsel %vm3825, %v3814, 0.0
    %v3836 = vadd.f32 %v3834, %v3835
    %v3837 = vsel %vm3825, %v3815, 0.0
    %v3838 = vadd.f32 %v3836, %v3837
    %v3839 = vsel %vm3825, %v3816, 0.0
    %v3840 = vadd.f32 %v3838, %v3839
    %v3841 = vsel %vm3825, %v3817, 0.0
    %v3842 = vadd.f32 %v3840, %v3841
    %v3843 = vsel %vm3825, %v3818, 0.0
    %v3844 = vadd.f32 %v3842, %v3843
    %v3845 = vsel %vm3825, %v3819, 0.0
    %v3846 = vadd.f32 %v3844, %v3845
    %v3847 = vsel %vm3825, %v3820, 0.0
    %v3848 = vadd.f32 %v3846, %v3847
    %v3849 = vsel %vm3825, %v3821, 0.0
    %v3850 = vadd.f32 %v3848, %v3849
    %v3851 = vsel %vm3825, %v3822, 0.0
    %v3852 = vadd.f32 %v3850, %v3851
    %v3853 = vsel %vm3825, %v3823, 0.0
    %v3854 = vadd.f32 %v3852, %v3853
    %v3855 = vsel %vm3825, %v3824, 0.0
    %v3856 = vadd.f32 %v3854, %v3855
    %v3857 = vrot.slane %v3856, 4
    %v3858 = vadd.f32 %v3856, %v3857
    %v3859 = vrot.slane %v3858, 2
    %v3860 = vadd.f32 %v3858, %v3859
    %v3861 = vrot.slane %v3860, 1
    %v3862 = vadd.f32 %v3860, %v3861
    %v3863 = vmul.f32 %v3862, 0.0078125
    %v3864 = vmul.f32 %v3809, %v3809
    %v3865 = vmul.f32 %v3810, %v3810
    %v3866 = vmul.f32 %v3811, %v3811
    %v3867 = vmul.f32 %v3812, %v3812
    %v3868 = vmul.f32 %v3813, %v3813
    %v3869 = vmul.f32 %v3814, %v3814
    %v3870 = vmul.f32 %v3815, %v3815
    %v3871 = vmul.f32 %v3816, %v3816
    %v3872 = vmul.f32 %v3817, %v3817
    %v3873 = vmul.f32 %v3818, %v3818
    %v3874 = vmul.f32 %v3819, %v3819
    %v3875 = vmul.f32 %v3820, %v3820
    %v3876 = vmul.f32 %v3821, %v3821
    %v3877 = vmul.f32 %v3822, %v3822
    %v3878 = vmul.f32 %v3823, %v3823
    %v3879 = vmul.f32 %v3824, %v3824
    %v3880 = vsel %vm3825, %v3864, 0.0
    %v3881 = vsel %vm3825, %v3865, 0.0
    %v3882 = vadd.f32 %v3880, %v3881
    %v3883 = vsel %vm3825, %v3866, 0.0
    %v3884 = vadd.f32 %v3882, %v3883
    %v3885 = vsel %vm3825, %v3867, 0.0
    %v3886 = vadd.f32 %v3884, %v3885
    %v3887 = vsel %vm3825, %v3868, 0.0
    %v3888 = vadd.f32 %v3886, %v3887
    %v3889 = vsel %vm3825, %v3869, 0.0
    %v3890 = vadd.f32 %v3888, %v3889
    %v3891 = vsel %vm3825, %v3870, 0.0
    %v3892 = vadd.f32 %v3890, %v3891
    %v3893 = vsel %vm3825, %v3871, 0.0
    %v3894 = vadd.f32 %v3892, %v3893
    %v3895 = vsel %vm3825, %v3872, 0.0
    %v3896 = vadd.f32 %v3894, %v3895
    %v3897 = vsel %vm3825, %v3873, 0.0
    %v3898 = vadd.f32 %v3896, %v3897
    %v3899 = vsel %vm3825, %v3874, 0.0
    %v3900 = vadd.f32 %v3898, %v3899
    %v3901 = vsel %vm3825, %v3875, 0.0
    %v3902 = vadd.f32 %v3900, %v3901
    %v3903 = vsel %vm3825, %v3876, 0.0
    %v3904 = vadd.f32 %v3902, %v3903
    %v3905 = vsel %vm3825, %v3877, 0.0
    %v3906 = vadd.f32 %v3904, %v3905
    %v3907 = vsel %vm3825, %v3878, 0.0
    %v3908 = vadd.f32 %v3906, %v3907
    %v3909 = vsel %vm3825, %v3879, 0.0
    %v3910 = vadd.f32 %v3908, %v3909
    %v3911 = vrot.slane %v3910, 4
    %v3912 = vadd.f32 %v3910, %v3911
    %v3913 = vrot.slane %v3912, 2
    %v3914 = vadd.f32 %v3912, %v3913
    %v3915 = vrot.slane %v3914, 1
    %v3916 = vadd.f32 %v3914, %v3915
    %v3917 = vmul.f32 %v3916, 0.0078125
    %v3918 = vmul.f32 %v3863, %v3863
    %v3919 = vsub.f32 %v3917, %v3918
    %v3920 = vld [vmem:[#allocation5 + $0x1] sm:$0x1]
    %v3921 = vadd.f32 %v3919, 1e-05
    %v3922 = vrsqrt.pop %v3921
    %v3923 = vmul.f32 %v3922, %v3921
    %v3924 = vmul.f32 %v3923, %v3922
    %v3925 = vmul.f32 0.5, %v3924
    %v3926 = vsub.f32 1.5, %v3925
    %v3927 = vmul.f32 %v3922, %v3926
    %vm3928 = vweird.f32 %v3921
    %vm3929 = vweird.f32 %v3922
    %vm3930 = vmor %vm3928, %vm3929
    %v3931 = vsel %vm3930, %v3922, %v3927
    %v3932 = vmul.f32 %v3920, %v3931
    %v3933 = vld [vmem:[#allocation5 + $0x2] sm:$0x1]
    %v3934 = vmul.f32 %v3863, %v3932
    %v3935 = vsub.f32 %v3933, %v3934
    %v3936 = vperm.slane %v3932, 0
    %v3937 = vmul.f32 %v3809, %v3936
    %v3938 = vmul.f32 %v3810, %v3936
    %v3939 = vmul.f32 %v3811, %v3936
    %v3940 = vmul.f32 %v3812, %v3936
    %v3941 = vmul.f32 %v3813, %v3936
    %v3942 = vmul.f32 %v3814, %v3936
    %v3943 = vmul.f32 %v3815, %v3936
    %v3944 = vmul.f32 %v3816, %v3936
    %v3945 = vmul.f32 %v3817, %v3936
    %v3946 = vmul.f32 %v3818, %v3936
    %v3947 = vmul.f32 %v3819, %v3936
    %v3948 = vmul.f32 %v3820, %v3936
    %v3949 = vmul.f32 %v3821, %v3936
    %v3950 = vmul.f32 %v3822, %v3936
    %v3951 = vmul.f32 %v3823, %v3936
    %v3952 = vmul.f32 %v3824, %v3936
    %v3953 = vperm.slane %v3935, 0
    %v3954 = vadd.f32 %v3937, %v3953
    %v3955 = vadd.f32 %v3938, %v3953
    %v3956 = vadd.f32 %v3939, %v3953
    %v3957 = vadd.f32 %v3940, %v3953
    %v3958 = vadd.f32 %v3941, %v3953
    %v3959 = vadd.f32 %v3942, %v3953
    %v3960 = vadd.f32 %v3943, %v3953
    %v3961 = vadd.f32 %v3944, %v3953
    %v3962 = vadd.f32 %v3945, %v3953
    %v3963 = vadd.f32 %v3946, %v3953
    %v3964 = vadd.f32 %v3947, %v3953
    %v3965 = vadd.f32 %v3948, %v3953
    %v3966 = vadd.f32 %v3949, %v3953
    %v3967 = vadd.f32 %v3950, %v3953
    %v3968 = vadd.f32 %v3951, %v3953
    %v3969 = vadd.f32 %v3952, %v3953
    %v3970 = vmax.f32 %v3954, 0.0
    %v3971 = vmax.f32 %v3955, 0.0
    %v3972 = vmax.f32 %v3956, 0.0
    %v3973 = vmax.f32 %v3957, 0.0
    %v3974 = vmax.f32 %v3958, 0.0
    %v3975 = vmax.f32 %v3959, 0.0
    %v3976 = vmax.f32 %v3960, 0.0
    %v3977 = vmax.f32 %v3961, 0.0
    %v3978 = vmax.f32 %v3962, 0.0
    %v3979 = vmax.f32 %v3963, 0.0
    %v3980 = vmax.f32 %v3964, 0.0
    %v3981 = vmax.f32 %v3965, 0.0
    %v3982 = vmax.f32 %v3966, 0.0
    %v3983 = vmax.f32 %v3967, 0.0
    %v3984 = vmax.f32 %v3968, 0.0
    %v3985 = vmax.f32 %v3969, 0.0
    %v3986 = vld [vmem:[#allocation7] sm:$0xff]
    %v3987 = vld [vmem:[#allocation7 + $0x8] sm:$0xff]
    %v3988 = vld [vmem:[#allocation7 + $0x10] sm:$0xff]
    %v3989 = vld [vmem:[#allocation7 + $0x18] sm:$0xff]
    %v3990 = vld [vmem:[#allocation7 + $0x20] sm:$0xff]
    %v3991 = vld [vmem:[#allocation7 + $0x28] sm:$0xff]
    %v3992 = vld [vmem:[#allocation7 + $0x30] sm:$0xff]
    %v3993 = vld [vmem:[#allocation7 + $0x38] sm:$0xff]
    %v3994 = vld [vmem:[#allocation7 + $0x40] sm:$0xff]
    %v3995 = vld [vmem:[#allocation7 + $0x48] sm:$0xff]
    %v3996 = vld [vmem:[#allocation7 + $0x50] sm:$0xff]
    %v3997 = vld [vmem:[#allocation7 + $0x58] sm:$0xff]
    %v3998 = vld [vmem:[#allocation7 + $0x60] sm:$0xff]
    %v3999 = vld [vmem:[#allocation7 + $0x68] sm:$0xff]
    %v4000 = vld [vmem:[#allocation7 + $0x70] sm:$0xff]
    %v4001 = vld [vmem:[#allocation7 + $0x78] sm:$0xff]
    %v4002 = vld [vmem:[#allocation7 + $0x80] sm:$0xff]
    %v4003 = vld [vmem:[#allocation7 + $0x88] sm:$0xff]
    %v4004 = vld [vmem:[#allocation7 + $0x90] sm:$0xff]
    %v4005 = vld [vmem:[#allocation7 + $0x98] sm:$0xff]
    %v4006 = vld [vmem:[#allocation7 + $0xa0] sm:$0xff]
    %v4007 = vld [vmem:[#allocation7 + $0xa8] sm:$0xff]
    %v4008 = vld [vmem:[#allocation7 + $0xb0] sm:$0xff]
    %v4009 = vld [vmem:[#allocation7 + $0xb8] sm:$0xff]
    %v4010 = vld [vmem:[#allocation7 + $0xc0] sm:$0xff]
    %v4011 = vld [vmem:[#allocation7 + $0xc8] sm:$0xff]
    %v4012 = vld [vmem:[#allocation7 + $0xd0] sm:$0xff]
    %v4013 = vld [vmem:[#allocation7 + $0xd8] sm:$0xff]
    %v4014 = vld [vmem:[#allocation7 + $0xe0] sm:$0xff]
    %v4015 = vld [vmem:[#allocation7 + $0xe8] sm:$0xff]
    %v4016 = vld [vmem:[#allocation7 + $0xf0] sm:$0xff]
    %v4017 = vld [vmem:[#allocation7 + $0xf8] sm:$0xff]
    %v4018 = vld [vmem:[#allocation7 + $0x100] sm:$0xff]
    %v4019 = vld [vmem:[#allocation7 + $0x108] sm:$0xff]
    %v4020 = vld [vmem:[#allocation7 + $0x110] sm:$0xff]
    %v4021 = vld [vmem:[#allocation7 + $0x118] sm:$0xff]
    %4022 = vmatpush.msra.mxu0 %v3985
    %4023 = vmatpush.msra.mxu0 %v3984
    %4024 = vmatpush.msra.mxu0 %v3983
    %4025 = vmatpush.msra.mxu0 %v3982
    %4026 = vmatpush.msra.mxu0 %v3981
    %4027 = vmatpush.msra.mxu0 %v3980
    %4028 = vmatpush.msra.mxu0 %v3979
    %4029 = vmatpush.msra.mxu0 %v3978
    %4030 = vmatpush.msra.mxu0 %v3977
    %4031 = vmatpush.msra.mxu0 %v3976
    %4032 = vmatpush.msra.mxu0 %v3975
    %4033 = vmatpush.msra.mxu0 %v3974
    %4034 = vmatpush.msra.mxu0 %v3973
    %4035 = vmatpush.msra.mxu0 %v3972
    %4036 = vmatpush.msra.mxu0 %v3971
    %4037 = vmatpush.msra.mxu0 %v3970
    %4038 = vmatmul.f32.gmra.mxu0 %v3986
    %v4039 = vpop.f32.mrf.mxu0
    %v4040 = vadd.f32 0.0, %v4039
    %4041 = vmatmul.f32.gmra.mxu0 %v3987
    %v4042 = vpop.f32.mrf.mxu0
    %v4043 = vadd.f32 0.0, %v4042
    %4044 = vmatmul.f32.gmra.mxu0 %v3988
    %v4045 = vpop.f32.mrf.mxu0
    %v4046 = vadd.f32 0.0, %v4045
    %4047 = vmatmul.f32.gmra.mxu0 %v3989
    %v4048 = vpop.f32.mrf.mxu0
    %v4049 = vadd.f32 0.0, %v4048
    %4050 = vmatmul.f32.gmra.mxu0 %v3990
    %v4051 = vpop.f32.mrf.mxu0
    %v4052 = vadd.f32 0.0, %v4051
    %4053 = vmatmul.f32.gmra.mxu0 %v3991
    %v4054 = vpop.f32.mrf.mxu0
    %v4055 = vadd.f32 0.0, %v4054
    %4056 = vmatmul.f32.gmra.mxu0 %v3992
    %v4057 = vpop.f32.mrf.mxu0
    %v4058 = vadd.f32 0.0, %v4057
    %4059 = vmatmul.f32.gmra.mxu0 %v3993
    %v4060 = vpop.f32.mrf.mxu0
    %v4061 = vadd.f32 0.0, %v4060
    %4062 = vmatmul.f32.gmra.mxu0 %v3994
    %v4063 = vpop.f32.mrf.mxu0
    %v4064 = vadd.f32 0.0, %v4063
    %4065 = vmatmul.f32.gmra.mxu0 %v3995
    %v4066 = vpop.f32.mrf.mxu0
    %v4067 = vadd.f32 0.0, %v4066
    %4068 = vmatmul.f32.gmra.mxu0 %v3996
    %v4069 = vpop.f32.mrf.mxu0
    %v4070 = vadd.f32 0.0, %v4069
    %4071 = vmatmul.f32.gmra.mxu0 %v3997
    %v4072 = vpop.f32.mrf.mxu0
    %v4073 = vadd.f32 0.0, %v4072
    %4074 = vmatmul.f32.gmra.mxu0 %v3998
    %v4075 = vpop.f32.mrf.mxu0
    %v4076 = vadd.f32 0.0, %v4075
    %4077 = vmatmul.f32.gmra.mxu0 %v3999
    %v4078 = vpop.f32.mrf.mxu0
    %v4079 = vadd.f32 0.0, %v4078
    %4080 = vmatmul.f32.gmra.mxu0 %v4000
    %v4081 = vpop.f32.mrf.mxu0
    %v4082 = vadd.f32 0.0, %v4081
    %4083 = vmatmul.f32.gmra.mxu0 %v4001
    %v4084 = vpop.f32.mrf.mxu0
    %v4085 = vadd.f32 0.0, %v4084
    %4086 = vmatmul.f32.gmra.mxu0 %v4002
    %v4087 = vpop.f32.mrf.mxu0
    %v4088 = vadd.f32 0.0, %v4087
    %4089 = vmatmul.f32.gmra.mxu0 %v4003
    %v4090 = vpop.f32.mrf.mxu0
    %v4091 = vadd.f32 0.0, %v4090
    %4092 = vmatmul.f32.gmra.mxu0 %v4004
    %v4093 = vpop.f32.mrf.mxu0
    %v4094 = vadd.f32 0.0, %v4093
    %4095 = vmatmul.f32.gmra.mxu0 %v4005
    %v4096 = vpop.f32.mrf.mxu0
    %v4097 = vadd.f32 0.0, %v4096
    %4098 = vmatmul.f32.gmra.mxu0 %v4006
    %v4099 = vpop.f32.mrf.mxu0
    %v4100 = vadd.f32 0.0, %v4099
    %4101 = vmatmul.f32.gmra.mxu0 %v4007
    %v4102 = vpop.f32.mrf.mxu0
    %v4103 = vadd.f32 0.0, %v4102
    %4104 = vmatmul.f32.gmra.mxu0 %v4008
    %v4105 = vpop.f32.mrf.mxu0
    %v4106 = vadd.f32 0.0, %v4105
    %4107 = vmatmul.f32.gmra.mxu0 %v4009
    %v4108 = vpop.f32.mrf.mxu0
    %v4109 = vadd.f32 0.0, %v4108
    %4110 = vmatmul.f32.gmra.mxu0 %v4010
    %v4111 = vpop.f32.mrf.mxu0
    %v4112 = vadd.f32 0.0, %v4111
    %4113 = vmatmul.f32.gmra.mxu0 %v4011
    %v4114 = vpop.f32.mrf.mxu0
    %v4115 = vadd.f32 0.0, %v4114
    %4116 = vmatmul.f32.gmra.mxu0 %v4012
    %v4117 = vpop.f32.mrf.mxu0
    %v4118 = vadd.f32 0.0, %v4117
    %4119 = vmatmul.f32.gmra.mxu0 %v4013
    %v4120 = vpop.f32.mrf.mxu0
    %v4121 = vadd.f32 0.0, %v4120
    %4122 = vmatmul.f32.gmra.mxu0 %v4014
    %v4123 = vpop.f32.mrf.mxu0
    %v4124 = vadd.f32 0.0, %v4123
    %4125 = vmatmul.f32.gmra.mxu0 %v4015
    %v4126 = vpop.f32.mrf.mxu0
    %v4127 = vadd.f32 0.0, %v4126
    %4128 = vmatmul.f32.gmra.mxu0 %v4016
    %v4129 = vpop.f32.mrf.mxu0
    %v4130 = vadd.f32 0.0, %v4129
    %4131 = vmatmul.f32.gmra.mxu0 %v4017
    %v4132 = vpop.f32.mrf.mxu0
    %v4133 = vadd.f32 0.0, %v4132
    %4134 = vmatmul.f32.gmra.mxu0 %v4018
    %v4135 = vpop.f32.mrf.mxu0
    %v4136 = vadd.f32 0.0, %v4135
    %4137 = vmatmul.f32.gmra.mxu0 %v4019
    %v4138 = vpop.f32.mrf.mxu0
    %v4139 = vadd.f32 0.0, %v4138
    %4140 = vmatmul.f32.gmra.mxu0 %v4020
    %v4141 = vpop.f32.mrf.mxu0
    %v4142 = vadd.f32 0.0, %v4141
    %4143 = vmatmul.f32.gmra.mxu0 %v4021
    %v4144 = vpop.f32.mrf.mxu0
    %v4145 = vadd.f32 0.0, %v4144
    %4146 = vdwg.mxu0
    %v4147 = vld [vmem:[%s5] sm:$0xff]
    %s4148 = scalar_lea.vmem %s5, 8
    %v4149 = vld [vmem:[%s4148] sm:$0xff]
    %v4151 = vsel %vm3825, %v4052, 0
    %v4154 = vsel %vm3825, %v4055, 0
    %v4157 = vsel %vm3825, %v4058, 0
    %v4160 = vsel %vm3825, %v4061, 0
    %4162 = vmatpush.msra.mxu0 0.0
    %4163 = vmatpush.msra.mxu0 0.0
    %4164 = vmatpush.msra.mxu0 0.0
    %4165 = vmatpush.msra.mxu0 0.0
    %4166 = vmatpush.msra.mxu0 0.0
    %4167 = vmatpush.msra.mxu0 0.0
    %4168 = vmatpush.msra.mxu0 0.0
    %4169 = vmatpush.msra.mxu0 0.0
    %4170 = vmatpush.msra.mxu0 0.0
    %4171 = vmatpush.msra.mxu0 0.0
    %4172 = vmatpush.msra.mxu0 0.0
    %4173 = vmatpush.msra.mxu0 0.0
    %4174 = vmatpush.msra.mxu0 0.0
    %4175 = vmatpush.msra.mxu0 0.0
    %4176 = vmatpush.msra.mxu0 0.0
    %4177 = vmatpush.msra.mxu0 %v4149
    %4178 = vmatmul.f32.gmra.mxu0 %v4151
    %v4179 = vpop.f32.mrf.mxu0
    %v4180 = vadd.f32 0.0, %v4179
    %4181 = vmatmul.f32.gmra.mxu0 %v4154
    %v4182 = vpop.f32.mrf.mxu0
    %v4183 = vadd.f32 0.0, %v4182
    %4184 = vmatmul.f32.gmra.mxu0 %v4157
    %v4185 = vpop.f32.mrf.mxu0
    %v4186 = vadd.f32 0.0, %v4185
    %4187 = vmatmul.f32.gmra.mxu0 %v4160
    %v4188 = vpop.f32.mrf.mxu0
    %v4189 = vadd.f32 0.0, %v4188
    %4190 = vdwg.mxu0
    %v4192 = vsel %vm3825, %v4040, 0
    %v4195 = vsel %vm3825, %v4043, 0
    %v4198 = vsel %vm3825, %v4046, 0
    %v4201 = vsel %vm3825, %v4049, 0
    %4203 = vmatpush.msra.mxu0 0.0
    %4204 = vmatpush.msra.mxu0 0.0
    %4205 = vmatpush.msra.mxu0 0.0
    %4206 = vmatpush.msra.mxu0 0.0
    %4207 = vmatpush.msra.mxu0 0.0
    %4208 = vmatpush.msra.mxu0 0.0
    %4209 = vmatpush.msra.mxu0 0.0
    %4210 = vmatpush.msra.mxu0 0.0
    %4211 = vmatpush.msra.mxu0 0.0
    %4212 = vmatpush.msra.mxu0 0.0
    %4213 = vmatpush.msra.mxu0 0.0
    %4214 = vmatpush.msra.mxu0 0.0
    %4215 = vmatpush.msra.mxu0 0.0
    %4216 = vmatpush.msra.mxu0 0.0
    %4217 = vmatpush.msra.mxu0 0.0
    %4218 = vmatpush.msra.mxu0 %v4147
    %4219 = vmatmul.f32.gmra.mxu0 %v4192
    %v4220 = vpop.f32.mrf.mxu0
    %v4221 = vadd.f32 %v4180, %v4220
    %4222 = vmatmul.f32.gmra.mxu0 %v4195
    %v4223 = vpop.f32.mrf.mxu0
    %v4224 = vadd.f32 %v4183, %v4223
    %4225 = vmatmul.f32.gmra.mxu0 %v4198
    %v4226 = vpop.f32.mrf.mxu0
    %v4227 = vadd.f32 %v4186, %v4226
    %4228 = vmatmul.f32.gmra.mxu0 %v4201
    %v4229 = vpop.f32.mrf.mxu0
    %v4230 = vadd.f32 %v4189, %v4229
    %4231 = vdwg.mxu0
    %s4232 = scalar_lea.vmem %s5, 16
    %v4233 = vld [vmem:[%s4232] sm:$0xff]
    %v4235 = vsel %vm3825, %v4064, 0
    %v4238 = vsel %vm3825, %v4067, 0
    %v4241 = vsel %vm3825, %v4070, 0
    %v4244 = vsel %vm3825, %v4073, 0
    %4246 = vmatpush.msra.mxu0 0.0
    %4247 = vmatpush.msra.mxu0 0.0
    %4248 = vmatpush.msra.mxu0 0.0
    %4249 = vmatpush.msra.mxu0 0.0
    %4250 = vmatpush.msra.mxu0 0.0
    %4251 = vmatpush.msra.mxu0 0.0
    %4252 = vmatpush.msra.mxu0 0.0
    %4253 = vmatpush.msra.mxu0 0.0
    %4254 = vmatpush.msra.mxu0 0.0
    %4255 = vmatpush.msra.mxu0 0.0
    %4256 = vmatpush.msra.mxu0 0.0
    %4257 = vmatpush.msra.mxu0 0.0
    %4258 = vmatpush.msra.mxu0 0.0
    %4259 = vmatpush.msra.mxu0 0.0
    %4260 = vmatpush.msra.mxu0 0.0
    %4261 = vmatpush.msra.mxu0 %v4233
    %4262 = vmatmul.f32.gmra.mxu0 %v4235
    %v4263 = vpop.f32.mrf.mxu0
    %v4264 = vadd.f32 0.0, %v4263
    %4265 = vmatmul.f32.gmra.mxu0 %v4238
    %v4266 = vpop.f32.mrf.mxu0
    %v4267 = vadd.f32 0.0, %v4266
    %4268 = vmatmul.f32.gmra.mxu0 %v4241
    %v4269 = vpop.f32.mrf.mxu0
    %v4270 = vadd.f32 0.0, %v4269
    %4271 = vmatmul.f32.gmra.mxu0 %v4244
    %v4272 = vpop.f32.mrf.mxu0
    %v4273 = vadd.f32 0.0, %v4272
    %4274 = vdwg.mxu0
    %v4275 = vadd.f32 %v4221, %v4264
    %v4276 = vadd.f32 %v4224, %v4267
    %v4277 = vadd.f32 %v4227, %v4270
    %v4278 = vadd.f32 %v4230, %v4273
    %s4279 = scalar_lea.vmem %s5, 24
    %v4280 = vld [vmem:[%s4279] sm:$0xff]
    %v4282 = vsel %vm3825, %v4076, 0
    %v4285 = vsel %vm3825, %v4079, 0
    %v4288 = vsel %vm3825, %v4082, 0
    %v4291 = vsel %vm3825, %v4085, 0
    %4293 = vmatpush.msra.mxu0 0.0
    %4294 = vmatpush.msra.mxu0 0.0
    %4295 = vmatpush.msra.mxu0 0.0
    %4296 = vmatpush.msra.mxu0 0.0
    %4297 = vmatpush.msra.mxu0 0.0
    %4298 = vmatpush.msra.mxu0 0.0
    %4299 = vmatpush.msra.mxu0 0.0
    %4300 = vmatpush.msra.mxu0 0.0
    %4301 = vmatpush.msra.mxu0 0.0
    %4302 = vmatpush.msra.mxu0 0.0
    %4303 = vmatpush.msra.mxu0 0.0
    %4304 = vmatpush.msra.mxu0 0.0
    %4305 = vmatpush.msra.mxu0 0.0
    %4306 = vmatpush.msra.mxu0 0.0
    %4307 = vmatpush.msra.mxu0 0.0
    %4308 = vmatpush.msra.mxu0 %v4280
    %4309 = vmatmul.f32.gmra.mxu0 %v4282
    %v4310 = vpop.f32.mrf.mxu0
    %v4311 = vadd.f32 0.0, %v4310
    %4312 = vmatmul.f32.gmra.mxu0 %v4285
    %v4313 = vpop.f32.mrf.mxu0
    %v4314 = vadd.f32 0.0, %v4313
    %4315 = vmatmul.f32.gmra.mxu0 %v4288
    %v4316 = vpop.f32.mrf.mxu0
    %v4317 = vadd.f32 0.0, %v4316
    %4318 = vmatmul.f32.gmra.mxu0 %v4291
    %v4319 = vpop.f32.mrf.mxu0
    %v4320 = vadd.f32 0.0, %v4319
    %4321 = vdwg.mxu0
    %v4322 = vadd.f32 %v4275, %v4311
    %v4323 = vadd.f32 %v4276, %v4314
    %v4324 = vadd.f32 %v4277, %v4317
    %v4325 = vadd.f32 %v4278, %v4320
    %s4326 = scalar_lea.vmem %s5, 32
    %v4327 = vld [vmem:[%s4326] sm:$0xff]
    %v4329 = vsel %vm3825, %v4088, 0
    %v4332 = vsel %vm3825, %v4091, 0
    %v4335 = vsel %vm3825, %v4094, 0
    %v4338 = vsel %vm3825, %v4097, 0
    %4340 = vmatpush.msra.mxu0 0.0
    %4341 = vmatpush.msra.mxu0 0.0
    %4342 = vmatpush.msra.mxu0 0.0
    %4343 = vmatpush.msra.mxu0 0.0
    %4344 = vmatpush.msra.mxu0 0.0
    %4345 = vmatpush.msra.mxu0 0.0
    %4346 = vmatpush.msra.mxu0 0.0
    %4347 = vmatpush.msra.mxu0 0.0
    %4348 = vmatpush.msra.mxu0 0.0
    %4349 = vmatpush.msra.mxu0 0.0
    %4350 = vmatpush.msra.mxu0 0.0
    %4351 = vmatpush.msra.mxu0 0.0
    %4352 = vmatpush.msra.mxu0 0.0
    %4353 = vmatpush.msra.mxu0 0.0
    %4354 = vmatpush.msra.mxu0 0.0
    %4355 = vmatpush.msra.mxu0 %v4327
    %4356 = vmatmul.f32.gmra.mxu0 %v4329
    %v4357 = vpop.f32.mrf.mxu0
    %v4358 = vadd.f32 0.0, %v4357
    %4359 = vmatmul.f32.gmra.mxu0 %v4332
    %v4360 = vpop.f32.mrf.mxu0
    %v4361 = vadd.f32 0.0, %v4360
    %4362 = vmatmul.f32.gmra.mxu0 %v4335
    %v4363 = vpop.f32.mrf.mxu0
    %v4364 = vadd.f32 0.0, %v4363
    %4365 = vmatmul.f32.gmra.mxu0 %v4338
    %v4366 = vpop.f32.mrf.mxu0
    %v4367 = vadd.f32 0.0, %v4366
    %4368 = vdwg.mxu0
    %v4369 = vadd.f32 %v4322, %v4358
    %v4370 = vadd.f32 %v4323, %v4361
    %v4371 = vadd.f32 %v4324, %v4364
    %v4372 = vadd.f32 %v4325, %v4367
    %s4373 = scalar_lea.vmem %s5, 40
    %v4374 = vld [vmem:[%s4373] sm:$0xff]
    %v4376 = vsel %vm3825, %v4100, 0
    %v4379 = vsel %vm3825, %v4103, 0
    %v4382 = vsel %vm3825, %v4106, 0
    %v4385 = vsel %vm3825, %v4109, 0
    %4387 = vmatpush.msra.mxu0 0.0
    %4388 = vmatpush.msra.mxu0 0.0
    %4389 = vmatpush.msra.mxu0 0.0
    %4390 = vmatpush.msra.mxu0 0.0
    %4391 = vmatpush.msra.mxu0 0.0
    %4392 = vmatpush.msra.mxu0 0.0
    %4393 = vmatpush.msra.mxu0 0.0
    %4394 = vmatpush.msra.mxu0 0.0
    %4395 = vmatpush.msra.mxu0 0.0
    %4396 = vmatpush.msra.mxu0 0.0
    %4397 = vmatpush.msra.mxu0 0.0
    %4398 = vmatpush.msra.mxu0 0.0
    %4399 = vmatpush.msra.mxu0 0.0
    %4400 = vmatpush.msra.mxu0 0.0
    %4401 = vmatpush.msra.mxu0 0.0
    %4402 = vmatpush.msra.mxu0 %v4374
    %4403 = vmatmul.f32.gmra.mxu0 %v4376
    %v4404 = vpop.f32.mrf.mxu0
    %v4405 = vadd.f32 0.0, %v4404
    %4406 = vmatmul.f32.gmra.mxu0 %v4379
    %v4407 = vpop.f32.mrf.mxu0
    %v4408 = vadd.f32 0.0, %v4407
    %4409 = vmatmul.f32.gmra.mxu0 %v4382
    %v4410 = vpop.f32.mrf.mxu0
    %v4411 = vadd.f32 0.0, %v4410
    %4412 = vmatmul.f32.gmra.mxu0 %v4385
    %v4413 = vpop.f32.mrf.mxu0
    %v4414 = vadd.f32 0.0, %v4413
    %4415 = vdwg.mxu0
    %v4416 = vadd.f32 %v4369, %v4405
    %v4417 = vadd.f32 %v4370, %v4408
    %v4418 = vadd.f32 %v4371, %v4411
    %v4419 = vadd.f32 %v4372, %v4414
    %s4420 = scalar_lea.vmem %s5, 48
    %v4421 = vld [vmem:[%s4420] sm:$0xff]
    %v4423 = vsel %vm3825, %v4112, 0
    %v4426 = vsel %vm3825, %v4115, 0
    %v4429 = vsel %vm3825, %v4118, 0
    %v4432 = vsel %vm3825, %v4121, 0
    %4434 = vmatpush.msra.mxu0 0.0
    %4435 = vmatpush.msra.mxu0 0.0
    %4436 = vmatpush.msra.mxu0 0.0
    %4437 = vmatpush.msra.mxu0 0.0
    %4438 = vmatpush.msra.mxu0 0.0
    %4439 = vmatpush.msra.mxu0 0.0
    %4440 = vmatpush.msra.mxu0 0.0
    %4441 = vmatpush.msra.mxu0 0.0
    %4442 = vmatpush.msra.mxu0 0.0
    %4443 = vmatpush.msra.mxu0 0.0
    %4444 = vmatpush.msra.mxu0 0.0
    %4445 = vmatpush.msra.mxu0 0.0
    %4446 = vmatpush.msra.mxu0 0.0
    %4447 = vmatpush.msra.mxu0 0.0
    %4448 = vmatpush.msra.mxu0 0.0
    %4449 = vmatpush.msra.mxu0 %v4421
    %4450 = vmatmul.f32.gmra.mxu0 %v4423
    %v4451 = vpop.f32.mrf.mxu0
    %v4452 = vadd.f32 0.0, %v4451
    %4453 = vmatmul.f32.gmra.mxu0 %v4426
    %v4454 = vpop.f32.mrf.mxu0
    %v4455 = vadd.f32 0.0, %v4454
    %4456 = vmatmul.f32.gmra.mxu0 %v4429
    %v4457 = vpop.f32.mrf.mxu0
    %v4458 = vadd.f32 0.0, %v4457
    %4459 = vmatmul.f32.gmra.mxu0 %v4432
    %v4460 = vpop.f32.mrf.mxu0
    %v4461 = vadd.f32 0.0, %v4460
    %4462 = vdwg.mxu0
    %v4463 = vadd.f32 %v4416, %v4452
    %v4464 = vadd.f32 %v4417, %v4455
    %v4465 = vadd.f32 %v4418, %v4458
    %v4466 = vadd.f32 %v4419, %v4461
    %s4467 = scalar_lea.vmem %s5, 56
    %v4468 = vld [vmem:[%s4467] sm:$0xff]
    %v4470 = vsel %vm3825, %v4124, 0
    %v4473 = vsel %vm3825, %v4127, 0
    %v4476 = vsel %vm3825, %v4130, 0
    %v4479 = vsel %vm3825, %v4133, 0
    %4481 = vmatpush.msra.mxu0 0.0
    %4482 = vmatpush.msra.mxu0 0.0
    %4483 = vmatpush.msra.mxu0 0.0
    %4484 = vmatpush.msra.mxu0 0.0
    %4485 = vmatpush.msra.mxu0 0.0
    %4486 = vmatpush.msra.mxu0 0.0
    %4487 = vmatpush.msra.mxu0 0.0
    %4488 = vmatpush.msra.mxu0 0.0
    %4489 = vmatpush.msra.mxu0 0.0
    %4490 = vmatpush.msra.mxu0 0.0
    %4491 = vmatpush.msra.mxu0 0.0
    %4492 = vmatpush.msra.mxu0 0.0
    %4493 = vmatpush.msra.mxu0 0.0
    %4494 = vmatpush.msra.mxu0 0.0
    %4495 = vmatpush.msra.mxu0 0.0
    %4496 = vmatpush.msra.mxu0 %v4468
    %4497 = vmatmul.f32.gmra.mxu0 %v4470
    %v4498 = vpop.f32.mrf.mxu0
    %v4499 = vadd.f32 0.0, %v4498
    %4500 = vmatmul.f32.gmra.mxu0 %v4473
    %v4501 = vpop.f32.mrf.mxu0
    %v4502 = vadd.f32 0.0, %v4501
    %4503 = vmatmul.f32.gmra.mxu0 %v4476
    %v4504 = vpop.f32.mrf.mxu0
    %v4505 = vadd.f32 0.0, %v4504
    %4506 = vmatmul.f32.gmra.mxu0 %v4479
    %v4507 = vpop.f32.mrf.mxu0
    %v4508 = vadd.f32 0.0, %v4507
    %4509 = vdwg.mxu0
    %v4510 = vadd.f32 %v4463, %v4499
    %v4511 = vadd.f32 %v4464, %v4502
    %v4512 = vadd.f32 %v4465, %v4505
    %v4513 = vadd.f32 %v4466, %v4508
    %s4514 = scalar_lea.vmem %s5, 64
    %v4515 = vld [vmem:[%s4514] sm:$0xff]
    %v4517 = vsel %vm3825, %v4136, 0
    %v4520 = vsel %vm3825, %v4139, 0
    %v4523 = vsel %vm3825, %v4142, 0
    %v4526 = vsel %vm3825, %v4145, 0
    %4528 = vmatpush.msra.mxu0 0.0
    %4529 = vmatpush.msra.mxu0 0.0
    %4530 = vmatpush.msra.mxu0 0.0
    %4531 = vmatpush.msra.mxu0 0.0
    %4532 = vmatpush.msra.mxu0 0.0
    %4533 = vmatpush.msra.mxu0 0.0
    %4534 = vmatpush.msra.mxu0 0.0
    %4535 = vmatpush.msra.mxu0 0.0
    %4536 = vmatpush.msra.mxu0 0.0
    %4537 = vmatpush.msra.mxu0 0.0
    %4538 = vmatpush.msra.mxu0 0.0
    %4539 = vmatpush.msra.mxu0 0.0
    %4540 = vmatpush.msra.mxu0 0.0
    %4541 = vmatpush.msra.mxu0 0.0
    %4542 = vmatpush.msra.mxu0 0.0
    %4543 = vmatpush.msra.mxu0 %v4515
    %4544 = vmatmul.f32.gmra.mxu0 %v4517
    %v4545 = vpop.f32.mrf.mxu0
    %v4546 = vadd.f32 0.0, %v4545
    %4547 = vmatmul.f32.gmra.mxu0 %v4520
    %v4548 = vpop.f32.mrf.mxu0
    %v4549 = vadd.f32 0.0, %v4548
    %4550 = vmatmul.f32.gmra.mxu0 %v4523
    %v4551 = vpop.f32.mrf.mxu0
    %v4552 = vadd.f32 0.0, %v4551
    %4553 = vmatmul.f32.gmra.mxu0 %v4526
    %v4554 = vpop.f32.mrf.mxu0
    %v4555 = vadd.f32 0.0, %v4554
    %4556 = vdwg.mxu0
    %v4557 = vadd.f32 %v4510, %v4546
    %v4558 = vadd.f32 %v4511, %v4549
    %v4559 = vadd.f32 %v4512, %v4552
    %v4560 = vadd.f32 %v4513, %v4555
    %v4561 = vld [vmem:[#allocation8] sm:$0x1]
    %v4562 = vperm.slane %v4561, 0
    %v4563 = vadd.f32 %v4557, %v4562
    %v4564 = vadd.f32 %v4558, %v4562
    %v4565 = vadd.f32 %v4559, %v4562
    %v4566 = vadd.f32 %v4560, %v4562
    %v4567 = vsel %vm3825, %v4563, 0.0
    %v4568 = vsel %vm3825, %v4564, 0.0
    %v4569 = vadd.f32 %v4567, %v4568
    %v4570 = vsel %vm3825, %v4565, 0.0
    %v4571 = vadd.f32 %v4569, %v4570
    %v4572 = vsel %vm3825, %v4566, 0.0
    %v4573 = vadd.f32 %v4571, %v4572
    %v4574 = vrot.slane %v4573, 4
    %v4575 = vadd.f32 %v4573, %v4574
    %v4576 = vrot.slane %v4575, 2
    %v4577 = vadd.f32 %v4575, %v4576
    %v4578 = vrot.slane %v4577, 1
    %v4579 = vadd.f32 %v4577, %v4578
    %v4580 = vmul.f32 %v4579, 0.03125
    %v4581 = vmul.f32 %v4563, %v4563
    %v4582 = vmul.f32 %v4564, %v4564
    %v4583 = vmul.f32 %v4565, %v4565
    %v4584 = vmul.f32 %v4566, %v4566
    %v4585 = vsel %vm3825, %v4581, 0.0
    %v4586 = vsel %vm3825, %v4582, 0.0
    %v4587 = vadd.f32 %v4585, %v4586
    %v4588 = vsel %vm3825, %v4583, 0.0
    %v4589 = vadd.f32 %v4587, %v4588
    %v4590 = vsel %vm3825, %v4584, 0.0
    %v4591 = vadd.f32 %v4589, %v4590
    %v4592 = vrot.slane %v4591, 4
    %v4593 = vadd.f32 %v4591, %v4592
    %v4594 = vrot.slane %v4593, 2
    %v4595 = vadd.f32 %v4593, %v4594
    %v4596 = vrot.slane %v4595, 1
    %v4597 = vadd.f32 %v4595, %v4596
    %v4598 = vmul.f32 %v4597, 0.03125
    %v4599 = vmul.f32 %v4580, %v4580
    %v4600 = vsub.f32 %v4598, %v4599
    %v4601 = vld [vmem:[#allocation8 + $0x1] sm:$0x1]
    %v4602 = vadd.f32 %v4600, 1e-05
    %v4603 = vrsqrt.pop %v4602
    %v4604 = vmul.f32 %v4603, %v4602
    %v4605 = vmul.f32 %v4604, %v4603
    %v4606 = vmul.f32 0.5, %v4605
    %v4607 = vsub.f32 1.5, %v4606
    %v4608 = vmul.f32 %v4603, %v4607
    %vm4609 = vweird.f32 %v4602
    %vm4610 = vweird.f32 %v4603
    %vm4611 = vmor %vm4609, %vm4610
    %v4612 = vsel %vm4611, %v4603, %v4608
    %v4613 = vmul.f32 %v4601, %v4612
    %v4614 = vld [vmem:[#allocation8 + $0x2] sm:$0x1]
    %v4615 = vmul.f32 %v4580, %v4613
    %v4616 = vsub.f32 %v4614, %v4615
    %v4617 = vperm.slane %v4613, 0
    %v4618 = vmul.f32 %v4563, %v4617
    %v4619 = vmul.f32 %v4564, %v4617
    %v4620 = vmul.f32 %v4565, %v4617
    %v4621 = vmul.f32 %v4566, %v4617
    %v4622 = vperm.slane %v4616, 0
    %v4623 = vadd.f32 %v4618, %v4622
    %v4624 = vadd.f32 %v4619, %v4622
    %v4625 = vadd.f32 %v4620, %v4622
    %v4626 = vadd.f32 %v4621, %v4622
    %v4627 = vmax.f32 %v4623, 0.0
    %v4628 = vmax.f32 %v4624, 0.0
    %v4629 = vmax.f32 %v4625, 0.0
    %v4630 = vmax.f32 %v4626, 0.0
    %v4631 = vld [vmem:[%s7] sm:$0xff]
    %v4632 = vld [vmem:[%s7 + $0x8] sm:$0xff]
    %v4633 = vld [vmem:[%s7 + $0x10] sm:$0xff]
    %v4634 = vld [vmem:[%s7 + $0x18] sm:$0xff]
    %v4635 = vld [vmem:[%s7 + $0x20] sm:$0xff]
    %v4636 = vld [vmem:[%s7 + $0x28] sm:$0xff]
    %v4637 = vld [vmem:[%s7 + $0x30] sm:$0xff]
    %v4638 = vld [vmem:[%s7 + $0x38] sm:$0xff]
    %v4639 = vld [vmem:[%s7 + $0x40] sm:$0xff]
    %vm4640 = vcmask 261120
    %v4642 = vsel %vm4640, %v4631, 0
    %v4645 = vsel %vm4640, %v4632, 0
    %v4648 = vsel %vm4640, %v4633, 0
    %v4651 = vsel %vm4640, %v4634, 0
    %v4654 = vsel %vm4640, %v4635, 0
    %v4657 = vsel %vm4640, %v4636, 0
    %v4660 = vsel %vm4640, %v4637, 0
    %v4663 = vsel %vm4640, %v4638, 0
    %v4666 = vsel %vm4640, %v4639, 0
    %4668 = vmatpush.msra.mxu0 0.0
    %4669 = vmatpush.msra.mxu0 0.0
    %4670 = vmatpush.msra.mxu0 0.0
    %4671 = vmatpush.msra.mxu0 0.0
    %4672 = vmatpush.msra.mxu0 0.0
    %4673 = vmatpush.msra.mxu0 0.0
    %4674 = vmatpush.msra.mxu0 0.0
    %4675 = vmatpush.msra.mxu0 0.0
    %4676 = vmatpush.msra.mxu0 0.0
    %4677 = vmatpush.msra.mxu0 0.0
    %4678 = vmatpush.msra.mxu0 0.0
    %4679 = vmatpush.msra.mxu0 0.0
    %4680 = vmatpush.msra.mxu0 %v4630
    %4681 = vmatpush.msra.mxu0 %v4629
    %4682 = vmatpush.msra.mxu0 %v4628
    %4683 = vmatpush.msra.mxu0 %v4627
    %4684 = vmatmul.f32.gmra.mxu0 %v4642
    %v4685 = vpop.f32.mrf.mxu0
    %v4686 = vadd.f32 0.0, %v4685
    %4687 = vmatmul.f32.gmra.mxu0 %v4645
    %v4688 = vpop.f32.mrf.mxu0
    %v4689 = vadd.f32 0.0, %v4688
    %4690 = vmatmul.f32.gmra.mxu0 %v4648
    %v4691 = vpop.f32.mrf.mxu0
    %v4692 = vadd.f32 0.0, %v4691
    %4693 = vmatmul.f32.gmra.mxu0 %v4651
    %v4694 = vpop.f32.mrf.mxu0
    %v4695 = vadd.f32 0.0, %v4694
    %4696 = vmatmul.f32.gmra.mxu0 %v4654
    %v4697 = vpop.f32.mrf.mxu0
    %v4698 = vadd.f32 0.0, %v4697
    %4699 = vmatmul.f32.gmra.mxu0 %v4657
    %v4700 = vpop.f32.mrf.mxu0
    %v4701 = vadd.f32 0.0, %v4700
    %4702 = vmatmul.f32.gmra.mxu0 %v4660
    %v4703 = vpop.f32.mrf.mxu0
    %v4704 = vadd.f32 0.0, %v4703
    %4705 = vmatmul.f32.gmra.mxu0 %v4663
    %v4706 = vpop.f32.mrf.mxu0
    %v4707 = vadd.f32 0.0, %v4706
    %4708 = vmatmul.f32.gmra.mxu0 %v4666
    %v4709 = vpop.f32.mrf.mxu0
    %v4710 = vadd.f32 0.0, %v4709
    %4711 = vdwg.mxu0
    %v4712 = vld [vmem:[#allocation10] sm:$0xff]
    %s4713 = scalar_lea.vmem [#allocation10], 8
    %v4714 = vld [vmem:[%s4713] sm:$0xff]
    %v4716 = vsel %vm3825, %v4689, 0
    %4718 = vmatpush.msra.mxu0 0.0
    %4719 = vmatpush.msra.mxu0 0.0
    %4720 = vmatpush.msra.mxu0 0.0
    %4721 = vmatpush.msra.mxu0 0.0
    %4722 = vmatpush.msra.mxu0 0.0
    %4723 = vmatpush.msra.mxu0 0.0
    %4724 = vmatpush.msra.mxu0 0.0
    %4725 = vmatpush.msra.mxu0 0.0
    %4726 = vmatpush.msra.mxu0 0.0
    %4727 = vmatpush.msra.mxu0 0.0
    %4728 = vmatpush.msra.mxu0 0.0
    %4729 = vmatpush.msra.mxu0 0.0
    %4730 = vmatpush.msra.mxu0 0.0
    %4731 = vmatpush.msra.mxu0 0.0
    %4732 = vmatpush.msra.mxu0 0.0
    %4733 = vmatpush.msra.mxu0 %v4714
    %4734 = vmatmul.f32.gmra.mxu0 %v4716
    %v4735 = vpop.f32.mrf.mxu0
    %v4736 = vadd.f32 0.0, %v4735
    %4737 = vdwg.mxu0
    %v4739 = vsel %vm3825, %v4686, 0
    %4741 = vmatpush.msra.mxu0 0.0
    %4742 = vmatpush.msra.mxu0 0.0
    %4743 = vmatpush.msra.mxu0 0.0
    %4744 = vmatpush.msra.mxu0 0.0
    %4745 = vmatpush.msra.mxu0 0.0
    %4746 = vmatpush.msra.mxu0 0.0
    %4747 = vmatpush.msra.mxu0 0.0
    %4748 = vmatpush.msra.mxu0 0.0
    %4749 = vmatpush.msra.mxu0 0.0
    %4750 = vmatpush.msra.mxu0 0.0
    %4751 = vmatpush.msra.mxu0 0.0
    %4752 = vmatpush.msra.mxu0 0.0
    %4753 = vmatpush.msra.mxu0 0.0
    %4754 = vmatpush.msra.mxu0 0.0
    %4755 = vmatpush.msra.mxu0 0.0
    %4756 = vmatpush.msra.mxu0 %v4712
    %4757 = vmatmul.f32.gmra.mxu0 %v4739
    %v4758 = vpop.f32.mrf.mxu0
    %v4759 = vadd.f32 %v4736, %v4758
    %4760 = vdwg.mxu0
    %s4761 = scalar_lea.vmem [#allocation10], 16
    %v4762 = vld [vmem:[%s4761] sm:$0xff]
    %v4764 = vsel %vm3825, %v4692, 0
    %4766 = vmatpush.msra.mxu0 0.0
    %4767 = vmatpush.msra.mxu0 0.0
    %4768 = vmatpush.msra.mxu0 0.0
    %4769 = vmatpush.msra.mxu0 0.0
    %4770 = vmatpush.msra.mxu0 0.0
    %4771 = vmatpush.msra.mxu0 0.0
    %4772 = vmatpush.msra.mxu0 0.0
    %4773 = vmatpush.msra.mxu0 0.0
    %4774 = vmatpush.msra.mxu0 0.0
    %4775 = vmatpush.msra.mxu0 0.0
    %4776 = vmatpush.msra.mxu0 0.0
    %4777 = vmatpush.msra.mxu0 0.0
    %4778 = vmatpush.msra.mxu0 0.0
    %4779 = vmatpush.msra.mxu0 0.0
    %4780 = vmatpush.msra.mxu0 0.0
    %4781 = vmatpush.msra.mxu0 %v4762
    %4782 = vmatmul.f32.gmra.mxu0 %v4764
    %v4783 = vpop.f32.mrf.mxu0
    %v4784 = vadd.f32 0.0, %v4783
    %4785 = vdwg.mxu0
    %v4786 = vadd.f32 %v4759, %v4784
    %s4787 = scalar_lea.vmem [#allocation10], 24
    %v4788 = vld [vmem:[%s4787] sm:$0xff]
    %v4790 = vsel %vm3825, %v4695, 0
    %4792 = vmatpush.msra.mxu0 0.0
    %4793 = vmatpush.msra.mxu0 0.0
    %4794 = vmatpush.msra.mxu0 0.0
    %4795 = vmatpush.msra.mxu0 0.0
    %4796 = vmatpush.msra.mxu0 0.0
    %4797 = vmatpush.msra.mxu0 0.0
    %4798 = vmatpush.msra.mxu0 0.0
    %4799 = vmatpush.msra.mxu0 0.0
    %4800 = vmatpush.msra.mxu0 0.0
    %4801 = vmatpush.msra.mxu0 0.0
    %4802 = vmatpush.msra.mxu0 0.0
    %4803 = vmatpush.msra.mxu0 0.0
    %4804 = vmatpush.msra.mxu0 0.0
    %4805 = vmatpush.msra.mxu0 0.0
    %4806 = vmatpush.msra.mxu0 0.0
    %4807 = vmatpush.msra.mxu0 %v4788
    %4808 = vmatmul.f32.gmra.mxu0 %v4790
    %v4809 = vpop.f32.mrf.mxu0
    %v4810 = vadd.f32 0.0, %v4809
    %4811 = vdwg.mxu0
    %v4812 = vadd.f32 %v4786, %v4810
    %s4813 = scalar_lea.vmem [#allocation10], 32
    %v4814 = vld [vmem:[%s4813] sm:$0xff]
    %v4816 = vsel %vm3825, %v4698, 0
    %4818 = vmatpush.msra.mxu0 0.0
    %4819 = vmatpush.msra.mxu0 0.0
    %4820 = vmatpush.msra.mxu0 0.0
    %4821 = vmatpush.msra.mxu0 0.0
    %4822 = vmatpush.msra.mxu0 0.0
    %4823 = vmatpush.msra.mxu0 0.0
    %4824 = vmatpush.msra.mxu0 0.0
    %4825 = vmatpush.msra.mxu0 0.0
    %4826 = vmatpush.msra.mxu0 0.0
    %4827 = vmatpush.msra.mxu0 0.0
    %4828 = vmatpush.msra.mxu0 0.0
    %4829 = vmatpush.msra.mxu0 0.0
    %4830 = vmatpush.msra.mxu0 0.0
    %4831 = vmatpush.msra.mxu0 0.0
    %4832 = vmatpush.msra.mxu0 0.0
    %4833 = vmatpush.msra.mxu0 %v4814
    %4834 = vmatmul.f32.gmra.mxu0 %v4816
    %v4835 = vpop.f32.mrf.mxu0
    %v4836 = vadd.f32 0.0, %v4835
    %4837 = vdwg.mxu0
    %v4838 = vadd.f32 %v4812, %v4836
    %s4839 = scalar_lea.vmem [#allocation10], 40
    %v4840 = vld [vmem:[%s4839] sm:$0xff]
    %v4842 = vsel %vm3825, %v4701, 0
    %4844 = vmatpush.msra.mxu0 0.0
    %4845 = vmatpush.msra.mxu0 0.0
    %4846 = vmatpush.msra.mxu0 0.0
    %4847 = vmatpush.msra.mxu0 0.0
    %4848 = vmatpush.msra.mxu0 0.0
    %4849 = vmatpush.msra.mxu0 0.0
    %4850 = vmatpush.msra.mxu0 0.0
    %4851 = vmatpush.msra.mxu0 0.0
    %4852 = vmatpush.msra.mxu0 0.0
    %4853 = vmatpush.msra.mxu0 0.0
    %4854 = vmatpush.msra.mxu0 0.0
    %4855 = vmatpush.msra.mxu0 0.0
    %4856 = vmatpush.msra.mxu0 0.0
    %4857 = vmatpush.msra.mxu0 0.0
    %4858 = vmatpush.msra.mxu0 0.0
    %4859 = vmatpush.msra.mxu0 %v4840
    %4860 = vmatmul.f32.gmra.mxu0 %v4842
    %v4861 = vpop.f32.mrf.mxu0
    %v4862 = vadd.f32 0.0, %v4861
    %4863 = vdwg.mxu0
    %v4864 = vadd.f32 %v4838, %v4862
    %s4865 = scalar_lea.vmem [#allocation10], 48
    %v4866 = vld [vmem:[%s4865] sm:$0xff]
    %v4868 = vsel %vm3825, %v4704, 0
    %4870 = vmatpush.msra.mxu0 0.0
    %4871 = vmatpush.msra.mxu0 0.0
    %4872 = vmatpush.msra.mxu0 0.0
    %4873 = vmatpush.msra.mxu0 0.0
    %4874 = vmatpush.msra.mxu0 0.0
    %4875 = vmatpush.msra.mxu0 0.0
    %4876 = vmatpush.msra.mxu0 0.0
    %4877 = vmatpush.msra.mxu0 0.0
    %4878 = vmatpush.msra.mxu0 0.0
    %4879 = vmatpush.msra.mxu0 0.0
    %4880 = vmatpush.msra.mxu0 0.0
    %4881 = vmatpush.msra.mxu0 0.0
    %4882 = vmatpush.msra.mxu0 0.0
    %4883 = vmatpush.msra.mxu0 0.0
    %4884 = vmatpush.msra.mxu0 0.0
    %4885 = vmatpush.msra.mxu0 %v4866
    %4886 = vmatmul.f32.gmra.mxu0 %v4868
    %v4887 = vpop.f32.mrf.mxu0
    %v4888 = vadd.f32 0.0, %v4887
    %4889 = vdwg.mxu0
    %v4890 = vadd.f32 %v4864, %v4888
    %s4891 = scalar_lea.vmem [#allocation10], 56
    %v4892 = vld [vmem:[%s4891] sm:$0xff]
    %v4894 = vsel %vm3825, %v4707, 0
    %4896 = vmatpush.msra.mxu0 0.0
    %4897 = vmatpush.msra.mxu0 0.0
    %4898 = vmatpush.msra.mxu0 0.0
    %4899 = vmatpush.msra.mxu0 0.0
    %4900 = vmatpush.msra.mxu0 0.0
    %4901 = vmatpush.msra.mxu0 0.0
    %4902 = vmatpush.msra.mxu0 0.0
    %4903 = vmatpush.msra.mxu0 0.0
    %4904 = vmatpush.msra.mxu0 0.0
    %4905 = vmatpush.msra.mxu0 0.0
    %4906 = vmatpush.msra.mxu0 0.0
    %4907 = vmatpush.msra.mxu0 0.0
    %4908 = vmatpush.msra.mxu0 0.0
    %4909 = vmatpush.msra.mxu0 0.0
    %4910 = vmatpush.msra.mxu0 0.0
    %4911 = vmatpush.msra.mxu0 %v4892
    %4912 = vmatmul.f32.gmra.mxu0 %v4894
    %v4913 = vpop.f32.mrf.mxu0
    %v4914 = vadd.f32 0.0, %v4913
    %4915 = vdwg.mxu0
    %v4916 = vadd.f32 %v4890, %v4914
    %s4917 = scalar_lea.vmem [#allocation10], 64
    %v4918 = vld [vmem:[%s4917] sm:$0xff]
    %v4920 = vsel %vm3825, %v4710, 0
    %4922 = vmatpush.msra.mxu0 0.0
    %4923 = vmatpush.msra.mxu0 0.0
    %4924 = vmatpush.msra.mxu0 0.0
    %4925 = vmatpush.msra.mxu0 0.0
    %4926 = vmatpush.msra.mxu0 0.0
    %4927 = vmatpush.msra.mxu0 0.0
    %4928 = vmatpush.msra.mxu0 0.0
    %4929 = vmatpush.msra.mxu0 0.0
    %4930 = vmatpush.msra.mxu0 0.0
    %4931 = vmatpush.msra.mxu0 0.0
    %4932 = vmatpush.msra.mxu0 0.0
    %4933 = vmatpush.msra.mxu0 0.0
    %4934 = vmatpush.msra.mxu0 0.0
    %4935 = vmatpush.msra.mxu0 0.0
    %4936 = vmatpush.msra.mxu0 0.0
    %4937 = vmatpush.msra.mxu0 %v4918
    %4938 = vmatmul.f32.gmra.mxu0 %v4920
    %v4939 = vpop.f32.mrf.mxu0
    %v4940 = vadd.f32 0.0, %v4939
    %4941 = vdwg.mxu0
    %v4942 = vadd.f32 %v4916, %v4940
    %v4943 = vld [vmem:[#allocation11] sm:$0x1]
    %v4944 = vperm.slane %v4943, 0
    %v4945 = vadd.f32 %v4942, %v4944
    %vm4946 = vcmask 130048
    %v4947 = vsel %vm4946, %v4945, 0.0
    %v4948 = vrot.slane %v4947, 4
    %v4949 = vadd.f32 %v4947, %v4948
    %v4950 = vrot.slane %v4949, 2
    %v4951 = vadd.f32 %v4949, %v4950
    %v4952 = vrot.slane %v4951, 1
    %v4953 = vadd.f32 %v4951, %v4952
    %v4954 = vmul.f32 %v4953, 0.125
    %v4955 = vmul.f32 %v4945, %v4945
    %v4956 = vsel %vm4946, %v4955, 0.0
    %v4957 = vrot.slane %v4956, 4
    %v4958 = vadd.f32 %v4956, %v4957
    %v4959 = vrot.slane %v4958, 2
    %v4960 = vadd.f32 %v4958, %v4959
    %v4961 = vrot.slane %v4960, 1
    %v4962 = vadd.f32 %v4960, %v4961
    %v4963 = vmul.f32 %v4962, 0.125
    %v4964 = vmul.f32 %v4954, %v4954
    %v4965 = vsub.f32 %v4963, %v4964
    %v4966 = vld [vmem:[#allocation11 + $0x1] sm:$0x1]
    %v4967 = vadd.f32 %v4965, 1e-05
    %v4968 = vrsqrt.pop %v4967
    %v4969 = vmul.f32 %v4968, %v4967
    %v4970 = vmul.f32 %v4969, %v4968
    %v4971 = vmul.f32 0.5, %v4970
    %v4972 = vsub.f32 1.5, %v4971
    %v4973 = vmul.f32 %v4968, %v4972
    %vm4974 = vweird.f32 %v4967
    %vm4975 = vweird.f32 %v4968
    %vm4976 = vmor %vm4974, %vm4975
    %v4977 = vsel %vm4976, %v4968, %v4973
    %v4978 = vmul.f32 %v4966, %v4977
    %v4979 = vld [vmem:[#allocation11 + $0x2] sm:$0x1]
    %v4980 = vmul.f32 %v4954, %v4978
    %v4981 = vsub.f32 %v4979, %v4980
    %v4982 = vperm.slane %v4978, 0
    %v4983 = vmul.f32 %v4945, %v4982
    %v4984 = vperm.slane %v4981, 0
    %v4985 = vadd.f32 %v4983, %v4984
    %v4986 = vmax.f32 %v4985, 0.0
    %v4987 = vld [vmem:[#allocation17] sm:$0x1]
    %v4988 = vld [vmem:[#allocation17 + $0x1] sm:$0x1]
    %v4989 = vld [vmem:[#allocation16] sm:$0xff]
    %v4990 = vld [vmem:[#allocation16 + $0x8] sm:$0xff]
    %v4991 = vld [vmem:[#allocation13] sm:$0x3]
    %v4993 = vsel %vm3825, %v4991, 0
    %4995 = vmatpush.msra.mxu0 0.0
    %4996 = vmatpush.msra.mxu0 0.0
    %4997 = vmatpush.msra.mxu0 0.0
    %4998 = vmatpush.msra.mxu0 0.0
    %4999 = vmatpush.msra.mxu0 0.0
    %5000 = vmatpush.msra.mxu0 0.0
    %5001 = vmatpush.msra.mxu0 0.0
    %5002 = vmatpush.msra.mxu0 0.0
    %5003 = vmatpush.msra.mxu0 0.0
    %5004 = vmatpush.msra.mxu0 0.0
    %5005 = vmatpush.msra.mxu0 0.0
    %5006 = vmatpush.msra.mxu0 0.0
    %5007 = vmatpush.msra.mxu0 0.0
    %5008 = vmatpush.msra.mxu0 0.0
    %5009 = vmatpush.msra.mxu0 0.0
    %5010 = vmatpush.msra.mxu0 %v4986
    %5011 = vmatmul.f32.gmra.mxu0 %v4993
    %v5012 = vpop.f32.mrf.mxu0
    %v5013 = vadd.f32 0.0, %v5012
    %5014 = vdwg.mxu0
    %v5015 = vld [vmem:[#allocation14] sm:$0xff]
    %v5016 = vld [vmem:[#allocation14 + $0x8] sm:$0xff]
    %s5017 = scalar_lea.vmem [#allocation13], 2
    %v5018 = vld [vmem:[%s5017] sm:$0x3]
    %v5020 = vsel %vm3825, %v5018, 0
    %5022 = vmatpush.msra.mxu0 0.0
    %5023 = vmatpush.msra.mxu0 0.0
    %5024 = vmatpush.msra.mxu0 0.0
    %5025 = vmatpush.msra.mxu0 0.0
    %5026 = vmatpush.msra.mxu0 0.0
    %5027 = vmatpush.msra.mxu0 0.0
    %5028 = vmatpush.msra.mxu0 0.0
    %5029 = vmatpush.msra.mxu0 0.0
    %5030 = vmatpush.msra.mxu0 0.0
    %5031 = vmatpush.msra.mxu0 0.0
    %5032 = vmatpush.msra.mxu0 0.0
    %5033 = vmatpush.msra.mxu0 0.0
    %5034 = vmatpush.msra.mxu0 0.0
    %5035 = vmatpush.msra.mxu0 0.0
    %5036 = vmatpush.msra.mxu0 0.0
    %5037 = vmatpush.msra.mxu0 %v4986
    %5038 = vmatmul.f32.gmra.mxu0 %v5020
    %v5039 = vpop.f32.mrf.mxu0
    %v5040 = vadd.f32 0.0, %v5039
    %5041 = vdwg.mxu0
    %s5042 = scalar_lea.vmem [#allocation14], 16
    %v5043 = vld [vmem:[%s5042] sm:$0xff]
    %v5044 = vld [vmem:[%s5042 + $0x8] sm:$0xff]
    %v5046 = vsel %vm4946, %v5040, 0
    %5048 = vmatpush.msra.mxu0 0.0
    %5049 = vmatpush.msra.mxu0 0.0
    %5050 = vmatpush.msra.mxu0 0.0
    %5051 = vmatpush.msra.mxu0 0.0
    %5052 = vmatpush.msra.mxu0 0.0
    %5053 = vmatpush.msra.mxu0 0.0
    %5054 = vmatpush.msra.mxu0 0.0
    %5055 = vmatpush.msra.mxu0 0.0
    %5056 = vmatpush.msra.mxu0 0.0
    %5057 = vmatpush.msra.mxu0 0.0
    %5058 = vmatpush.msra.mxu0 0.0
    %5059 = vmatpush.msra.mxu0 0.0
    %5060 = vmatpush.msra.mxu0 0.0
    %5061 = vmatpush.msra.mxu0 0.0
    %5062 = vmatpush.msra.mxu0 %v5044
    %5063 = vmatpush.msra.mxu0 %v5043
    %5064 = vmatmul.f32.gmra.mxu0 %v5046
    %v5065 = vpop.f32.mrf.mxu0
    %v5066 = vadd.f32 0.0, %v5065
    %5067 = vdwg.mxu0
    %v5069 = vsel %vm4946, %v5013, 0
    %5071 = vmatpush.msra.mxu0 0.0
    %5072 = vmatpush.msra.mxu0 0.0
    %5073 = vmatpush.msra.mxu0 0.0
    %5074 = vmatpush.msra.mxu0 0.0
    %5075 = vmatpush.msra.mxu0 0.0
    %5076 = vmatpush.msra.mxu0 0.0
    %5077 = vmatpush.msra.mxu0 0.0
    %5078 = vmatpush.msra.mxu0 0.0
    %5079 = vmatpush.msra.mxu0 0.0
    %5080 = vmatpush.msra.mxu0 0.0
    %5081 = vmatpush.msra.mxu0 0.0
    %5082 = vmatpush.msra.mxu0 0.0
    %5083 = vmatpush.msra.mxu0 0.0
    %5084 = vmatpush.msra.mxu0 0.0
    %5085 = vmatpush.msra.mxu0 %v5016
    %5086 = vmatpush.msra.mxu0 %v5015
    %5087 = vmatmul.f32.gmra.mxu0 %v5069
    %v5088 = vpop.f32.mrf.mxu0
    %v5089 = vadd.f32 %v5066, %v5088
    %5090 = vdwg.mxu0
    %v5091 = vperm.slane %v4987, 0
    %v5092 = vadd.f32 %v5089, %v5091
    %s5093 = scalar_lea.vmem [#allocation13], 4
    %v5094 = vld [vmem:[%s5093] sm:$0x3]
    %v5096 = vsel %vm3825, %v5094, 0
    %5098 = vmatpush.msra.mxu0 0.0
    %5099 = vmatpush.msra.mxu0 0.0
    %5100 = vmatpush.msra.mxu0 0.0
    %5101 = vmatpush.msra.mxu0 0.0
    %5102 = vmatpush.msra.mxu0 0.0
    %5103 = vmatpush.msra.mxu0 0.0
    %5104 = vmatpush.msra.mxu0 0.0
    %5105 = vmatpush.msra.mxu0 0.0
    %5106 = vmatpush.msra.mxu0 0.0
    %5107 = vmatpush.msra.mxu0 0.0
    %5108 = vmatpush.msra.mxu0 0.0
    %5109 = vmatpush.msra.mxu0 0.0
    %5110 = vmatpush.msra.mxu0 0.0
    %5111 = vmatpush.msra.mxu0 0.0
    %5112 = vmatpush.msra.mxu0 0.0
    %5113 = vmatpush.msra.mxu0 %v4986
    %5114 = vmatmul.f32.gmra.mxu0 %v5096
    %v5115 = vpop.f32.mrf.mxu0
    %v5116 = vadd.f32 0.0, %v5115
    %5117 = vdwg.mxu0
    %s5118 = scalar_lea.vmem [#allocation13], 6
    %v5119 = vld [vmem:[%s5118] sm:$0x3]
    %v5121 = vsel %vm3825, %v5119, 0
    %5123 = vmatpush.msra.mxu0 0.0
    %5124 = vmatpush.msra.mxu0 0.0
    %5125 = vmatpush.msra.mxu0 0.0
    %5126 = vmatpush.msra.mxu0 0.0
    %5127 = vmatpush.msra.mxu0 0.0
    %5128 = vmatpush.msra.mxu0 0.0
    %5129 = vmatpush.msra.mxu0 0.0
    %5130 = vmatpush.msra.mxu0 0.0
    %5131 = vmatpush.msra.mxu0 0.0
    %5132 = vmatpush.msra.mxu0 0.0
    %5133 = vmatpush.msra.mxu0 0.0
    %5134 = vmatpush.msra.mxu0 0.0
    %5135 = vmatpush.msra.mxu0 0.0
    %5136 = vmatpush.msra.mxu0 0.0
    %5137 = vmatpush.msra.mxu0 0.0
    %5138 = vmatpush.msra.mxu0 %v4986
    %5139 = vmatmul.f32.gmra.mxu0 %v5121
    %v5140 = vpop.f32.mrf.mxu0
    %v5141 = vadd.f32 0.0, %v5140
    %5142 = vdwg.mxu0
    %v5144 = vsel %vm4946, %v5141, 0
    %5146 = vmatpush.msra.mxu0 0.0
    %5147 = vmatpush.msra.mxu0 0.0
    %5148 = vmatpush.msra.mxu0 0.0
    %5149 = vmatpush.msra.mxu0 0.0
    %5150 = vmatpush.msra.mxu0 0.0
    %5151 = vmatpush.msra.mxu0 0.0
    %5152 = vmatpush.msra.mxu0 0.0
    %5153 = vmatpush.msra.mxu0 0.0
    %5154 = vmatpush.msra.mxu0 0.0
    %5155 = vmatpush.msra.mxu0 0.0
    %5156 = vmatpush.msra.mxu0 0.0
    %5157 = vmatpush.msra.mxu0 0.0
    %5158 = vmatpush.msra.mxu0 0.0
    %5159 = vmatpush.msra.mxu0 0.0
    %5160 = vmatpush.msra.mxu0 %v5044
    %5161 = vmatpush.msra.mxu0 %v5043
    %5162 = vmatmul.f32.gmra.mxu0 %v5144
    %v5163 = vpop.f32.mrf.mxu0
    %v5164 = vadd.f32 0.0, %v5163
    %5165 = vdwg.mxu0
    %v5167 = vsel %vm4946, %v5116, 0
    %5169 = vmatpush.msra.mxu0 0.0
    %5170 = vmatpush.msra.mxu0 0.0
    %5171 = vmatpush.msra.mxu0 0.0
    %5172 = vmatpush.msra.mxu0 0.0
    %5173 = vmatpush.msra.mxu0 0.0
    %5174 = vmatpush.msra.mxu0 0.0
    %5175 = vmatpush.msra.mxu0 0.0
    %5176 = vmatpush.msra.mxu0 0.0
    %5177 = vmatpush.msra.mxu0 0.0
    %5178 = vmatpush.msra.mxu0 0.0
    %5179 = vmatpush.msra.mxu0 0.0
    %5180 = vmatpush.msra.mxu0 0.0
    %5181 = vmatpush.msra.mxu0 0.0
    %5182 = vmatpush.msra.mxu0 0.0
    %5183 = vmatpush.msra.mxu0 %v5016
    %5184 = vmatpush.msra.mxu0 %v5015
    %5185 = vmatmul.f32.gmra.mxu0 %v5167
    %v5186 = vpop.f32.mrf.mxu0
    %v5187 = vadd.f32 %v5164, %v5186
    %5188 = vdwg.mxu0
    %v5189 = vadd.f32 %v5187, %v5091
    %v5190 = vperm.slane %v4988, 0
    %v5192 = vsel %vm4946, 0.0, 0
    %5194 = vmatpush.msra.mxu0 0.0
    %5195 = vmatpush.msra.mxu0 0.0
    %5196 = vmatpush.msra.mxu0 0.0
    %5197 = vmatpush.msra.mxu0 0.0
    %5198 = vmatpush.msra.mxu0 0.0
    %5199 = vmatpush.msra.mxu0 0.0
    %5200 = vmatpush.msra.mxu0 0.0
    %5201 = vmatpush.msra.mxu0 0.0
    %5202 = vmatpush.msra.mxu0 0.0
    %5203 = vmatpush.msra.mxu0 0.0
    %5204 = vmatpush.msra.mxu0 0.0
    %5205 = vmatpush.msra.mxu0 0.0
    %5206 = vmatpush.msra.mxu0 0.0
    %5207 = vmatpush.msra.mxu0 0.0
    %5208 = vmatpush.msra.mxu0 %v4990
    %5209 = vmatpush.msra.mxu0 %v4989
    %5210 = vmatmul.f32.gmra.mxu0 %v5192
    %v5211 = vpop.f32.mrf.mxu0
    %v5212 = vadd.f32 %v5190, %v5211
    %5213 = vdwg.mxu0
    %v5214 = vadd.f32 %v5092, %v5212
    %v5215 = vxor.u32 %v5214, 2147483648
    %v5216 = vmul.f32 %v5215, 1.442695
    %v5217 = vpow.pop %v5216
    %v5218 = vadd.f32 %v5217, 1.0
    %v5219 = vrcp.pop %v5218
    %v5220 = vmul.f32 %v5218, %v5219
    %v5221 = vsub.f32 1.0, %v5220
    %v5222 = vmul.f32 %v5219, %v5221
    %v5223 = vadd.f32 %v5219, %v5222
    %vm5224 = vweird.f32 %v5218
    %vm5225 = vweird.f32 %v5219
    %vm5226 = vmor %vm5224, %vm5225
    %v5227 = vsel %vm5226, %v5219, %v5223
    %v5228 = vand.u32 2147483647, %v5218
    %vm5229 = vcmp.eq.f32.partialorder %v5228, 8.507059e+37
    %v5230 = vand.u32 %v5218, 2147483648
    %v5231 = vor.u32 1.1754944e-38, %v5230
    %v5232 = vsel %vm5229, %v5231, %v5227
    %v5233 = vmul.f32 1.0, %v5232
    %5235 = vrot.lane.b32.xlu0 %v5212, 96
    %v5236 = vpop.permute.xlu0 %5235
    %v5238 = vmul.f32 %v5233, %v5236
    %5240 = vrot.lane.b32.xlu0 %v5238, 32
    %v5241 = vpop.permute.xlu0 %5240
    %v5243 = vadd.f32 %v5092, %v5241
    %v5244 = vtanh.pop %v5243
    %v5245 = vsub.f32 1.0, %v5233
    %5247 = vrot.lane.b32.xlu0 %v5244, 112
    %v5248 = vpop.permute.xlu0 %5247
    %v5250 = vmul.f32 %v5245, %v5248
    %v5251 = vmul.f32 %v5233, 0.0
    %v5252 = vadd.f32 %v5250, %v5251
    %5254 = vrot.lane.b32.xlu0 %v5252, 112
    %v5255 = vpop.permute.xlu0 %5254
    %v5256 = vsel %vm4946, %v5255, 0
    %5258 = vmatpush.msra.mxu0 0.0
    %5259 = vmatpush.msra.mxu0 0.0
    %5260 = vmatpush.msra.mxu0 0.0
    %5261 = vmatpush.msra.mxu0 0.0
    %5262 = vmatpush.msra.mxu0 0.0
    %5263 = vmatpush.msra.mxu0 0.0
    %5264 = vmatpush.msra.mxu0 0.0
    %5265 = vmatpush.msra.mxu0 0.0
    %5266 = vmatpush.msra.mxu0 0.0
    %5267 = vmatpush.msra.mxu0 0.0
    %5268 = vmatpush.msra.mxu0 0.0
    %5269 = vmatpush.msra.mxu0 0.0
    %5270 = vmatpush.msra.mxu0 0.0
    %5271 = vmatpush.msra.mxu0 0.0
    %5272 = vmatpush.msra.mxu0 %v4990
    %5273 = vmatpush.msra.mxu0 %v4989
    %5274 = vmatmul.f32.gmra.mxu0 %v5256
    %v5275 = vpop.f32.mrf.mxu0
    %v5276 = vadd.f32 %v5190, %v5275
    %5277 = vdwg.mxu0
    %v5278 = vadd.f32 %v5189, %v5276
    %v5279 = vxor.u32 %v5278, 2147483648
    %v5280 = vmul.f32 %v5279, 1.442695
    %v5281 = vpow.pop %v5280
    %v5282 = vadd.f32 %v5281, 1.0
    %v5283 = vrcp.pop %v5282
    %v5284 = vmul.f32 %v5282, %v5283
    %v5285 = vsub.f32 1.0, %v5284
    %v5286 = vmul.f32 %v5283, %v5285
    %v5287 = vadd.f32 %v5283, %v5286
    %vm5288 = vweird.f32 %v5282
    %vm5289 = vweird.f32 %v5283
    %vm5290 = vmor %vm5288, %vm5289
    %v5291 = vsel %vm5290, %v5283, %v5287
    %v5292 = vand.u32 2147483647, %v5282
    %vm5293 = vcmp.eq.f32.partialorder %v5292, 8.507059e+37
    %v5294 = vand.u32 %v5282, 2147483648
    %v5295 = vor.u32 1.1754944e-38, %v5294
    %v5296 = vsel %vm5293, %v5295, %v5291
    %v5297 = vmul.f32 1.0, %v5296
    %5299 = vrot.lane.b32.xlu0 %v5276, 96
    %v5300 = vpop.permute.xlu0 %5299
    %v5302 = vmul.f32 %v5297, %v5300
    %5304 = vrot.lane.b32.xlu0 %v5302, 32
    %v5305 = vpop.permute.xlu0 %5304
    %v5307 = vadd.f32 %v5189, %v5305
    %v5308 = vtanh.pop %v5307
    %v5309 = vsub.f32 1.0, %v5297
    %5311 = vrot.lane.b32.xlu0 %v5308, 112
    %v5312 = vpop.permute.xlu0 %5311
    %v5314 = vmul.f32 %v5309, %v5312
    %v5315 = vmul.f32 %v5297, %v5252
    %v5316 = vadd.f32 %v5314, %v5315
    %5318 = vrot.lane.b32.xlu0 %v5316, 112
    %v5319 = vpop.permute.xlu0 %5318
    %vm5321 = vcmask 123904
    %5322 = vst.msk [vmem:[#allocation19] sm:$0x3] %vm5321, %v5319
    // Predicated region
    $region98: #{reference_encoder_forward.1} parent=1 // pred_check
      _
    $region99: #{reference_encoder_forward.1} parent=1 // pred_check_branch
      %5324 = sbr.rel (0) target = $region101
    $region100: #{reference_encoder_forward.1} parent=1 // pred_region
      %5326 = vsyncadd [#allocation4], 0
      %s5328 = sshll.u32 [#allocation19], 4
      %s5329 = int_to_ptr.vmem [resolvable:$true] %s5328
      %s5330 = sshll.u32 %s14, 4
      %s5331 = int_to_ptr.hbm [resolvable:$true] %s5330
      %5333 = dma.vmem_to_hbm [thread:$0]  %s5329, 32, %s5331, [#allocation4]
    $region101: #{reference_encoder_forward.1} parent=1 // pred_fallthru
      _
    // Predicated region
    $region102: #{reference_encoder_forward.1} parent=1 // pred_check
      _
    $region103: #{reference_encoder_forward.1} parent=1 // pred_check_branch
      %5335 = sbr.rel (0) target = $region105
    $region104: #{reference_encoder_forward.1} parent=1 // pred_region
      %5337 = dma.done [#allocation4], 32
    $region105: #{reference_encoder_forward.1} parent=1 // pred_fallthru
      _
    %5338 = vsyncpa [#allocation3], 1
    %5339 = vsyncpa [#allocation6], 1
    %5340 = vsyncpa [#allocation9], 1
    %5341 = vsyncpa [#allocation12], 1
    %5342 = vsyncpa [#allocation15], 1
    %5343 = vsyncpa [#allocation18], 1
    %5344 = vsyncpa [#allocation4], 1

</llo_original>
